<compile_context>
chip_gen: v7x
topology: tpu7x:2x2x1
jax: 0.10.0
libtpu: 0.0.40
codegen_flags: <defaults>
</compile_context>

<pallas_src>
import jax
import jax.numpy as jnp
from jax.experimental import pallas as pl
from jax.experimental.pallas import tpu as pltpu

# ----------------------------- problem sizes -------------------------------
BS = 2          # batch size
T = 4           # max_t (all timesteps, t=None path)
N_AGENTS = 3
OBS_DIM = 12
N_ACTIONS = 5
INPUT_SIZE = OBS_DIM + N_ACTIONS + N_AGENTS       # obs + last_action + agent_id = 20
ENC_IN = OBS_DIM + N_ACTIONS                      # encoder inputs (obs + last_action) = 17
EMBED_DIM = 8
ED_HIDDEN = 16
HIDDEN = 32
LN_EPS = 1e-5

# packed lane-dense output layout (single [N, 128] slab)
Q_OFF = 0
HE_OFF = 16
HO_OFF = 32
OUT_WIDTH = 128

MAX_TILE = 512  # cap the single row tile for very large batches


# ----------------------------- kernel helpers ------------------------------
def _layernorm(x, g, b):
    mu = jnp.mean(x, axis=-1, keepdims=True)
    var = jnp.mean((x - mu) ** 2, axis=-1, keepdims=True)
    return (x - mu) * jax.lax.rsqrt(var + LN_EPS) * g + b


def _gru_cell_split(x, h,
                    wir, wiz, win, whr, whz, whn,
                    bir, biz, bin_, bhr, bhz, bhn):
    # PyTorch nn.GRUCell semantics, gate order (r, z, n); weights pre-split
    # per gate so every matmul result starts at lane offset 0.
    r = jax.nn.sigmoid(
        jnp.dot(x, wir, preferred_element_type=jnp.float32) + bir
        + jnp.dot(h, whr, preferred_element_type=jnp.float32) + bhr)
    z = jax.nn.sigmoid(
        jnp.dot(x, wiz, preferred_element_type=jnp.float32) + biz
        + jnp.dot(h, whz, preferred_element_type=jnp.float32) + bhz)
    n = jnp.tanh(
        jnp.dot(x, win, preferred_element_type=jnp.float32) + bin_
        + r * (jnp.dot(h, whn, preferred_element_type=jnp.float32) + bhn))
    return (1.0 - z) * n + z * h


def _gru_cell(x, h, w_ih, w_hh, b_ih, b_hh, hdim):
    # combined-weight version (reference path only)
    gi = x @ w_ih + b_ih
    gh = h @ w_hh + b_hh
    r = jax.nn.sigmoid(gi[:, 0:hdim] + gh[:, 0:hdim])
    z = jax.nn.sigmoid(gi[:, hdim:2 * hdim] + gh[:, hdim:2 * hdim])
    n = jnp.tanh(gi[:, 2 * hdim:3 * hdim] + r * gh[:, 2 * hdim:3 * hdim])
    return (1.0 - z) * n + z * h


# ------------------------------- the kernel --------------------------------
def poam_critic_kernel(
    # activations (row-tiled; grid collapses to a single tile here)
    inp_ref, enc_ref, he_ref, hin_ref,
    # encoder fc (Linear + ReLU)
    efc_w, efc_b,
    # encoder GRUCell, gate-split (r, z, n)
    e_wir, e_wiz, e_win, e_whr, e_whz, e_whn,
    e_bir, e_biz, e_bin, e_bhr, e_bhz, e_bhn,
    # encoder embedding head
    eemb_w, eemb_b,
    # feature LayerNorm, split into embedding / raw-input parts
    fln_g_e, fln_b_e, fln_g_x, fln_b_x,
    # fc1 decomposed (emb part / x part) + bias, then LayerNorm
    fc1_w_e, fc1_w_x, fc1_b, ln1_g, ln1_b,
    # fc2 + LayerNorm
    fc2_w, fc2_b, ln2_g, ln2_b,
    # rnn GRUCell, gate-split + rnn_norm
    r_wir, r_wiz, r_win, r_whr, r_whz, r_whn,
    r_bir, r_biz, r_bin, r_bhr, r_bhz, r_bhn,
    rln_g, rln_b,
    # v_out Linear(hidden, 1)
    vw, vb,
    # single lane-dense packed output [tile, 128]
    out_ref,
):
    x_in = inp_ref[...]
    enc_in = enc_ref[...]
    h_e = he_ref[...]
    h_in = hin_ref[...]

    # --- encoder: Linear+ReLU -> GRUCell -> Linear embedding head ---
    # TODO(synk): `self.encoder` is assigned externally in POAM; this is a
    # deterministic stand-in with the same (embeddings, h_e) interface.
    e = jnp.maximum(
        jnp.dot(enc_in, efc_w[...], preferred_element_type=jnp.float32) + efc_b[...], 0.0)
    h_e_new = _gru_cell_split(
        e, h_e,
        e_wir[...], e_wiz[...], e_win[...], e_whr[...], e_whz[...], e_whn[...],
        e_bir[...], e_biz[...], e_bin[...], e_bhr[...], e_bhz[...], e_bhn[...])
    emb = jnp.dot(h_e_new, eemb_w[...], preferred_element_type=jnp.float32) + eemb_b[...]

    # --- feature LayerNorm of concat([emb.detach(), inputs]) WITHOUT the
    #     lane concat: statistics from partial sums, fc1 decomposed. ---
    f_dim = float(EMBED_DIM + INPUT_SIZE)
    mu = (jnp.sum(emb, axis=-1, keepdims=True)
          + jnp.sum(x_in, axis=-1, keepdims=True)) / f_dim
    de = emb - mu
    dx = x_in - mu
    var = (jnp.sum(de * de, axis=-1, keepdims=True)
           + jnp.sum(dx * dx, axis=-1, keepdims=True)) / f_dim
    inv = jax.lax.rsqrt(var + LN_EPS)
    ln_e = de * inv * fln_g_e[...] + fln_b_e[...]
    ln_x = dx * inv * fln_g_x[...] + fln_b_x[...]

    # --- MLPBase: (Linear+ReLU+LayerNorm) x 2 ---
    h1 = jnp.maximum(
        jnp.dot(ln_e, fc1_w_e[...], preferred_element_type=jnp.float32)
        + jnp.dot(ln_x, fc1_w_x[...], preferred_element_type=jnp.float32)
        + fc1_b[...], 0.0)
    h1 = _layernorm(h1, ln1_g[...], ln1_b[...])
    x = jnp.maximum(
        jnp.dot(h1, fc2_w[...], preferred_element_type=jnp.float32) + fc2_b[...], 0.0)
    x = _layernorm(x, ln2_g[...], ln2_b[...])

    # --- rnn: GRUCell(hidden, hidden) + LayerNorm ---
    h_out = _gru_cell_split(
        x, h_in,
        r_wir[...], r_wiz[...], r_win[...], r_whr[...], r_whz[...], r_whn[...],
        r_bir[...], r_biz[...], r_bin[...], r_bhr[...], r_bhz[...], r_bhn[...])
    h_norm = _layernorm(h_out, rln_g[...], rln_b[...])

    # --- v_out: Linear(hidden, 1) ---
    q = jnp.dot(h_norm, vw[...], preferred_element_type=jnp.float32) + vb[...]

    # --- single lane-dense packed store: [q | pad | h_e | h_out | pad] ---
    rows = out_ref.shape[0]
    pad1 = jnp.zeros((rows, HE_OFF - 1), jnp.float32)
    pad2 = jnp.zeros((rows, OUT_WIDTH - (HO_OFF + HIDDEN)), jnp.float32)
    out_ref[...] = jnp.concatenate([q, pad1, h_e_new, h_out, pad2], axis=-1)


# ----------------------- host-side param repacking --------------------------
def split_kernel_params(params):
    """Combined (PyTorch-style) params -> gate-split / decomposed kernel params."""
    (efc_w, efc_b, egru_wih, egru_whh, egru_bih, egru_bhh, eemb_w, eemb_b,
     fln_g, fln_b, fc1_w, fc1_b, ln1_g, ln1_b, fc2_w, fc2_b, ln2_g, ln2_b,
     rwih, rwhh, rbih, rbhh, rln_g, rln_b, vw, vb) = params

    def split3(a, h):  # [..., 3h] -> three [..., h]
        return a[..., 0:h], a[..., h:2 * h], a[..., 2 * h:3 * h]

    e_wir, e_wiz, e_win = split3(egru_wih, ED_HIDDEN)
    e_whr, e_whz, e_whn = split3(egru_whh, ED_HIDDEN)
    e_bir, e_biz, e_bin = split3(egru_bih, ED_HIDDEN)
    e_bhr, e_bhz, e_bhn = split3(egru_bhh, ED_HIDDEN)

    r_wir, r_wiz, r_win = split3(rwih, HIDDEN)
    r_whr, r_whz, r_whn = split3(rwhh, HIDDEN)
    r_bir, r_biz, r_bin = split3(rbih, HIDDEN)
    r_bhr, r_bhz, r_bhn = split3(rbhh, HIDDEN)

    fln_g_e, fln_g_x = fln_g[:, :EMBED_DIM], fln_g[:, EMBED_DIM:]
    fln_b_e, fln_b_x = fln_b[:, :EMBED_DIM], fln_b[:, EMBED_DIM:]
    fc1_w_e, fc1_w_x = fc1_w[:EMBED_DIM], fc1_w[EMBED_DIM:]

    return [
        efc_w, efc_b,
        e_wir, e_wiz, e_win, e_whr, e_whz, e_whn,
        e_bir, e_biz, e_bin, e_bhr, e_bhz, e_bhn,
        eemb_w, eemb_b,
        fln_g_e, fln_b_e, fln_g_x, fln_b_x,
        fc1_w_e, fc1_w_x, fc1_b, ln1_g, ln1_b,
        fc2_w, fc2_b, ln2_g, ln2_b,
        r_wir, r_wiz, r_win, r_whr, r_whz, r_whn,
        r_bir, r_biz, r_bin, r_bhr, r_bhz, r_bhn,
        rln_g, rln_b,
        vw, vb,
    ]


# ------------------------------ host wrapper --------------------------------
def poam_critic_forward(inputs, enc_inputs, h_e, h_in, params):
    """inputs/enc_inputs/h_e/h_in are [N, F] float32; params is the combined flat list."""
    n = inputs.shape[0]

    # Collapse the grid: one row tile covering all rows (capped at MAX_TILE for
    # very large batches).  For n=24 this gives tile=24, grid=(1,), no padding.
    tile = min(MAX_TILE, ((n + 7) // 8) * 8)
    n_pad = ((n + tile - 1) // tile) * tile

    if n_pad != n:
        def pad_rows(a):
            return jnp.pad(a, ((0, n_pad - n), (0, 0)))
        inputs, enc_inputs, h_e, h_in = map(pad_rows, (inputs, enc_inputs, h_e, h_in))

    kparams = split_kernel_params(params)

    row_spec = lambda f: pl.BlockSpec((tile, f), lambda i: (i, 0))
    full_spec = lambda p: pl.BlockSpec(p.shape, lambda i: (0, 0))

    in_specs = [
        row_spec(INPUT_SIZE),
        row_spec(ENC_IN),
        row_spec(ED_HIDDEN),
        row_spec(HIDDEN),
    ] + [full_spec(p) for p in kparams]

    out_spec = row_spec(OUT_WIDTH)
    out_shape = jax.ShapeDtypeStruct((n_pad, OUT_WIDTH), jnp.float32)

    packed = pl.pallas_call(
        poam_critic_kernel,
        grid=(n_pad // tile,),
        in_specs=in_specs,
        out_specs=out_spec,
        out_shape=out_shape,
        compiler_params=pltpu.CompilerParams(dimension_semantics=("parallel",)),
    )(inputs, enc_inputs, h_e, h_in, *kparams)

    q = packed[:n, Q_OFF:Q_OFF + 1]
    he_out = packed[:n, HE_OFF:HE_OFF + ED_HIDDEN]
    h_out = packed[:n, HO_OFF:HO_OFF + HIDDEN]
    return q, he_out, h_out


# ----------------------- plain-JAX reference (checking) ---------------------
def reference_forward(inputs, enc_inputs, h_e, h_in, params):
    (efc_w, efc_b, egru_wih, egru_whh, egru_bih, egru_bhh, eemb_w, eemb_b,
     fln_g, fln_b, fc1_w, fc1_b, ln1_g, ln1_b, fc2_w, fc2_b, ln2_g, ln2_b,
     rwih, rwhh, rbih, rbhh, rln_g, rln_b, vw, vb) = params
    e = jnp.maximum(enc_inputs @ efc_w + efc_b, 0.0)
    h_e_new = _gru_cell(e, h_e, egru_wih, egru_whh, egru_bih, egru_bhh, ED_HIDDEN)
    emb = h_e_new @ eemb_w + eemb_b
    feat = _layernorm(jnp.concatenate([emb, inputs], axis=-1), fln_g, fln_b)
    h1 = _layernorm(jnp.maximum(feat @ fc1_w + fc1_b, 0.0), ln1_g, ln1_b)
    x = _layernorm(jnp.maximum(h1 @ fc2_w + fc2_b, 0.0), ln2_g, ln2_b)
    h_out = _gru_cell(x, h_in, rwih, rwhh, rbih, rbhh, HIDDEN)
    h_norm = _layernorm(h_out, rln_g, rln_b)
    q = h_norm @ vw + vb
    return q, h_e_new, h_out


# ------------------------------ param building ------------------------------
def make_params(key):
    keys = iter(jax.random.split(key, 32))

    def lin(k, fin, fout):
        # deterministic stand-in for orthogonal init: scaled normal, [in, out]
        w = jax.random.normal(k, (fin, fout), jnp.float32) / jnp.sqrt(fin)
        b = jnp.zeros((1, fout), jnp.float32)
        return w, b

    def ln(fdim):
        return jnp.ones((1, fdim), jnp.float32), jnp.zeros((1, fdim), jnp.float32)

    efc_w, efc_b = lin(next(keys), ENC_IN, ED_HIDDEN)
    egru_wih, egru_bih = lin(next(keys), ED_HIDDEN, 3 * ED_HIDDEN)
    egru_whh, egru_bhh = lin(next(keys), ED_HIDDEN, 3 * ED_HIDDEN)
    eemb_w, eemb_b = lin(next(keys), ED_HIDDEN, EMBED_DIM)

    fln_g, fln_b = ln(INPUT_SIZE + EMBED_DIM)
    fc1_w, fc1_b = lin(next(keys), INPUT_SIZE + EMBED_DIM, HIDDEN)
    ln1_g, ln1_b = ln(HIDDEN)
    fc2_w, fc2_b = lin(next(keys), HIDDEN, HIDDEN)
    ln2_g, ln2_b = ln(HIDDEN)

    rwih, rbih = lin(next(keys), HIDDEN, 3 * HIDDEN)
    rwhh, rbhh = lin(next(keys), HIDDEN, 3 * HIDDEN)
    rln_g, rln_b = ln(HIDDEN)

    vw, vb = lin(next(keys), HIDDEN, 1)

    return [efc_w, efc_b, egru_wih, egru_whh, egru_bih, egru_bhh, eemb_w, eemb_b,
            fln_g, fln_b, fc1_w, fc1_b, ln1_g, ln1_b, fc2_w, fc2_b, ln2_g, ln2_b,
            rwih, rwhh, rbih, rbhh, rln_g, rln_b, vw, vb]


def build_inputs(obs, actions_onehot):
    """_build_inputs with obs_state=False, obs_last_action=True, obs_agent_id=True."""
    bs, max_t = obs.shape[:2]
    last_act = jnp.concatenate(
        [jnp.zeros_like(actions_onehot[:, :1]), actions_onehot[:, :max_t - 1]], axis=1)
    agent_id = jnp.broadcast_to(
        jnp.eye(N_AGENTS, dtype=obs.dtype)[None, None],
        (bs, max_t, N_AGENTS, N_AGENTS))
    inputs = jnp.concatenate([obs, last_act, agent_id], axis=-1)
    # TODO(synk): build_encoder_inputs is defined outside this module; use
    # (obs, last_action) which matches the POAM agent-modelling encoder inputs.
    enc_inputs = jnp.concatenate([obs, last_act], axis=-1)
    return inputs, enc_inputs


# ------------------------------------ main ----------------------------------
if __name__ == "__main__":
    key = jax.random.PRNGKey(0)
    k_obs, k_act, k_he, k_hin, k_par = jax.random.split(key, 5)

    obs = jax.random.normal(k_obs, (BS, T, N_AGENTS, OBS_DIM), jnp.float32)
    act_idx = jax.random.randint(k_act, (BS, T, N_AGENTS), 0, N_ACTIONS)
    actions_onehot = jax.nn.one_hot(act_idx, N_ACTIONS, dtype=jnp.float32)

    inputs4d, enc4d = build_inputs(obs, actions_onehot)
    orig_batch_dims = inputs4d.shape[:-1]                 # (BS, T, N_AGENTS)

    # hidden states (one per row; zeros in init_hidden, random here for a stricter test)
    h_e4d = 0.1 * jax.random.normal(k_he, (BS, T, N_AGENTS, ED_HIDDEN), jnp.float32)
    h_in4d = 0.1 * jax.random.normal(k_hin, (BS, T, N_AGENTS, HIDDEN), jnp.float32)

    inputs = inputs4d.reshape(-1, INPUT_SIZE)
    enc_inputs = enc4d.reshape(-1, ENC_IN)
    h_e = h_e4d.reshape(-1, ED_HIDDEN)
    h_in = h_in4d.reshape(-1, HIDDEN)

    params = make_params(k_par)

    q, he_out, h_out = poam_critic_forward(inputs, enc_inputs, h_e, h_in, params)
    q, he_out, h_out = jax.block_until_ready((q, he_out, h_out))

    # reshape back like the PyTorch module's .view(*orig_batch_dims, -1)
    q_v = q.reshape(*orig_batch_dims, -1)
    he_v = he_out.reshape(*orig_batch_dims, -1)
    ho_v = h_out.reshape(*orig_batch_dims, -1)

    q_ref, he_ref, ho_ref = reference_forward(inputs, enc_inputs, h_e, h_in, params)
    assert jnp.allclose(q_v.reshape(-1, 1), q_ref, atol=1e-4, rtol=1e-4)
    assert jnp.allclose(he_v.reshape(-1, ED_HIDDEN), he_ref, atol=1e-4, rtol=1e-4)
    assert jnp.allclose(ho_v.reshape(-1, HIDDEN), ho_ref, atol=1e-4, rtol=1e-4)

    print("KERNEL_OK")
</pallas_src>

<mosaic_0001>
module attributes {stable_mosaic.version = 11 : i64} {
  func.func @poam_critic_kernel(%arg0: i32, %arg1: memref<24x20xf32, #tpu.memory_space<vmem>>, %arg2: memref<24x17xf32, #tpu.memory_space<vmem>>, %arg3: memref<24x16xf32, #tpu.memory_space<vmem>>, %arg4: memref<24x32xf32, #tpu.memory_space<vmem>>, %arg5: memref<17x16xf32, #tpu.memory_space<vmem>>, %arg6: memref<1x16xf32, #tpu.memory_space<vmem>>, %arg7: memref<16x16xf32, #tpu.memory_space<vmem>>, %arg8: memref<16x16xf32, #tpu.memory_space<vmem>>, %arg9: memref<16x16xf32, #tpu.memory_space<vmem>>, %arg10: memref<16x16xf32, #tpu.memory_space<vmem>>, %arg11: memref<16x16xf32, #tpu.memory_space<vmem>>, %arg12: memref<16x16xf32, #tpu.memory_space<vmem>>, %arg13: memref<1x16xf32, #tpu.memory_space<vmem>>, %arg14: memref<1x16xf32, #tpu.memory_space<vmem>>, %arg15: memref<1x16xf32, #tpu.memory_space<vmem>>, %arg16: memref<1x16xf32, #tpu.memory_space<vmem>>, %arg17: memref<1x16xf32, #tpu.memory_space<vmem>>, %arg18: memref<1x16xf32, #tpu.memory_space<vmem>>, %arg19: memref<16x8xf32, #tpu.memory_space<vmem>>, %arg20: memref<1x8xf32, #tpu.memory_space<vmem>>, %arg21: memref<1x8xf32, #tpu.memory_space<vmem>>, %arg22: memref<1x8xf32, #tpu.memory_space<vmem>>, %arg23: memref<1x20xf32, #tpu.memory_space<vmem>>, %arg24: memref<1x20xf32, #tpu.memory_space<vmem>>, %arg25: memref<8x32xf32, #tpu.memory_space<vmem>>, %arg26: memref<20x32xf32, #tpu.memory_space<vmem>>, %arg27: memref<1x32xf32, #tpu.memory_space<vmem>>, %arg28: memref<1x32xf32, #tpu.memory_space<vmem>>, %arg29: memref<1x32xf32, #tpu.memory_space<vmem>>, %arg30: memref<32x32xf32, #tpu.memory_space<vmem>>, %arg31: memref<1x32xf32, #tpu.memory_space<vmem>>, %arg32: memref<1x32xf32, #tpu.memory_space<vmem>>, %arg33: memref<1x32xf32, #tpu.memory_space<vmem>>, %arg34: memref<32x32xf32, #tpu.memory_space<vmem>>, %arg35: memref<32x32xf32, #tpu.memory_space<vmem>>, %arg36: memref<32x32xf32, #tpu.memory_space<vmem>>, %arg37: memref<32x32xf32, #tpu.memory_space<vmem>>, %arg38: memref<32x32xf32, #tpu.memory_space<vmem>>, %arg39: memref<32x32xf32, #tpu.memory_space<vmem>>, %arg40: memref<1x32xf32, #tpu.memory_space<vmem>>, %arg41: memref<1x32xf32, #tpu.memory_space<vmem>>, %arg42: memref<1x32xf32, #tpu.memory_space<vmem>>, %arg43: memref<1x32xf32, #tpu.memory_space<vmem>>, %arg44: memref<1x32xf32, #tpu.memory_space<vmem>>, %arg45: memref<1x32xf32, #tpu.memory_space<vmem>>, %arg46: memref<1x32xf32, #tpu.memory_space<vmem>>, %arg47: memref<1x32xf32, #tpu.memory_space<vmem>>, %arg48: memref<32x1xf32, #tpu.memory_space<vmem>>, %arg49: memref<1x1xf32, #tpu.memory_space<vmem>>, %arg50: memref<24x128xf32, #tpu.memory_space<vmem>>) attributes {dimension_semantics = [#tpu.dimension_semantics<parallel>], iteration_bounds = array<i64: 1>, scalar_prefetch = 0 : i64, scratch_operands = 0 : i64, tpu.core_type = #tpu.core_type<tc>, window_params = [{transform_indices = @transform_0, window_bounds = array<i64: 24, 20>}, {transform_indices = @transform_1, window_bounds = array<i64: 24, 17>}, {transform_indices = @transform_2, window_bounds = array<i64: 24, 16>}, {transform_indices = @transform_3, window_bounds = array<i64: 24, 32>}, {pipeline_mode = #tpu.pipeline_mode<synchronous>, transform_indices = @transform_4, window_bounds = array<i64: 17, 16>}, {pipeline_mode = #tpu.pipeline_mode<synchronous>, transform_indices = @transform_5, window_bounds = array<i64: 1, 16>}, {pipeline_mode = #tpu.pipeline_mode<synchronous>, transform_indices = @transform_6, window_bounds = array<i64: 16, 16>}, {pipeline_mode = #tpu.pipeline_mode<synchronous>, transform_indices = @transform_7, window_bounds = array<i64: 16, 16>}, {pipeline_mode = #tpu.pipeline_mode<synchronous>, transform_indices = @transform_8, window_bounds = array<i64: 16, 16>}, {pipeline_mode = #tpu.pipeline_mode<synchronous>, transform_indices = @transform_9, window_bounds = array<i64: 16, 16>}, {pipeline_mode = #tpu.pipeline_mode<synchronous>, transform_indices = @transform_10, window_bounds = array<i64: 16, 16>}, {pipeline_mode = #tpu.pipeline_mode<synchronous>, transform_indices = @transform_11, window_bounds = array<i64: 16, 16>}, {pipeline_mode = #tpu.pipeline_mode<synchronous>, transform_indices = @transform_12, window_bounds = array<i64: 1, 16>}, {pipeline_mode = #tpu.pipeline_mode<synchronous>, transform_indices = @transform_13, window_bounds = array<i64: 1, 16>}, {pipeline_mode = #tpu.pipeline_mode<synchronous>, transform_indices = @transform_14, window_bounds = array<i64: 1, 16>}, {pipeline_mode = #tpu.pipeline_mode<synchronous>, transform_indices = @transform_15, window_bounds = array<i64: 1, 16>}, {pipeline_mode = #tpu.pipeline_mode<synchronous>, transform_indices = @transform_16, window_bounds = array<i64: 1, 16>}, {pipeline_mode = #tpu.pipeline_mode<synchronous>, transform_indices = @transform_17, window_bounds = array<i64: 1, 16>}, {pipeline_mode = #tpu.pipeline_mode<synchronous>, transform_indices = @transform_18, window_bounds = array<i64: 16, 8>}, {pipeline_mode = #tpu.pipeline_mode<synchronous>, transform_indices = @transform_19, window_bounds = array<i64: 1, 8>}, {pipeline_mode = #tpu.pipeline_mode<synchronous>, transform_indices = @transform_20, window_bounds = array<i64: 1, 8>}, {pipeline_mode = #tpu.pipeline_mode<synchronous>, transform_indices = @transform_21, window_bounds = array<i64: 1, 8>}, {pipeline_mode = #tpu.pipeline_mode<synchronous>, transform_indices = @transform_22, window_bounds = array<i64: 1, 20>}, {pipeline_mode = #tpu.pipeline_mode<synchronous>, transform_indices = @transform_23, window_bounds = array<i64: 1, 20>}, {pipeline_mode = #tpu.pipeline_mode<synchronous>, transform_indices = @transform_24, window_bounds = array<i64: 8, 32>}, {pipeline_mode = #tpu.pipeline_mode<synchronous>, transform_indices = @transform_25, window_bounds = array<i64: 20, 32>}, {pipeline_mode = #tpu.pipeline_mode<synchronous>, transform_indices = @transform_26, window_bounds = array<i64: 1, 32>}, {pipeline_mode = #tpu.pipeline_mode<synchronous>, transform_indices = @transform_27, window_bounds = array<i64: 1, 32>}, {pipeline_mode = #tpu.pipeline_mode<synchronous>, transform_indices = @transform_28, window_bounds = array<i64: 1, 32>}, {pipeline_mode = #tpu.pipeline_mode<synchronous>, transform_indices = @transform_29, window_bounds = array<i64: 32, 32>}, {pipeline_mode = #tpu.pipeline_mode<synchronous>, transform_indices = @transform_30, window_bounds = array<i64: 1, 32>}, {pipeline_mode = #tpu.pipeline_mode<synchronous>, transform_indices = @transform_31, window_bounds = array<i64: 1, 32>}, {pipeline_mode = #tpu.pipeline_mode<synchronous>, transform_indices = @transform_32, window_bounds = array<i64: 1, 32>}, {pipeline_mode = #tpu.pipeline_mode<synchronous>, transform_indices = @transform_33, window_bounds = array<i64: 32, 32>}, {pipeline_mode = #tpu.pipeline_mode<synchronous>, transform_indices = @transform_34, window_bounds = array<i64: 32, 32>}, {pipeline_mode = #tpu.pipeline_mode<synchronous>, transform_indices = @transform_35, window_bounds = array<i64: 32, 32>}, {pipeline_mode = #tpu.pipeline_mode<synchronous>, transform_indices = @transform_36, window_bounds = array<i64: 32, 32>}, {pipeline_mode = #tpu.pipeline_mode<synchronous>, transform_indices = @transform_37, window_bounds = array<i64: 32, 32>}, {pipeline_mode = #tpu.pipeline_mode<synchronous>, transform_indices = @transform_38, window_bounds = array<i64: 32, 32>}, {pipeline_mode = #tpu.pipeline_mode<synchronous>, transform_indices = @transform_39, window_bounds = array<i64: 1, 32>}, {pipeline_mode = #tpu.pipeline_mode<synchronous>, transform_indices = @transform_40, window_bounds = array<i64: 1, 32>}, {pipeline_mode = #tpu.pipeline_mode<synchronous>, transform_indices = @transform_41, window_bounds = array<i64: 1, 32>}, {pipeline_mode = #tpu.pipeline_mode<synchronous>, transform_indices = @transform_42, window_bounds = array<i64: 1, 32>}, {pipeline_mode = #tpu.pipeline_mode<synchronous>, transform_indices = @transform_43, window_bounds = array<i64: 1, 32>}, {pipeline_mode = #tpu.pipeline_mode<synchronous>, transform_indices = @transform_44, window_bounds = array<i64: 1, 32>}, {pipeline_mode = #tpu.pipeline_mode<synchronous>, transform_indices = @transform_45, window_bounds = array<i64: 1, 32>}, {pipeline_mode = #tpu.pipeline_mode<synchronous>, transform_indices = @transform_46, window_bounds = array<i64: 1, 32>}, {pipeline_mode = #tpu.pipeline_mode<synchronous>, transform_indices = @transform_47, window_bounds = array<i64: 32, 1>}, {pipeline_mode = #tpu.pipeline_mode<synchronous>, transform_indices = @transform_48, window_bounds = array<i64: 1, 1>}, {transform_indices = @transform_49, window_bounds = array<i64: 24, 128>}]} {
    %c0 = arith.constant 0 : index
    %c0_0 = arith.constant 0 : index
    %0 = vector.load %arg1[%c0, %c0_0] : memref<24x20xf32, #tpu.memory_space<vmem>>, vector<24x20xf32>
    %c0_1 = arith.constant 0 : index
    %c0_2 = arith.constant 0 : index
    %1 = vector.load %arg2[%c0_1, %c0_2] : memref<24x17xf32, #tpu.memory_space<vmem>>, vector<24x17xf32>
    %c0_3 = arith.constant 0 : index
    %c0_4 = arith.constant 0 : index
    %2 = vector.load %arg3[%c0_3, %c0_4] : memref<24x16xf32, #tpu.memory_space<vmem>>, vector<24x16xf32>
    %c0_5 = arith.constant 0 : index
    %c0_6 = arith.constant 0 : index
    %3 = vector.load %arg4[%c0_5, %c0_6] : memref<24x32xf32, #tpu.memory_space<vmem>>, vector<24x32xf32>
    %c0_7 = arith.constant 0 : index
    %c0_8 = arith.constant 0 : index
    %4 = vector.load %arg5[%c0_7, %c0_8] : memref<17x16xf32, #tpu.memory_space<vmem>>, vector<17x16xf32>
    %cst = arith.constant dense<0.000000e+00> : vector<24x16xf32>
    %5 = tpu.matmul %1, %4, %cst {dimension_numbers = #tpu.dot_dimension_numbers<[1], [0], [0], [1], [0, 0, 1, 1], [], []>} : vector<24x17xf32>, vector<17x16xf32>, vector<24x16xf32> -> vector<24x16xf32>
    %c0_9 = arith.constant 0 : index
    %c0_10 = arith.constant 0 : index
    %6 = vector.load %arg6[%c0_9, %c0_10] : memref<1x16xf32, #tpu.memory_space<vmem>>, vector<1x16xf32>
    %7 = vector.broadcast %6 : vector<1x16xf32> to vector<24x16xf32>
    %8 = arith.addf %5, %7 : vector<24x16xf32>
    %cst_11 = arith.constant 0.000000e+00 : f32
    %9 = vector.broadcast %cst_11 : f32 to vector<24x16xf32>
    %10 = arith.maximumf %8, %9 : vector<24x16xf32>
    %c0_12 = arith.constant 0 : index
    %c0_13 = arith.constant 0 : index
    %11 = vector.load %arg7[%c0_12, %c0_13] : memref<16x16xf32, #tpu.memory_space<vmem>>, vector<16x16xf32>
    %c0_14 = arith.constant 0 : index
    %c0_15 = arith.constant 0 : index
    %12 = vector.load %arg8[%c0_14, %c0_15] : memref<16x16xf32, #tpu.memory_space<vmem>>, vector<16x16xf32>
    %c0_16 = arith.constant 0 : index
    %c0_17 = arith.constant 0 : index
    %13 = vector.load %arg9[%c0_16, %c0_17] : memref<16x16xf32, #tpu.memory_space<vmem>>, vector<16x16xf32>
    %c0_18 = arith.constant 0 : index
    %c0_19 = arith.constant 0 : index
    %14 = vector.load %arg10[%c0_18, %c0_19] : memref<16x16xf32, #tpu.memory_space<vmem>>, vector<16x16xf32>
    %c0_20 = arith.constant 0 : index
    %c0_21 = arith.constant 0 : index
    %15 = vector.load %arg11[%c0_20, %c0_21] : memref<16x16xf32, #tpu.memory_space<vmem>>, vector<16x16xf32>
    %c0_22 = arith.constant 0 : index
    %c0_23 = arith.constant 0 : index
    %16 = vector.load %arg12[%c0_22, %c0_23] : memref<16x16xf32, #tpu.memory_space<vmem>>, vector<16x16xf32>
    %c0_24 = arith.constant 0 : index
    %c0_25 = arith.constant 0 : index
    %17 = vector.load %arg13[%c0_24, %c0_25] : memref<1x16xf32, #tpu.memory_space<vmem>>, vector<1x16xf32>
    %c0_26 = arith.constant 0 : index
    %c0_27 = arith.constant 0 : index
    %18 = vector.load %arg14[%c0_26, %c0_27] : memref<1x16xf32, #tpu.memory_space<vmem>>, vector<1x16xf32>
    %c0_28 = arith.constant 0 : index
    %c0_29 = arith.constant 0 : index
    %19 = vector.load %arg15[%c0_28, %c0_29] : memref<1x16xf32, #tpu.memory_space<vmem>>, vector<1x16xf32>
    %c0_30 = arith.constant 0 : index
    %c0_31 = arith.constant 0 : index
    %20 = vector.load %arg16[%c0_30, %c0_31] : memref<1x16xf32, #tpu.memory_space<vmem>>, vector<1x16xf32>
    %c0_32 = arith.constant 0 : index
    %c0_33 = arith.constant 0 : index
    %21 = vector.load %arg17[%c0_32, %c0_33] : memref<1x16xf32, #tpu.memory_space<vmem>>, vector<1x16xf32>
    %c0_34 = arith.constant 0 : index
    %c0_35 = arith.constant 0 : index
    %22 = vector.load %arg18[%c0_34, %c0_35] : memref<1x16xf32, #tpu.memory_space<vmem>>, vector<1x16xf32>
    %cst_36 = arith.constant dense<0.000000e+00> : vector<24x16xf32>
    %23 = tpu.matmul %10, %11, %cst_36 {dimension_numbers = #tpu.dot_dimension_numbers<[1], [0], [0], [1], [0, 0, 1, 1], [], []>} : vector<24x16xf32>, vector<16x16xf32>, vector<24x16xf32> -> vector<24x16xf32>
    %24 = vector.broadcast %17 : vector<1x16xf32> to vector<24x16xf32>
    %25 = arith.addf %23, %24 : vector<24x16xf32>
    %cst_37 = arith.constant dense<0.000000e+00> : vector<24x16xf32>
    %26 = tpu.matmul %2, %14, %cst_37 {dimension_numbers = #tpu.dot_dimension_numbers<[1], [0], [0], [1], [0, 0, 1, 1], [], []>} : vector<24x16xf32>, vector<16x16xf32>, vector<24x16xf32> -> vector<24x16xf32>
    %27 = arith.addf %25, %26 : vector<24x16xf32>
    %28 = vector.broadcast %20 : vector<1x16xf32> to vector<24x16xf32>
    %29 = arith.addf %27, %28 : vector<24x16xf32>
    %30 = arith.negf %29 : vector<24x16xf32>
    %31 = math.exp %30 : vector<24x16xf32>
    %cst_38 = arith.constant 1.000000e+00 : f32
    %32 = vector.broadcast %cst_38 : f32 to vector<24x16xf32>
    %33 = arith.addf %32, %31 : vector<24x16xf32>
    %34 = arith.divf %32, %33 : vector<24x16xf32>
    %cst_39 = arith.constant dense<0.000000e+00> : vector<24x16xf32>
    %35 = tpu.matmul %10, %12, %cst_39 {dimension_numbers = #tpu.dot_dimension_numbers<[1], [0], [0], [1], [0, 0, 1, 1], [], []>} : vector<24x16xf32>, vector<16x16xf32>, vector<24x16xf32> -> vector<24x16xf32>
    %36 = vector.broadcast %18 : vector<1x16xf32> to vector<24x16xf32>
    %37 = arith.addf %35, %36 : vector<24x16xf32>
    %cst_40 = arith.constant dense<0.000000e+00> : vector<24x16xf32>
    %38 = tpu.matmul %2, %15, %cst_40 {dimension_numbers = #tpu.dot_dimension_numbers<[1], [0], [0], [1], [0, 0, 1, 1], [], []>} : vector<24x16xf32>, vector<16x16xf32>, vector<24x16xf32> -> vector<24x16xf32>
    %39 = arith.addf %37, %38 : vector<24x16xf32>
    %40 = vector.broadcast %21 : vector<1x16xf32> to vector<24x16xf32>
    %41 = arith.addf %39, %40 : vector<24x16xf32>
    %42 = arith.negf %41 : vector<24x16xf32>
    %43 = math.exp %42 : vector<24x16xf32>
    %cst_41 = arith.constant 1.000000e+00 : f32
    %44 = vector.broadcast %cst_41 : f32 to vector<24x16xf32>
    %45 = arith.addf %44, %43 : vector<24x16xf32>
    %46 = arith.divf %44, %45 : vector<24x16xf32>
    %cst_42 = arith.constant dense<0.000000e+00> : vector<24x16xf32>
    %47 = tpu.matmul %10, %13, %cst_42 {dimension_numbers = #tpu.dot_dimension_numbers<[1], [0], [0], [1], [0, 0, 1, 1], [], []>} : vector<24x16xf32>, vector<16x16xf32>, vector<24x16xf32> -> vector<24x16xf32>
    %48 = vector.broadcast %19 : vector<1x16xf32> to vector<24x16xf32>
    %49 = arith.addf %47, %48 : vector<24x16xf32>
    %cst_43 = arith.constant dense<0.000000e+00> : vector<24x16xf32>
    %50 = tpu.matmul %2, %16, %cst_43 {dimension_numbers = #tpu.dot_dimension_numbers<[1], [0], [0], [1], [0, 0, 1, 1], [], []>} : vector<24x16xf32>, vector<16x16xf32>, vector<24x16xf32> -> vector<24x16xf32>
    %51 = vector.broadcast %22 : vector<1x16xf32> to vector<24x16xf32>
    %52 = arith.addf %50, %51 : vector<24x16xf32>
    %53 = arith.mulf %34, %52 : vector<24x16xf32>
    %54 = arith.addf %49, %53 : vector<24x16xf32>
    %55 = math.tanh %54 : vector<24x16xf32>
    %cst_44 = arith.constant 1.000000e+00 : f32
    %56 = vector.broadcast %cst_44 : f32 to vector<24x16xf32>
    %57 = arith.subf %56, %46 : vector<24x16xf32>
    %58 = arith.mulf %57, %55 : vector<24x16xf32>
    %59 = arith.mulf %46, %2 : vector<24x16xf32>
    %60 = arith.addf %58, %59 : vector<24x16xf32>
    %c0_45 = arith.constant 0 : index
    %c0_46 = arith.constant 0 : index
    %61 = vector.load %arg19[%c0_45, %c0_46] : memref<16x8xf32, #tpu.memory_space<vmem>>, vector<16x8xf32>
    %cst_47 = arith.constant dense<0.000000e+00> : vector<24x8xf32>
    %62 = tpu.matmul %60, %61, %cst_47 {dimension_numbers = #tpu.dot_dimension_numbers<[1], [0], [0], [1], [0, 0, 1, 1], [], []>} : vector<24x16xf32>, vector<16x8xf32>, vector<24x8xf32> -> vector<24x8xf32>
    %c0_48 = arith.constant 0 : index
    %c0_49 = arith.constant 0 : index
    %63 = vector.load %arg20[%c0_48, %c0_49] : memref<1x8xf32, #tpu.memory_space<vmem>>, vector<1x8xf32>
    %64 = vector.broadcast %63 : vector<1x8xf32> to vector<24x8xf32>
    %65 = arith.addf %62, %64 : vector<24x8xf32>
    %cst_50 = arith.constant dense<0.000000e+00> : vector<24xf32>
    %66 = vector.multi_reduction <add>, %65, %cst_50 [1] : vector<24x8xf32> to vector<24xf32>
    %67 = vector.shape_cast %66 : vector<24xf32> to vector<24x1xf32>
    %cst_51 = arith.constant dense<0.000000e+00> : vector<24xf32>
    %68 = vector.multi_reduction <add>, %0, %cst_51 [1] : vector<24x20xf32> to vector<24xf32>
    %69 = vector.shape_cast %68 : vector<24xf32> to vector<24x1xf32>
    %70 = arith.addf %67, %69 : vector<24x1xf32>
    %cst_52 = arith.constant 2.800000e+01 : f32
    %71 = vector.broadcast %cst_52 : f32 to vector<24x1xf32>
    %72 = arith.divf %70, %71 : vector<24x1xf32>
    %73 = vector.broadcast %72 : vector<24x1xf32> to vector<24x8xf32>
    %74 = arith.subf %65, %73 : vector<24x8xf32>
    %75 = vector.broadcast %72 : vector<24x1xf32> to vector<24x20xf32>
    %76 = arith.subf %0, %75 : vector<24x20xf32>
    %77 = arith.mulf %74, %74 : vector<24x8xf32>
    %cst_53 = arith.constant dense<0.000000e+00> : vector<24xf32>
    %78 = vector.multi_reduction <add>, %77, %cst_53 [1] : vector<24x8xf32> to vector<24xf32>
    %79 = vector.shape_cast %78 : vector<24xf32> to vector<24x1xf32>
    %80 = arith.mulf %76, %76 : vector<24x20xf32>
    %cst_54 = arith.constant dense<0.000000e+00> : vector<24xf32>
    %81 = vector.multi_reduction <add>, %80, %cst_54 [1] : vector<24x20xf32> to vector<24xf32>
    %82 = vector.shape_cast %81 : vector<24xf32> to vector<24x1xf32>
    %83 = arith.addf %79, %82 : vector<24x1xf32>
    %cst_55 = arith.constant 2.800000e+01 : f32
    %84 = vector.broadcast %cst_55 : f32 to vector<24x1xf32>
    %85 = arith.divf %83, %84 : vector<24x1xf32>
    %cst_56 = arith.constant 9.99999974E-6 : f32
    %86 = vector.broadcast %cst_56 : f32 to vector<24x1xf32>
    %87 = arith.addf %85, %86 : vector<24x1xf32>
    %88 = math.rsqrt %87 : vector<24x1xf32>
    %89 = vector.broadcast %88 : vector<24x1xf32> to vector<24x8xf32>
    %90 = arith.mulf %74, %89 : vector<24x8xf32>
    %c0_57 = arith.constant 0 : index
    %c0_58 = arith.constant 0 : index
    %91 = vector.load %arg21[%c0_57, %c0_58] : memref<1x8xf32, #tpu.memory_space<vmem>>, vector<1x8xf32>
    %92 = vector.broadcast %91 : vector<1x8xf32> to vector<24x8xf32>
    %93 = arith.mulf %90, %92 : vector<24x8xf32>
    %c0_59 = arith.constant 0 : index
    %c0_60 = arith.constant 0 : index
    %94 = vector.load %arg22[%c0_59, %c0_60] : memref<1x8xf32, #tpu.memory_space<vmem>>, vector<1x8xf32>
    %95 = vector.broadcast %94 : vector<1x8xf32> to vector<24x8xf32>
    %96 = arith.addf %93, %95 : vector<24x8xf32>
    %97 = vector.broadcast %88 : vector<24x1xf32> to vector<24x20xf32>
    %98 = arith.mulf %76, %97 : vector<24x20xf32>
    %c0_61 = arith.constant 0 : index
    %c0_62 = arith.constant 0 : index
    %99 = vector.load %arg23[%c0_61, %c0_62] : memref<1x20xf32, #tpu.memory_space<vmem>>, vector<1x20xf32>
    %100 = vector.broadcast %99 : vector<1x20xf32> to vector<24x20xf32>
    %101 = arith.mulf %98, %100 : vector<24x20xf32>
    %c0_63 = arith.constant 0 : index
    %c0_64 = arith.constant 0 : index
    %102 = vector.load %arg24[%c0_63, %c0_64] : memref<1x20xf32, #tpu.memory_space<vmem>>, vector<1x20xf32>
    %103 = vector.broadcast %102 : vector<1x20xf32> to vector<24x20xf32>
    %104 = arith.addf %101, %103 : vector<24x20xf32>
    %c0_65 = arith.constant 0 : index
    %c0_66 = arith.constant 0 : index
    %105 = vector.load %arg25[%c0_65, %c0_66] : memref<8x32xf32, #tpu.memory_space<vmem>>, vector<8x32xf32>
    %cst_67 = arith.constant dense<0.000000e+00> : vector<24x32xf32>
    %106 = tpu.matmul %96, %105, %cst_67 {dimension_numbers = #tpu.dot_dimension_numbers<[1], [0], [0], [1], [0, 0, 1, 1], [], []>} : vector<24x8xf32>, vector<8x32xf32>, vector<24x32xf32> -> vector<24x32xf32>
    %c0_68 = arith.constant 0 : index
    %c0_69 = arith.constant 0 : index
    %107 = vector.load %arg26[%c0_68, %c0_69] : memref<20x32xf32, #tpu.memory_space<vmem>>, vector<20x32xf32>
    %cst_70 = arith.constant dense<0.000000e+00> : vector<24x32xf32>
    %108 = tpu.matmul %104, %107, %cst_70 {dimension_numbers = #tpu.dot_dimension_numbers<[1], [0], [0], [1], [0, 0, 1, 1], [], []>} : vector<24x20xf32>, vector<20x32xf32>, vector<24x32xf32> -> vector<24x32xf32>
    %109 = arith.addf %106, %108 : vector<24x32xf32>
    %c0_71 = arith.constant 0 : index
    %c0_72 = arith.constant 0 : index
    %110 = vector.load %arg27[%c0_71, %c0_72] : memref<1x32xf32, #tpu.memory_space<vmem>>, vector<1x32xf32>
    %111 = vector.broadcast %110 : vector<1x32xf32> to vector<24x32xf32>
    %112 = arith.addf %109, %111 : vector<24x32xf32>
    %cst_73 = arith.constant 0.000000e+00 : f32
    %113 = vector.broadcast %cst_73 : f32 to vector<24x32xf32>
    %114 = arith.maximumf %112, %113 : vector<24x32xf32>
    %c0_74 = arith.constant 0 : index
    %c0_75 = arith.constant 0 : index
    %115 = vector.load %arg28[%c0_74, %c0_75] : memref<1x32xf32, #tpu.memory_space<vmem>>, vector<1x32xf32>
    %c0_76 = arith.constant 0 : index
    %c0_77 = arith.constant 0 : index
    %116 = vector.load %arg29[%c0_76, %c0_77] : memref<1x32xf32, #tpu.memory_space<vmem>>, vector<1x32xf32>
    %cst_78 = arith.constant dense<0.000000e+00> : vector<24xf32>
    %117 = vector.multi_reduction <add>, %114, %cst_78 [1] : vector<24x32xf32> to vector<24xf32>
    %118 = vector.shape_cast %117 : vector<24xf32> to vector<24x1xf32>
    %cst_79 = arith.constant 3.200000e+01 : f32
    %119 = vector.broadcast %cst_79 : f32 to vector<24x1xf32>
    %120 = arith.divf %118, %119 : vector<24x1xf32>
    %121 = vector.broadcast %120 : vector<24x1xf32> to vector<24x32xf32>
    %122 = arith.subf %114, %121 : vector<24x32xf32>
    %123 = arith.mulf %122, %122 : vector<24x32xf32>
    %cst_80 = arith.constant dense<0.000000e+00> : vector<24xf32>
    %124 = vector.multi_reduction <add>, %123, %cst_80 [1] : vector<24x32xf32> to vector<24xf32>
    %125 = vector.shape_cast %124 : vector<24xf32> to vector<24x1xf32>
    %cst_81 = arith.constant 3.200000e+01 : f32
    %126 = vector.broadcast %cst_81 : f32 to vector<24x1xf32>
    %127 = arith.divf %125, %126 : vector<24x1xf32>
    %128 = vector.broadcast %120 : vector<24x1xf32> to vector<24x32xf32>
    %129 = arith.subf %114, %128 : vector<24x32xf32>
    %cst_82 = arith.constant 9.99999974E-6 : f32
    %130 = vector.broadcast %cst_82 : f32 to vector<24x1xf32>
    %131 = arith.addf %127, %130 : vector<24x1xf32>
    %132 = math.rsqrt %131 : vector<24x1xf32>
    %133 = vector.broadcast %132 : vector<24x1xf32> to vector<24x32xf32>
    %134 = arith.mulf %129, %133 : vector<24x32xf32>
    %135 = vector.broadcast %115 : vector<1x32xf32> to vector<24x32xf32>
    %136 = arith.mulf %134, %135 : vector<24x32xf32>
    %137 = vector.broadcast %116 : vector<1x32xf32> to vector<24x32xf32>
    %138 = arith.addf %136, %137 : vector<24x32xf32>
    %c0_83 = arith.constant 0 : index
    %c0_84 = arith.constant 0 : index
    %139 = vector.load %arg30[%c0_83, %c0_84] : memref<32x32xf32, #tpu.memory_space<vmem>>, vector<32x32xf32>
    %cst_85 = arith.constant dense<0.000000e+00> : vector<24x32xf32>
    %140 = tpu.matmul %138, %139, %cst_85 {dimension_numbers = #tpu.dot_dimension_numbers<[1], [0], [0], [1], [0, 0, 1, 1], [], []>} : vector<24x32xf32>, vector<32x32xf32>, vector<24x32xf32> -> vector<24x32xf32>
    %c0_86 = arith.constant 0 : index
    %c0_87 = arith.constant 0 : index
    %141 = vector.load %arg31[%c0_86, %c0_87] : memref<1x32xf32, #tpu.memory_space<vmem>>, vector<1x32xf32>
    %142 = vector.broadcast %141 : vector<1x32xf32> to vector<24x32xf32>
    %143 = arith.addf %140, %142 : vector<24x32xf32>
    %cst_88 = arith.constant 0.000000e+00 : f32
    %144 = vector.broadcast %cst_88 : f32 to vector<24x32xf32>
    %145 = arith.maximumf %143, %144 : vector<24x32xf32>
    %c0_89 = arith.constant 0 : index
    %c0_90 = arith.constant 0 : index
    %146 = vector.load %arg32[%c0_89, %c0_90] : memref<1x32xf32, #tpu.memory_space<vmem>>, vector<1x32xf32>
    %c0_91 = arith.constant 0 : index
    %c0_92 = arith.constant 0 : index
    %147 = vector.load %arg33[%c0_91, %c0_92] : memref<1x32xf32, #tpu.memory_space<vmem>>, vector<1x32xf32>
    %cst_93 = arith.constant dense<0.000000e+00> : vector<24xf32>
    %148 = vector.multi_reduction <add>, %145, %cst_93 [1] : vector<24x32xf32> to vector<24xf32>
    %149 = vector.shape_cast %148 : vector<24xf32> to vector<24x1xf32>
    %cst_94 = arith.constant 3.200000e+01 : f32
    %150 = vector.broadcast %cst_94 : f32 to vector<24x1xf32>
    %151 = arith.divf %149, %150 : vector<24x1xf32>
    %152 = vector.broadcast %151 : vector<24x1xf32> to vector<24x32xf32>
    %153 = arith.subf %145, %152 : vector<24x32xf32>
    %154 = arith.mulf %153, %153 : vector<24x32xf32>
    %cst_95 = arith.constant dense<0.000000e+00> : vector<24xf32>
    %155 = vector.multi_reduction <add>, %154, %cst_95 [1] : vector<24x32xf32> to vector<24xf32>
    %156 = vector.shape_cast %155 : vector<24xf32> to vector<24x1xf32>
    %cst_96 = arith.constant 3.200000e+01 : f32
    %157 = vector.broadcast %cst_96 : f32 to vector<24x1xf32>
    %158 = arith.divf %156, %157 : vector<24x1xf32>
    %159 = vector.broadcast %151 : vector<24x1xf32> to vector<24x32xf32>
    %160 = arith.subf %145, %159 : vector<24x32xf32>
    %cst_97 = arith.constant 9.99999974E-6 : f32
    %161 = vector.broadcast %cst_97 : f32 to vector<24x1xf32>
    %162 = arith.addf %158, %161 : vector<24x1xf32>
    %163 = math.rsqrt %162 : vector<24x1xf32>
    %164 = vector.broadcast %163 : vector<24x1xf32> to vector<24x32xf32>
    %165 = arith.mulf %160, %164 : vector<24x32xf32>
    %166 = vector.broadcast %146 : vector<1x32xf32> to vector<24x32xf32>
    %167 = arith.mulf %165, %166 : vector<24x32xf32>
    %168 = vector.broadcast %147 : vector<1x32xf32> to vector<24x32xf32>
    %169 = arith.addf %167, %168 : vector<24x32xf32>
    %c0_98 = arith.constant 0 : index
    %c0_99 = arith.constant 0 : index
    %170 = vector.load %arg34[%c0_98, %c0_99] : memref<32x32xf32, #tpu.memory_space<vmem>>, vector<32x32xf32>
    %c0_100 = arith.constant 0 : index
    %c0_101 = arith.constant 0 : index
    %171 = vector.load %arg35[%c0_100, %c0_101] : memref<32x32xf32, #tpu.memory_space<vmem>>, vector<32x32xf32>
    %c0_102 = arith.constant 0 : index
    %c0_103 = arith.constant 0 : index
    %172 = vector.load %arg36[%c0_102, %c0_103] : memref<32x32xf32, #tpu.memory_space<vmem>>, vector<32x32xf32>
    %c0_104 = arith.constant 0 : index
    %c0_105 = arith.constant 0 : index
    %173 = vector.load %arg37[%c0_104, %c0_105] : memref<32x32xf32, #tpu.memory_space<vmem>>, vector<32x32xf32>
    %c0_106 = arith.constant 0 : index
    %c0_107 = arith.constant 0 : index
    %174 = vector.load %arg38[%c0_106, %c0_107] : memref<32x32xf32, #tpu.memory_space<vmem>>, vector<32x32xf32>
    %c0_108 = arith.constant 0 : index
    %c0_109 = arith.constant 0 : index
    %175 = vector.load %arg39[%c0_108, %c0_109] : memref<32x32xf32, #tpu.memory_space<vmem>>, vector<32x32xf32>
    %c0_110 = arith.constant 0 : index
    %c0_111 = arith.constant 0 : index
    %176 = vector.load %arg40[%c0_110, %c0_111] : memref<1x32xf32, #tpu.memory_space<vmem>>, vector<1x32xf32>
    %c0_112 = arith.constant 0 : index
    %c0_113 = arith.constant 0 : index
    %177 = vector.load %arg41[%c0_112, %c0_113] : memref<1x32xf32, #tpu.memory_space<vmem>>, vector<1x32xf32>
    %c0_114 = arith.constant 0 : index
    %c0_115 = arith.constant 0 : index
    %178 = vector.load %arg42[%c0_114, %c0_115] : memref<1x32xf32, #tpu.memory_space<vmem>>, vector<1x32xf32>
    %c0_116 = arith.constant 0 : index
    %c0_117 = arith.constant 0 : index
    %179 = vector.load %arg43[%c0_116, %c0_117] : memref<1x32xf32, #tpu.memory_space<vmem>>, vector<1x32xf32>
    %c0_118 = arith.constant 0 : index
    %c0_119 = arith.constant 0 : index
    %180 = vector.load %arg44[%c0_118, %c0_119] : memref<1x32xf32, #tpu.memory_space<vmem>>, vector<1x32xf32>
    %c0_120 = arith.constant 0 : index
    %c0_121 = arith.constant 0 : index
    %181 = vector.load %arg45[%c0_120, %c0_121] : memref<1x32xf32, #tpu.memory_space<vmem>>, vector<1x32xf32>
    %cst_122 = arith.constant dense<0.000000e+00> : vector<24x32xf32>
    %182 = tpu.matmul %169, %170, %cst_122 {dimension_numbers = #tpu.dot_dimension_numbers<[1], [0], [0], [1], [0, 0, 1, 1], [], []>} : vector<24x32xf32>, vector<32x32xf32>, vector<24x32xf32> -> vector<24x32xf32>
    %183 = vector.broadcast %176 : vector<1x32xf32> to vector<24x32xf32>
    %184 = arith.addf %182, %183 : vector<24x32xf32>
    %cst_123 = arith.constant dense<0.000000e+00> : vector<24x32xf32>
    %185 = tpu.matmul %3, %173, %cst_123 {dimension_numbers = #tpu.dot_dimension_numbers<[1], [0], [0], [1], [0, 0, 1, 1], [], []>} : vector<24x32xf32>, vector<32x32xf32>, vector<24x32xf32> -> vector<24x32xf32>
    %186 = arith.addf %184, %185 : vector<24x32xf32>
    %187 = vector.broadcast %179 : vector<1x32xf32> to vector<24x32xf32>
    %188 = arith.addf %186, %187 : vector<24x32xf32>
    %189 = arith.negf %188 : vector<24x32xf32>
    %190 = math.exp %189 : vector<24x32xf32>
    %cst_124 = arith.constant 1.000000e+00 : f32
    %191 = vector.broadcast %cst_124 : f32 to vector<24x32xf32>
    %192 = arith.addf %191, %190 : vector<24x32xf32>
    %193 = arith.divf %191, %192 : vector<24x32xf32>
    %cst_125 = arith.constant dense<0.000000e+00> : vector<24x32xf32>
    %194 = tpu.matmul %169, %171, %cst_125 {dimension_numbers = #tpu.dot_dimension_numbers<[1], [0], [0], [1], [0, 0, 1, 1], [], []>} : vector<24x32xf32>, vector<32x32xf32>, vector<24x32xf32> -> vector<24x32xf32>
    %195 = vector.broadcast %177 : vector<1x32xf32> to vector<24x32xf32>
    %196 = arith.addf %194, %195 : vector<24x32xf32>
    %cst_126 = arith.constant dense<0.000000e+00> : vector<24x32xf32>
    %197 = tpu.matmul %3, %174, %cst_126 {dimension_numbers = #tpu.dot_dimension_numbers<[1], [0], [0], [1], [0, 0, 1, 1], [], []>} : vector<24x32xf32>, vector<32x32xf32>, vector<24x32xf32> -> vector<24x32xf32>
    %198 = arith.addf %196, %197 : vector<24x32xf32>
    %199 = vector.broadcast %180 : vector<1x32xf32> to vector<24x32xf32>
    %200 = arith.addf %198, %199 : vector<24x32xf32>
    %201 = arith.negf %200 : vector<24x32xf32>
    %202 = math.exp %201 : vector<24x32xf32>
    %cst_127 = arith.constant 1.000000e+00 : f32
    %203 = vector.broadcast %cst_127 : f32 to vector<24x32xf32>
    %204 = arith.addf %203, %202 : vector<24x32xf32>
    %205 = arith.divf %203, %204 : vector<24x32xf32>
    %cst_128 = arith.constant dense<0.000000e+00> : vector<24x32xf32>
    %206 = tpu.matmul %169, %172, %cst_128 {dimension_numbers = #tpu.dot_dimension_numbers<[1], [0], [0], [1], [0, 0, 1, 1], [], []>} : vector<24x32xf32>, vector<32x32xf32>, vector<24x32xf32> -> vector<24x32xf32>
    %207 = vector.broadcast %178 : vector<1x32xf32> to vector<24x32xf32>
    %208 = arith.addf %206, %207 : vector<24x32xf32>
    %cst_129 = arith.constant dense<0.000000e+00> : vector<24x32xf32>
    %209 = tpu.matmul %3, %175, %cst_129 {dimension_numbers = #tpu.dot_dimension_numbers<[1], [0], [0], [1], [0, 0, 1, 1], [], []>} : vector<24x32xf32>, vector<32x32xf32>, vector<24x32xf32> -> vector<24x32xf32>
    %210 = vector.broadcast %181 : vector<1x32xf32> to vector<24x32xf32>
    %211 = arith.addf %209, %210 : vector<24x32xf32>
    %212 = arith.mulf %193, %211 : vector<24x32xf32>
    %213 = arith.addf %208, %212 : vector<24x32xf32>
    %214 = math.tanh %213 : vector<24x32xf32>
    %cst_130 = arith.constant 1.000000e+00 : f32
    %215 = vector.broadcast %cst_130 : f32 to vector<24x32xf32>
    %216 = arith.subf %215, %205 : vector<24x32xf32>
    %217 = arith.mulf %216, %214 : vector<24x32xf32>
    %218 = arith.mulf %205, %3 : vector<24x32xf32>
    %219 = arith.addf %217, %218 : vector<24x32xf32>
    %c0_131 = arith.constant 0 : index
    %c0_132 = arith.constant 0 : index
    %220 = vector.load %arg46[%c0_131, %c0_132] : memref<1x32xf32, #tpu.memory_space<vmem>>, vector<1x32xf32>
    %c0_133 = arith.constant 0 : index
    %c0_134 = arith.constant 0 : index
    %221 = vector.load %arg47[%c0_133, %c0_134] : memref<1x32xf32, #tpu.memory_space<vmem>>, vector<1x32xf32>
    %cst_135 = arith.constant dense<0.000000e+00> : vector<24xf32>
    %222 = vector.multi_reduction <add>, %219, %cst_135 [1] : vector<24x32xf32> to vector<24xf32>
    %223 = vector.shape_cast %222 : vector<24xf32> to vector<24x1xf32>
    %cst_136 = arith.constant 3.200000e+01 : f32
    %224 = vector.broadcast %cst_136 : f32 to vector<24x1xf32>
    %225 = arith.divf %223, %224 : vector<24x1xf32>
    %226 = vector.broadcast %225 : vector<24x1xf32> to vector<24x32xf32>
    %227 = arith.subf %219, %226 : vector<24x32xf32>
    %228 = arith.mulf %227, %227 : vector<24x32xf32>
    %cst_137 = arith.constant dense<0.000000e+00> : vector<24xf32>
    %229 = vector.multi_reduction <add>, %228, %cst_137 [1] : vector<24x32xf32> to vector<24xf32>
    %230 = vector.shape_cast %229 : vector<24xf32> to vector<24x1xf32>
    %cst_138 = arith.constant 3.200000e+01 : f32
    %231 = vector.broadcast %cst_138 : f32 to vector<24x1xf32>
    %232 = arith.divf %230, %231 : vector<24x1xf32>
    %233 = vector.broadcast %225 : vector<24x1xf32> to vector<24x32xf32>
    %234 = arith.subf %219, %233 : vector<24x32xf32>
    %cst_139 = arith.constant 9.99999974E-6 : f32
    %235 = vector.broadcast %cst_139 : f32 to vector<24x1xf32>
    %236 = arith.addf %232, %235 : vector<24x1xf32>
    %237 = math.rsqrt %236 : vector<24x1xf32>
    %238 = vector.broadcast %237 : vector<24x1xf32> to vector<24x32xf32>
    %239 = arith.mulf %234, %238 : vector<24x32xf32>
    %240 = vector.broadcast %220 : vector<1x32xf32> to vector<24x32xf32>
    %241 = arith.mulf %239, %240 : vector<24x32xf32>
    %242 = vector.broadcast %221 : vector<1x32xf32> to vector<24x32xf32>
    %243 = arith.addf %241, %242 : vector<24x32xf32>
    %c0_140 = arith.constant 0 : index
    %c0_141 = arith.constant 0 : index
    %244 = vector.load %arg48[%c0_140, %c0_141] : memref<32x1xf32, #tpu.memory_space<vmem>>, vector<32x1xf32>
    %cst_142 = arith.constant dense<0.000000e+00> : vector<24x1xf32>
    %245 = tpu.matmul %243, %244, %cst_142 {dimension_numbers = #tpu.dot_dimension_numbers<[1], [0], [0], [1], [0, 0, 1, 1], [], []>} : vector<24x32xf32>, vector<32x1xf32>, vector<24x1xf32> -> vector<24x1xf32>
    %c0_143 = arith.constant 0 : index
    %c0_144 = arith.constant 0 : index
    %246 = vector.load %arg49[%c0_143, %c0_144] : memref<1x1xf32, #tpu.memory_space<vmem>>, vector<1x1xf32>
    %247 = vector.broadcast %246 : vector<1x1xf32> to vector<24x1xf32>
    %248 = arith.addf %245, %247 : vector<24x1xf32>
    %cst_145 = arith.constant 0.000000e+00 : f32
    %249 = vector.broadcast %cst_145 : f32 to vector<24x15xf32>
    %cst_146 = arith.constant 0.000000e+00 : f32
    %250 = vector.broadcast %cst_146 : f32 to vector<24x64xf32>
    %251 = tpu.concatenate %248, %249, %60, %219, %250 in 1 : vector<24x1xf32>, vector<24x15xf32>, vector<24x16xf32>, vector<24x32xf32>, vector<24x64xf32> -> vector<24x128xf32>
    %c0_147 = arith.constant 0 : index
    %c0_148 = arith.constant 0 : index
    %252 = vector.load %arg50[%c0_147, %c0_148] : memref<24x128xf32, #tpu.memory_space<vmem>>, vector<24x128xf32>
    tpu.vector_store %arg50[%c0_147, %c0_148], %251 {strides = array<i32>} : memref<24x128xf32, #tpu.memory_space<vmem>>, vector<24x128xf32>,
    return
  }
  func.func @transform_0(%arg0: i32) -> (i32, i32) {
    %c0_i32 = arith.constant 0 : i32
    %c0_i32_0 = arith.constant 0 : i32
    return %arg0, %c0_i32 : i32, i32
  }
  func.func @transform_1(%arg0: i32) -> (i32, i32) {
    %c0_i32 = arith.constant 0 : i32
    %c0_i32_0 = arith.constant 0 : i32
    return %arg0, %c0_i32 : i32, i32
  }
  func.func @transform_2(%arg0: i32) -> (i32, i32) {
    %c0_i32 = arith.constant 0 : i32
    %c0_i32_0 = arith.constant 0 : i32
    return %arg0, %c0_i32 : i32, i32
  }
  func.func @transform_3(%arg0: i32) -> (i32, i32) {
    %c0_i32 = arith.constant 0 : i32
    %c0_i32_0 = arith.constant 0 : i32
    return %arg0, %c0_i32 : i32, i32
  }
  func.func @transform_4(%arg0: i32) -> (i32, i32) {
    %c0_i32 = arith.constant 0 : i32
    %c0_i32_0 = arith.constant 0 : i32
    %c0_i32_1 = arith.constant 0 : i32
    return %c0_i32, %c0_i32_0 : i32, i32
  }
  func.func @transform_5(%arg0: i32) -> (i32, i32) {
    %c0_i32 = arith.constant 0 : i32
    %c0_i32_0 = arith.constant 0 : i32
    %c0_i32_1 = arith.constant 0 : i32
    return %c0_i32, %c0_i32_0 : i32, i32
  }
  func.func @transform_6(%arg0: i32) -> (i32, i32) {
    %c0_i32 = arith.constant 0 : i32
    %c0_i32_0 = arith.constant 0 : i32
    %c0_i32_1 = arith.constant 0 : i32
    return %c0_i32, %c0_i32_0 : i32, i32
  }
  func.func @transform_7(%arg0: i32) -> (i32, i32) {
    %c0_i32 = arith.constant 0 : i32
    %c0_i32_0 = arith.constant 0 : i32
    %c0_i32_1 = arith.constant 0 : i32
    return %c0_i32, %c0_i32_0 : i32, i32
  }
  func.func @transform_8(%arg0: i32) -> (i32, i32) {
    %c0_i32 = arith.constant 0 : i32
    %c0_i32_0 = arith.constant 0 : i32
    %c0_i32_1 = arith.constant 0 : i32
    return %c0_i32, %c0_i32_0 : i32, i32
  }
  func.func @transform_9(%arg0: i32) -> (i32, i32) {
    %c0_i32 = arith.constant 0 : i32
    %c0_i32_0 = arith.constant 0 : i32
    %c0_i32_1 = arith.constant 0 : i32
    return %c0_i32, %c0_i32_0 : i32, i32
  }
  func.func @transform_10(%arg0: i32) -> (i32, i32) {
    %c0_i32 = arith.constant 0 : i32
    %c0_i32_0 = arith.constant 0 : i32
    %c0_i32_1 = arith.constant 0 : i32
    return %c0_i32, %c0_i32_0 : i32, i32
  }
  func.func @transform_11(%arg0: i32) -> (i32, i32) {
    %c0_i32 = arith.constant 0 : i32
    %c0_i32_0 = arith.constant 0 : i32
    %c0_i32_1 = arith.constant 0 : i32
    return %c0_i32, %c0_i32_0 : i32, i32
  }
  func.func @transform_12(%arg0: i32) -> (i32, i32) {
    %c0_i32 = arith.constant 0 : i32
    %c0_i32_0 = arith.constant 0 : i32
    %c0_i32_1 = arith.constant 0 : i32
    return %c0_i32, %c0_i32_0 : i32, i32
  }
  func.func @transform_13(%arg0: i32) -> (i32, i32) {
    %c0_i32 = arith.constant 0 : i32
    %c0_i32_0 = arith.constant 0 : i32
    %c0_i32_1 = arith.constant 0 : i32
    return %c0_i32, %c0_i32_0 : i32, i32
  }
  func.func @transform_14(%arg0: i32) -> (i32, i32) {
    %c0_i32 = arith.constant 0 : i32
    %c0_i32_0 = arith.constant 0 : i32
    %c0_i32_1 = arith.constant 0 : i32
    return %c0_i32, %c0_i32_0 : i32, i32
  }
  func.func @transform_15(%arg0: i32) -> (i32, i32) {
    %c0_i32 = arith.constant 0 : i32
    %c0_i32_0 = arith.constant 0 : i32
    %c0_i32_1 = arith.constant 0 : i32
    return %c0_i32, %c0_i32_0 : i32, i32
  }
  func.func @transform_16(%arg0: i32) -> (i32, i32) {
    %c0_i32 = arith.constant 0 : i32
    %c0_i32_0 = arith.constant 0 : i32
    %c0_i32_1 = arith.constant 0 : i32
    return %c0_i32, %c0_i32_0 : i32, i32
  }
  func.func @transform_17(%arg0: i32) -> (i32, i32) {
    %c0_i32 = arith.constant 0 : i32
    %c0_i32_0 = arith.constant 0 : i32
    %c0_i32_1 = arith.constant 0 : i32
    return %c0_i32, %c0_i32_0 : i32, i32
  }
  func.func @transform_18(%arg0: i32) -> (i32, i32) {
    %c0_i32 = arith.constant 0 : i32
    %c0_i32_0 = arith.constant 0 : i32
    %c0_i32_1 = arith.constant 0 : i32
    return %c0_i32, %c0_i32_0 : i32, i32
  }
  func.func @transform_19(%arg0: i32) -> (i32, i32) {
    %c0_i32 = arith.constant 0 : i32
    %c0_i32_0 = arith.constant 0 : i32
    %c0_i32_1 = arith.constant 0 : i32
    return %c0_i32, %c0_i32_0 : i32, i32
  }
  func.func @transform_20(%arg0: i32) -> (i32, i32) {
    %c0_i32 = arith.constant 0 : i32
    %c0_i32_0 = arith.constant 0 : i32
    %c0_i32_1 = arith.constant 0 : i32
    return %c0_i32, %c0_i32_0 : i32, i32
  }
  func.func @transform_21(%arg0: i32) -> (i32, i32) {
    %c0_i32 = arith.constant 0 : i32
    %c0_i32_0 = arith.constant 0 : i32
    %c0_i32_1 = arith.constant 0 : i32
    return %c0_i32, %c0_i32_0 : i32, i32
  }
  func.func @transform_22(%arg0: i32) -> (i32, i32) {
    %c0_i32 = arith.constant 0 : i32
    %c0_i32_0 = arith.constant 0 : i32
    %c0_i32_1 = arith.constant 0 : i32
    return %c0_i32, %c0_i32_0 : i32, i32
  }
  func.func @transform_23(%arg0: i32) -> (i32, i32) {
    %c0_i32 = arith.constant 0 : i32
    %c0_i32_0 = arith.constant 0 : i32
    %c0_i32_1 = arith.constant 0 : i32
    return %c0_i32, %c0_i32_0 : i32, i32
  }
  func.func @transform_24(%arg0: i32) -> (i32, i32) {
    %c0_i32 = arith.constant 0 : i32
    %c0_i32_0 = arith.constant 0 : i32
    %c0_i32_1 = arith.constant 0 : i32
    return %c0_i32, %c0_i32_0 : i32, i32
  }
  func.func @transform_25(%arg0: i32) -> (i32, i32) {
    %c0_i32 = arith.constant 0 : i32
    %c0_i32_0 = arith.constant 0 : i32
    %c0_i32_1 = arith.constant 0 : i32
    return %c0_i32, %c0_i32_0 : i32, i32
  }
  func.func @transform_26(%arg0: i32) -> (i32, i32) {
    %c0_i32 = arith.constant 0 : i32
    %c0_i32_0 = arith.constant 0 : i32
    %c0_i32_1 = arith.constant 0 : i32
    return %c0_i32, %c0_i32_0 : i32, i32
  }
  func.func @transform_27(%arg0: i32) -> (i32, i32) {
    %c0_i32 = arith.constant 0 : i32
    %c0_i32_0 = arith.constant 0 : i32
    %c0_i32_1 = arith.constant 0 : i32
    return %c0_i32, %c0_i32_0 : i32, i32
  }
  func.func @transform_28(%arg0: i32) -> (i32, i32) {
    %c0_i32 = arith.constant 0 : i32
    %c0_i32_0 = arith.constant 0 : i32
    %c0_i32_1 = arith.constant 0 : i32
    return %c0_i32, %c0_i32_0 : i32, i32
  }
  func.func @transform_29(%arg0: i32) -> (i32, i32) {
    %c0_i32 = arith.constant 0 : i32
    %c0_i32_0 = arith.constant 0 : i32
    %c0_i32_1 = arith.constant 0 : i32
    return %c0_i32, %c0_i32_0 : i32, i32
  }
  func.func @transform_30(%arg0: i32) -> (i32, i32) {
    %c0_i32 = arith.constant 0 : i32
    %c0_i32_0 = arith.constant 0 : i32
    %c0_i32_1 = arith.constant 0 : i32
    return %c0_i32, %c0_i32_0 : i32, i32
  }
  func.func @transform_31(%arg0: i32) -> (i32, i32) {
    %c0_i32 = arith.constant 0 : i32
    %c0_i32_0 = arith.constant 0 : i32
    %c0_i32_1 = arith.constant 0 : i32
    return %c0_i32, %c0_i32_0 : i32, i32
  }
  func.func @transform_32(%arg0: i32) -> (i32, i32) {
    %c0_i32 = arith.constant 0 : i32
    %c0_i32_0 = arith.constant 0 : i32
    %c0_i32_1 = arith.constant 0 : i32
    return %c0_i32, %c0_i32_0 : i32, i32
  }
  func.func @transform_33(%arg0: i32) -> (i32, i32) {
    %c0_i32 = arith.constant 0 : i32
    %c0_i32_0 = arith.constant 0 : i32
    %c0_i32_1 = arith.constant 0 : i32
    return %c0_i32, %c0_i32_0 : i32, i32
  }
  func.func @transform_34(%arg0: i32) -> (i32, i32) {
    %c0_i32 = arith.constant 0 : i32
    %c0_i32_0 = arith.constant 0 : i32
    %c0_i32_1 = arith.constant 0 : i32
    return %c0_i32, %c0_i32_0 : i32, i32
  }
  func.func @transform_35(%arg0: i32) -> (i32, i32) {
    %c0_i32 = arith.constant 0 : i32
    %c0_i32_0 = arith.constant 0 : i32
    %c0_i32_1 = arith.constant 0 : i32
    return %c0_i32, %c0_i32_0 : i32, i32
  }
  func.func @transform_36(%arg0: i32) -> (i32, i32) {
    %c0_i32 = arith.constant 0 : i32
    %c0_i32_0 = arith.constant 0 : i32
    %c0_i32_1 = arith.constant 0 : i32
    return %c0_i32, %c0_i32_0 : i32, i32
  }
  func.func @transform_37(%arg0: i32) -> (i32, i32) {
    %c0_i32 = arith.constant 0 : i32
    %c0_i32_0 = arith.constant 0 : i32
    %c0_i32_1 = arith.constant 0 : i32
    return %c0_i32, %c0_i32_0 : i32, i32
  }
  func.func @transform_38(%arg0: i32) -> (i32, i32) {
    %c0_i32 = arith.constant 0 : i32
    %c0_i32_0 = arith.constant 0 : i32
    %c0_i32_1 = arith.constant 0 : i32
    return %c0_i32, %c0_i32_0 : i32, i32
  }
  func.func @transform_39(%arg0: i32) -> (i32, i32) {
    %c0_i32 = arith.constant 0 : i32
    %c0_i32_0 = arith.constant 0 : i32
    %c0_i32_1 = arith.constant 0 : i32
    return %c0_i32, %c0_i32_0 : i32, i32
  }
  func.func @transform_40(%arg0: i32) -> (i32, i32) {
    %c0_i32 = arith.constant 0 : i32
    %c0_i32_0 = arith.constant 0 : i32
    %c0_i32_1 = arith.constant 0 : i32
    return %c0_i32, %c0_i32_0 : i32, i32
  }
  func.func @transform_41(%arg0: i32) -> (i32, i32) {
    %c0_i32 = arith.constant 0 : i32
    %c0_i32_0 = arith.constant 0 : i32
    %c0_i32_1 = arith.constant 0 : i32
    return %c0_i32, %c0_i32_0 : i32, i32
  }
  func.func @transform_42(%arg0: i32) -> (i32, i32) {
    %c0_i32 = arith.constant 0 : i32
    %c0_i32_0 = arith.constant 0 : i32
    %c0_i32_1 = arith.constant 0 : i32
    return %c0_i32, %c0_i32_0 : i32, i32
  }
  func.func @transform_43(%arg0: i32) -> (i32, i32) {
    %c0_i32 = arith.constant 0 : i32
    %c0_i32_0 = arith.constant 0 : i32
    %c0_i32_1 = arith.constant 0 : i32
    return %c0_i32, %c0_i32_0 : i32, i32
  }
  func.func @transform_44(%arg0: i32) -> (i32, i32) {
    %c0_i32 = arith.constant 0 : i32
    %c0_i32_0 = arith.constant 0 : i32
    %c0_i32_1 = arith.constant 0 : i32
    return %c0_i32, %c0_i32_0 : i32, i32
  }
  func.func @transform_45(%arg0: i32) -> (i32, i32) {
    %c0_i32 = arith.constant 0 : i32
    %c0_i32_0 = arith.constant 0 : i32
    %c0_i32_1 = arith.constant 0 : i32
    return %c0_i32, %c0_i32_0 : i32, i32
  }
  func.func @transform_46(%arg0: i32) -> (i32, i32) {
    %c0_i32 = arith.constant 0 : i32
    %c0_i32_0 = arith.constant 0 : i32
    %c0_i32_1 = arith.constant 0 : i32
    return %c0_i32, %c0_i32_0 : i32, i32
  }
  func.func @transform_47(%arg0: i32) -> (i32, i32) {
    %c0_i32 = arith.constant 0 : i32
    %c0_i32_0 = arith.constant 0 : i32
    %c0_i32_1 = arith.constant 0 : i32
    return %c0_i32, %c0_i32_0 : i32, i32
  }
  func.func @transform_48(%arg0: i32) -> (i32, i32) {
    %c0_i32 = arith.constant 0 : i32
    %c0_i32_0 = arith.constant 0 : i32
    %c0_i32_1 = arith.constant 0 : i32
    return %c0_i32, %c0_i32_0 : i32, i32
  }
  func.func @transform_49(%arg0: i32) -> (i32, i32) {
    %c0_i32 = arith.constant 0 : i32
    %c0_i32_0 = arith.constant 0 : i32
    return %arg0, %c0_i32 : i32, i32
  }
}

</mosaic_0001>

<llo_original>
// kernel: tpu_custom_call.1
$region0: #{tpu_custom_call.1}
  #allocation0 [shape = 'u32[]', space=smem, size = 0x4, offset = 0x4, fixed_abs, tag = 'smem constant byte address 0x4 - core index']
  #allocation1 [shape = 'u32[144,128]{1,0:T(1,128)}', space=vmem, size = 0x12000, scoped, tag = 'internal scratch']
  #allocation2 [shape = 'f32[1,1]{1,0:T(1,128)S(1)}', space=vmem, size = 0x200, scoped, tag = 'scoped memory for tpu_custom_call.1']
  %s0 = inlined_call_operand.smem [shape: u32[50], index: -1, kind: input, shape index: {}]
  %s1 = sld [smem:[%s0]]
  %s2 = scalar_lea.smem %s0, 1
  %s3 = sld [smem:[%s2]]
  %s4 = scalar_lea.smem %s0, 2
  %s5 = sld [smem:[%s4]]
  %s6 = scalar_lea.smem %s0, 3
  %s7 = sld [smem:[%s6]]
  %s8 = scalar_lea.smem %s0, 4
  %s9 = sld [smem:[%s8]]
  %s10 = scalar_lea.smem %s0, 5
  %s11 = sld [smem:[%s10]]
  %s12 = scalar_lea.smem %s0, 6
  %s13 = sld [smem:[%s12]]
  %s14 = scalar_lea.smem %s0, 7
  %s15 = sld [smem:[%s14]]
  %s16 = scalar_lea.smem %s0, 8
  %s17 = sld [smem:[%s16]]
  %s18 = scalar_lea.smem %s0, 9
  %s19 = sld [smem:[%s18]]
  %s20 = scalar_lea.smem %s0, 10
  %s21 = sld [smem:[%s20]]
  %s22 = scalar_lea.smem %s0, 11
  %s23 = sld [smem:[%s22]]
  %s24 = scalar_lea.smem %s0, 12
  %s25 = sld [smem:[%s24]]
  %s26 = scalar_lea.smem %s0, 13
  %s27 = sld [smem:[%s26]]
  %s28 = scalar_lea.smem %s0, 14
  %s29 = sld [smem:[%s28]]
  %s30 = scalar_lea.smem %s0, 15
  %s31 = sld [smem:[%s30]]
  %s32 = scalar_lea.smem %s0, 16
  %s33 = sld [smem:[%s32]]
  %s34 = scalar_lea.smem %s0, 17
  %s35 = sld [smem:[%s34]]
  %s36 = scalar_lea.smem %s0, 18
  %s37 = sld [smem:[%s36]]
  %s38 = scalar_lea.smem %s0, 19
  %s39 = sld [smem:[%s38]]
  %s40 = scalar_lea.smem %s0, 20
  %s41 = sld [smem:[%s40]]
  %s42 = scalar_lea.smem %s0, 21
  %s43 = sld [smem:[%s42]]
  %s44 = scalar_lea.smem %s0, 22
  %s45 = sld [smem:[%s44]]
  %s46 = scalar_lea.smem %s0, 23
  %s47 = sld [smem:[%s46]]
  %s48 = scalar_lea.smem %s0, 24
  %s49 = sld [smem:[%s48]]
  %s50 = scalar_lea.smem %s0, 25
  %s51 = sld [smem:[%s50]]
  %s52 = scalar_lea.smem %s0, 26
  %s53 = sld [smem:[%s52]]
  %s54 = scalar_lea.smem %s0, 27
  %s55 = sld [smem:[%s54]]
  %s56 = scalar_lea.smem %s0, 28
  %s57 = sld [smem:[%s56]]
  %s58 = scalar_lea.smem %s0, 29
  %s59 = sld [smem:[%s58]]
  %s60 = scalar_lea.smem %s0, 30
  %s61 = sld [smem:[%s60]]
  %s62 = scalar_lea.smem %s0, 31
  %s63 = sld [smem:[%s62]]
  %s64 = scalar_lea.smem %s0, 32
  %s65 = sld [smem:[%s64]]
  %s66 = scalar_lea.smem %s0, 33
  %s67 = sld [smem:[%s66]]
  %s68 = scalar_lea.smem %s0, 34
  %s69 = sld [smem:[%s68]]
  %s70 = scalar_lea.smem %s0, 35
  %s71 = sld [smem:[%s70]]
  %s72 = scalar_lea.smem %s0, 36
  %s73 = sld [smem:[%s72]]
  %s74 = scalar_lea.smem %s0, 37
  %s75 = sld [smem:[%s74]]
  %s76 = scalar_lea.smem %s0, 38
  %s77 = sld [smem:[%s76]]
  %s78 = scalar_lea.smem %s0, 39
  %s79 = sld [smem:[%s78]]
  %s80 = scalar_lea.smem %s0, 40
  %s81 = sld [smem:[%s80]]
  %s82 = scalar_lea.smem %s0, 41
  %s83 = sld [smem:[%s82]]
  %s84 = scalar_lea.smem %s0, 42
  %s85 = sld [smem:[%s84]]
  %s86 = scalar_lea.smem %s0, 43
  %s87 = sld [smem:[%s86]]
  %s88 = scalar_lea.smem %s0, 44
  %s89 = sld [smem:[%s88]]
  %s90 = scalar_lea.smem %s0, 45
  %s91 = sld [smem:[%s90]]
  %s92 = scalar_lea.smem %s0, 46
  %s93 = sld [smem:[%s92]]
  %s94 = scalar_lea.smem %s0, 47
  %s95 = sld [smem:[%s94]]
  %s96 = scalar_lea.smem %s0, 48
  %s97 = sld [smem:[%s96]]
  %s98 = scalar_lea.smem %s0, 49
  %s99 = sld [smem:[%s98]]
  %s100 = sld [smem:[#allocation0]]
  $region294: #{tpu_custom_call.1} parent=0
    _
  %s102 = ssub.s32 1, %s100
  %s103 = scalar_select 0, %s102, %s100
  %v104 = vstv %s97
  %105 = vst [vmem:[#allocation2] sm:$0x1] %v104
  $region1: #{tpu_custom_call.1} parent=0
    #allocation3 [shape = 'u8[12288]{0}', space=vmem, size = 0x3000, scoped, tag = 'input window, operand 0, single buffered']
    #allocation4 [shape = 's32[1]{0}', space=sflag, size = 0x4, scoped, tag = 'scoped memory for tpu_custom_call.1']
    #allocation5 [shape = 's32[1]{0}', space=sflag, size = 0x4, scoped, tag = 'scoped memory for tpu_custom_call.1']
    #allocation6 [shape = 'u8[12288]{0}', space=vmem, size = 0x3000, scoped, tag = 'input window, operand 1, single buffered']
    #allocation7 [shape = 's32[1]{0}', space=sflag, size = 0x4, scoped, tag = 'scoped memory for tpu_custom_call.1']
    #allocation8 [shape = 'u8[12288]{0}', space=vmem, size = 0x3000, scoped, tag = 'input window, operand 3, single buffered']
    #allocation9 [shape = 'u8[512]{0}', space=vmem, size = 0x400, scoped, tag = 'input window, operand 5, single buffered']
    #allocation10 [shape = 's32[1]{0}', space=sflag, size = 0x4, scoped, tag = 'scoped memory for tpu_custom_call.1']
    #allocation11 [shape = 'u8[8192]{0}', space=vmem, size = 0x2000, scoped, tag = 'input window, operand 6, single buffered']
    #allocation12 [shape = 'u8[8192]{0}', space=vmem, size = 0x2000, scoped, tag = 'input window, operand 7, single buffered']
    #allocation13 [shape = 's32[1]{0}', space=sflag, size = 0x4, scoped, tag = 'scoped memory for tpu_custom_call.1']
    #allocation14 [shape = 'u8[8192]{0}', space=vmem, size = 0x2000, scoped, tag = 'input window, operand 8, single buffered']
    #allocation15 [shape = 'u8[8192]{0}', space=vmem, size = 0x2000, scoped, tag = 'input window, operand 9, single buffered']
    #allocation16 [shape = 's32[1]{0}', space=sflag, size = 0x4, scoped, tag = 'scoped memory for tpu_custom_call.1']
    #allocation17 [shape = 'u8[8192]{0}', space=vmem, size = 0x2000, scoped, tag = 'input window, operand 10, single buffered']
    #allocation18 [shape = 'u8[8192]{0}', space=vmem, size = 0x2000, scoped, tag = 'input window, operand 11, single buffered']
    #allocation19 [shape = 's32[1]{0}', space=sflag, size = 0x4, scoped, tag = 'scoped memory for tpu_custom_call.1']
    #allocation20 [shape = 'u8[512]{0}', space=vmem, size = 0x400, scoped, tag = 'input window, operand 12, single buffered']
    #allocation21 [shape = 'u8[512]{0}', space=vmem, size = 0x400, scoped, tag = 'input window, operand 13, single buffered']
    #allocation22 [shape = 's32[1]{0}', space=sflag, size = 0x4, scoped, tag = 'scoped memory for tpu_custom_call.1']
    #allocation23 [shape = 'u8[512]{0}', space=vmem, size = 0x400, scoped, tag = 'input window, operand 14, single buffered']
    #allocation24 [shape = 'u8[512]{0}', space=vmem, size = 0x400, scoped, tag = 'input window, operand 15, single buffered']
    #allocation25 [shape = 's32[1]{0}', space=sflag, size = 0x4, scoped, tag = 'scoped memory for tpu_custom_call.1']
    #allocation26 [shape = 'u8[512]{0}', space=vmem, size = 0x400, scoped, tag = 'input window, operand 16, single buffered']
    #allocation27 [shape = 'u8[512]{0}', space=vmem, size = 0x400, scoped, tag = 'input window, operand 17, single buffered']
    #allocation28 [shape = 's32[1]{0}', space=sflag, size = 0x4, scoped, tag = 'scoped memory for tpu_custom_call.1']
    #allocation29 [shape = 'u8[512]{0}', space=vmem, size = 0x400, scoped, tag = 'input window, operand 19, single buffered']
    #allocation30 [shape = 'u8[512]{0}', space=vmem, size = 0x400, scoped, tag = 'input window, operand 20, single buffered']
    #allocation31 [shape = 's32[1]{0}', space=sflag, size = 0x4, scoped, tag = 'scoped memory for tpu_custom_call.1']
    #allocation32 [shape = 'u8[512]{0}', space=vmem, size = 0x400, scoped, tag = 'input window, operand 21, single buffered']
    #allocation33 [shape = 'u8[512]{0}', space=vmem, size = 0x400, scoped, tag = 'input window, operand 22, single buffered']
    #allocation34 [shape = 's32[1]{0}', space=sflag, size = 0x4, scoped, tag = 'scoped memory for tpu_custom_call.1']
    #allocation35 [shape = 'u8[4096]{0}', space=vmem, size = 0x1000, scoped, tag = 'input window, operand 24, single buffered']
    #allocation36 [shape = 'u8[12288]{0}', space=vmem, size = 0x3000, scoped, tag = 'input window, operand 25, single buffered']
    #allocation37 [shape = 's32[1]{0}', space=sflag, size = 0x4, scoped, tag = 'scoped memory for tpu_custom_call.1']
    #allocation38 [shape = 'u8[12288]{0}', space=vmem, size = 0x3000, scoped, tag = 'output window, operand 0, single buffered']
    %106 = vsyncpa [#allocation4], 0
    %107 = vsyncpa [#allocation7], 0
    %108 = vsyncpa [#allocation10], 0
    %109 = vsyncpa [#allocation13], 0
    %110 = vsyncpa [#allocation16], 0
    %111 = vsyncpa [#allocation19], 0
    %112 = vsyncpa [#allocation22], 0
    %113 = vsyncpa [#allocation25], 0
    %114 = vsyncpa [#allocation28], 0
    %115 = vsyncpa [#allocation31], 0
    %116 = vsyncpa [#allocation34], 0
    %117 = vsyncpa [#allocation37], 0
    %118 = vsyncpa [#allocation5], 0
    // Predicated region
    $region2: #{tpu_custom_call.1} parent=1 // pred_check
      _
    $region3: #{tpu_custom_call.1} parent=1 // pred_check_branch
      %120 = sbr.rel (0) target = $region5
    $region4: #{tpu_custom_call.1} parent=1 // pred_region
      %s122 = ssub.s32 384, 384
      %123 = vsyncadd [#allocation4], %s122
      %s124 = sshll.u32 [#allocation3], 4
      %s125 = int_to_ptr.vmem [resolvable:$true] %s124
      %130 = dma.hbm_to_vmem [thread:$0]  %s1, 384, %s125, [#allocation4], 128, 128, 8
    $region5: #{tpu_custom_call.1} parent=1 // pred_fallthru
      _
    // Predicated region
    $region6: #{tpu_custom_call.1} parent=1 // pred_check
      _
    $region7: #{tpu_custom_call.1} parent=1 // pred_check_branch
      %132 = sbr.rel (0) target = $region9
    $region8: #{tpu_custom_call.1} parent=1 // pred_region
      %s134 = ssub.s32 384, 384
      %135 = vsyncadd [#allocation7], %s134
      %s136 = sshll.u32 [#allocation6], 4
      %s137 = int_to_ptr.vmem [resolvable:$true] %s136
      %142 = dma.hbm_to_vmem [thread:$0]  %s3, 384, %s137, [#allocation7], 128, 128, 8
    $region9: #{tpu_custom_call.1} parent=1 // pred_fallthru
      _
    // Predicated region
    $region10: #{tpu_custom_call.1} parent=1 // pred_check
      _
    $region11: #{tpu_custom_call.1} parent=1 // pred_check_branch
      %144 = sbr.rel (0) target = $region13
    $region12: #{tpu_custom_call.1} parent=1 // pred_region
      _
    $region13: #{tpu_custom_call.1} parent=1 // pred_fallthru
      _
    // Predicated region
    $region14: #{tpu_custom_call.1} parent=1 // pred_check
      _
    $region15: #{tpu_custom_call.1} parent=1 // pred_check_branch
      %146 = sbr.rel (0) target = $region17
    $region16: #{tpu_custom_call.1} parent=1 // pred_region
      %s148 = ssub.s32 384, 384
      %149 = vsyncadd [#allocation7], %s148
      %s150 = sshll.u32 [#allocation8], 4
      %s151 = int_to_ptr.vmem [resolvable:$true] %s150
      %156 = dma.hbm_to_vmem [thread:$0]  %s7, 384, %s151, [#allocation7], 128, 128, 8
    $region17: #{tpu_custom_call.1} parent=1 // pred_fallthru
      _
    // Predicated region
    $region18: #{tpu_custom_call.1} parent=1 // pred_check
      _
    $region19: #{tpu_custom_call.1} parent=1 // pred_check_branch
      %158 = sbr.rel (0) target = $region21
    $region20: #{tpu_custom_call.1} parent=1 // pred_region
      _
    $region21: #{tpu_custom_call.1} parent=1 // pred_fallthru
      _
    // Predicated region
    $region22: #{tpu_custom_call.1} parent=1 // pred_check
      _
    $region23: #{tpu_custom_call.1} parent=1 // pred_check_branch
      %160 = sbr.rel (0) target = $region25
    $region24: #{tpu_custom_call.1} parent=1 // pred_region
      %s162 = ssub.s32 16, 16
      %163 = vsyncadd [#allocation10], %s162
      %s165 = sshll.u32 [#allocation9], 4
      %s166 = int_to_ptr.vmem [resolvable:$true] %s165
      %168 = dma.hbm_to_vmem [thread:$0]  %s11, 16, %s166, [#allocation10]
    $region25: #{tpu_custom_call.1} parent=1 // pred_fallthru
      _
    // Predicated region
    $region26: #{tpu_custom_call.1} parent=1 // pred_check
      _
    $region27: #{tpu_custom_call.1} parent=1 // pred_check_branch
      %170 = sbr.rel (0) target = $region29
    $region28: #{tpu_custom_call.1} parent=1 // pred_region
      %s172 = ssub.s32 256, 256
      %173 = vsyncadd [#allocation10], %s172
      %s174 = sshll.u32 [#allocation11], 4
      %s175 = int_to_ptr.vmem [resolvable:$true] %s174
      %180 = dma.hbm_to_vmem [thread:$0]  %s13, 256, %s175, [#allocation10], 128, 128, 8
    $region29: #{tpu_custom_call.1} parent=1 // pred_fallthru
      _
    // Predicated region
    $region30: #{tpu_custom_call.1} parent=1 // pred_check
      _
    $region31: #{tpu_custom_call.1} parent=1 // pred_check_branch
      %182 = sbr.rel (0) target = $region33
    $region32: #{tpu_custom_call.1} parent=1 // pred_region
      %s184 = ssub.s32 256, 256
      %185 = vsyncadd [#allocation13], %s184
      %s186 = sshll.u32 [#allocation12], 4
      %s187 = int_to_ptr.vmem [resolvable:$true] %s186
      %192 = dma.hbm_to_vmem [thread:$0]  %s15, 256, %s187, [#allocation13], 128, 128, 8
    $region33: #{tpu_custom_call.1} parent=1 // pred_fallthru
      _
    // Predicated region
    $region34: #{tpu_custom_call.1} parent=1 // pred_check
      _
    $region35: #{tpu_custom_call.1} parent=1 // pred_check_branch
      %194 = sbr.rel (0) target = $region37
    $region36: #{tpu_custom_call.1} parent=1 // pred_region
      %s196 = ssub.s32 256, 256
      %197 = vsyncadd [#allocation13], %s196
      %s198 = sshll.u32 [#allocation14], 4
      %s199 = int_to_ptr.vmem [resolvable:$true] %s198
      %204 = dma.hbm_to_vmem [thread:$0]  %s17, 256, %s199, [#allocation13], 128, 128, 8
    $region37: #{tpu_custom_call.1} parent=1 // pred_fallthru
      _
    // Predicated region
    $region38: #{tpu_custom_call.1} parent=1 // pred_check
      _
    $region39: #{tpu_custom_call.1} parent=1 // pred_check_branch
      %206 = sbr.rel (0) target = $region41
    $region40: #{tpu_custom_call.1} parent=1 // pred_region
      %s208 = ssub.s32 256, 256
      %209 = vsyncadd [#allocation16], %s208
      %s210 = sshll.u32 [#allocation15], 4
      %s211 = int_to_ptr.vmem [resolvable:$true] %s210
      %216 = dma.hbm_to_vmem [thread:$0]  %s19, 256, %s211, [#allocation16], 128, 128, 8
    $region41: #{tpu_custom_call.1} parent=1 // pred_fallthru
      _
    // Predicated region
    $region42: #{tpu_custom_call.1} parent=1 // pred_check
      _
    $region43: #{tpu_custom_call.1} parent=1 // pred_check_branch
      %218 = sbr.rel (0) target = $region45
    $region44: #{tpu_custom_call.1} parent=1 // pred_region
      %s220 = ssub.s32 256, 256
      %221 = vsyncadd [#allocation16], %s220
      %s222 = sshll.u32 [#allocation17], 4
      %s223 = int_to_ptr.vmem [resolvable:$true] %s222
      %228 = dma.hbm_to_vmem [thread:$0]  %s21, 256, %s223, [#allocation16], 128, 128, 8
    $region45: #{tpu_custom_call.1} parent=1 // pred_fallthru
      _
    // Predicated region
    $region46: #{tpu_custom_call.1} parent=1 // pred_check
      _
    $region47: #{tpu_custom_call.1} parent=1 // pred_check_branch
      %230 = sbr.rel (0) target = $region49
    $region48: #{tpu_custom_call.1} parent=1 // pred_region
      %s232 = ssub.s32 256, 256
      %233 = vsyncadd [#allocation19], %s232
      %s234 = sshll.u32 [#allocation18], 4
      %s235 = int_to_ptr.vmem [resolvable:$true] %s234
      %240 = dma.hbm_to_vmem [thread:$0]  %s23, 256, %s235, [#allocation19], 128, 128, 8
    $region49: #{tpu_custom_call.1} parent=1 // pred_fallthru
      _
    // Predicated region
    $region50: #{tpu_custom_call.1} parent=1 // pred_check
      _
    $region51: #{tpu_custom_call.1} parent=1 // pred_check_branch
      %242 = sbr.rel (0) target = $region53
    $region52: #{tpu_custom_call.1} parent=1 // pred_region
      %s244 = ssub.s32 16, 16
      %245 = vsyncadd [#allocation19], %s244
      %s247 = sshll.u32 [#allocation20], 4
      %s248 = int_to_ptr.vmem [resolvable:$true] %s247
      %250 = dma.hbm_to_vmem [thread:$0]  %s25, 16, %s248, [#allocation19]
    $region53: #{tpu_custom_call.1} parent=1 // pred_fallthru
      _
    // Predicated region
    $region54: #{tpu_custom_call.1} parent=1 // pred_check
      _
    $region55: #{tpu_custom_call.1} parent=1 // pred_check_branch
      %252 = sbr.rel (0) target = $region57
    $region56: #{tpu_custom_call.1} parent=1 // pred_region
      %s254 = ssub.s32 16, 16
      %255 = vsyncadd [#allocation22], %s254
      %s257 = sshll.u32 [#allocation21], 4
      %s258 = int_to_ptr.vmem [resolvable:$true] %s257
      %260 = dma.hbm_to_vmem [thread:$0]  %s27, 16, %s258, [#allocation22]
    $region57: #{tpu_custom_call.1} parent=1 // pred_fallthru
      _
    // Predicated region
    $region58: #{tpu_custom_call.1} parent=1 // pred_check
      _
    $region59: #{tpu_custom_call.1} parent=1 // pred_check_branch
      %262 = sbr.rel (0) target = $region61
    $region60: #{tpu_custom_call.1} parent=1 // pred_region
      %s264 = ssub.s32 16, 16
      %265 = vsyncadd [#allocation22], %s264
      %s267 = sshll.u32 [#allocation23], 4
      %s268 = int_to_ptr.vmem [resolvable:$true] %s267
      %270 = dma.hbm_to_vmem [thread:$0]  %s29, 16, %s268, [#allocation22]
    $region61: #{tpu_custom_call.1} parent=1 // pred_fallthru
      _
    // Predicated region
    $region62: #{tpu_custom_call.1} parent=1 // pred_check
      _
    $region63: #{tpu_custom_call.1} parent=1 // pred_check_branch
      %272 = sbr.rel (0) target = $region65
    $region64: #{tpu_custom_call.1} parent=1 // pred_region
      %s274 = ssub.s32 16, 16
      %275 = vsyncadd [#allocation25], %s274
      %s277 = sshll.u32 [#allocation24], 4
      %s278 = int_to_ptr.vmem [resolvable:$true] %s277
      %280 = dma.hbm_to_vmem [thread:$0]  %s31, 16, %s278, [#allocation25]
    $region65: #{tpu_custom_call.1} parent=1 // pred_fallthru
      _
    // Predicated region
    $region66: #{tpu_custom_call.1} parent=1 // pred_check
      _
    $region67: #{tpu_custom_call.1} parent=1 // pred_check_branch
      %282 = sbr.rel (0) target = $region69
    $region68: #{tpu_custom_call.1} parent=1 // pred_region
      %s284 = ssub.s32 16, 16
      %285 = vsyncadd [#allocation25], %s284
      %s287 = sshll.u32 [#allocation26], 4
      %s288 = int_to_ptr.vmem [resolvable:$true] %s287
      %290 = dma.hbm_to_vmem [thread:$0]  %s33, 16, %s288, [#allocation25]
    $region69: #{tpu_custom_call.1} parent=1 // pred_fallthru
      _
    // Predicated region
    $region70: #{tpu_custom_call.1} parent=1 // pred_check
      _
    $region71: #{tpu_custom_call.1} parent=1 // pred_check_branch
      %292 = sbr.rel (0) target = $region73
    $region72: #{tpu_custom_call.1} parent=1 // pred_region
      %s294 = ssub.s32 16, 16
      %295 = vsyncadd [#allocation28], %s294
      %s297 = sshll.u32 [#allocation27], 4
      %s298 = int_to_ptr.vmem [resolvable:$true] %s297
      %300 = dma.hbm_to_vmem [thread:$0]  %s35, 16, %s298, [#allocation28]
    $region73: #{tpu_custom_call.1} parent=1 // pred_fallthru
      _
    // Predicated region
    $region74: #{tpu_custom_call.1} parent=1 // pred_check
      _
    $region75: #{tpu_custom_call.1} parent=1 // pred_check_branch
      %302 = sbr.rel (0) target = $region77
    $region76: #{tpu_custom_call.1} parent=1 // pred_region
      _
    $region77: #{tpu_custom_call.1} parent=1 // pred_fallthru
      _
    // Predicated region
    $region78: #{tpu_custom_call.1} parent=1 // pred_check
      _
    $region79: #{tpu_custom_call.1} parent=1 // pred_check_branch
      %304 = sbr.rel (0) target = $region81
    $region80: #{tpu_custom_call.1} parent=1 // pred_region
      %s306 = ssub.s32 16, 16
      %307 = vsyncadd [#allocation28], %s306
      %s309 = sshll.u32 [#allocation29], 4
      %s310 = int_to_ptr.vmem [resolvable:$true] %s309
      %312 = dma.hbm_to_vmem [thread:$0]  %s39, 16, %s310, [#allocation28]
    $region81: #{tpu_custom_call.1} parent=1 // pred_fallthru
      _
    // Predicated region
    $region82: #{tpu_custom_call.1} parent=1 // pred_check
      _
    $region83: #{tpu_custom_call.1} parent=1 // pred_check_branch
      %314 = sbr.rel (0) target = $region85
    $region84: #{tpu_custom_call.1} parent=1 // pred_region
      %s316 = ssub.s32 16, 16
      %317 = vsyncadd [#allocation31], %s316
      %s319 = sshll.u32 [#allocation30], 4
      %s320 = int_to_ptr.vmem [resolvable:$true] %s319
      %322 = dma.hbm_to_vmem [thread:$0]  %s41, 16, %s320, [#allocation31]
    $region85: #{tpu_custom_call.1} parent=1 // pred_fallthru
      _
    // Predicated region
    $region86: #{tpu_custom_call.1} parent=1 // pred_check
      _
    $region87: #{tpu_custom_call.1} parent=1 // pred_check_branch
      %324 = sbr.rel (0) target = $region89
    $region88: #{tpu_custom_call.1} parent=1 // pred_region
      %s326 = ssub.s32 16, 16
      %327 = vsyncadd [#allocation31], %s326
      %s329 = sshll.u32 [#allocation32], 4
      %s330 = int_to_ptr.vmem [resolvable:$true] %s329
      %332 = dma.hbm_to_vmem [thread:$0]  %s43, 16, %s330, [#allocation31]
    $region89: #{tpu_custom_call.1} parent=1 // pred_fallthru
      _
    // Predicated region
    $region90: #{tpu_custom_call.1} parent=1 // pred_check
      _
    $region91: #{tpu_custom_call.1} parent=1 // pred_check_branch
      %334 = sbr.rel (0) target = $region93
    $region92: #{tpu_custom_call.1} parent=1 // pred_region
      %s336 = ssub.s32 16, 16
      %337 = vsyncadd [#allocation34], %s336
      %s339 = sshll.u32 [#allocation33], 4
      %s340 = int_to_ptr.vmem [resolvable:$true] %s339
      %342 = dma.hbm_to_vmem [thread:$0]  %s45, 16, %s340, [#allocation34]
    $region93: #{tpu_custom_call.1} parent=1 // pred_fallthru
      _
    // Predicated region
    $region94: #{tpu_custom_call.1} parent=1 // pred_check
      _
    $region95: #{tpu_custom_call.1} parent=1 // pred_check_branch
      %344 = sbr.rel (0) target = $region97
    $region96: #{tpu_custom_call.1} parent=1 // pred_region
      _
    $region97: #{tpu_custom_call.1} parent=1 // pred_fallthru
      _
    // Predicated region
    $region98: #{tpu_custom_call.1} parent=1 // pred_check
      _
    $region99: #{tpu_custom_call.1} parent=1 // pred_check_branch
      %346 = sbr.rel (0) target = $region101
    $region100: #{tpu_custom_call.1} parent=1 // pred_region
      %s348 = ssub.s32 128, 128
      %349 = vsyncadd [#allocation34], %s348
      %s351 = sshll.u32 [#allocation35], 4
      %s352 = int_to_ptr.vmem [resolvable:$true] %s351
      %354 = dma.hbm_to_vmem [thread:$0]  %s49, 128, %s352, [#allocation34]
    $region101: #{tpu_custom_call.1} parent=1 // pred_fallthru
      _
    // Predicated region
    $region102: #{tpu_custom_call.1} parent=1 // pred_check
      _
    $region103: #{tpu_custom_call.1} parent=1 // pred_check_branch
      %356 = sbr.rel (0) target = $region105
    $region104: #{tpu_custom_call.1} parent=1 // pred_region
      %s358 = ssub.s32 384, 384
      %359 = vsyncadd [#allocation37], %s358
      %s360 = sshll.u32 [#allocation36], 4
      %s361 = int_to_ptr.vmem [resolvable:$true] %s360
      %366 = dma.hbm_to_vmem [thread:$0]  %s51, 384, %s361, [#allocation37], 128, 128, 8
    $region105: #{tpu_custom_call.1} parent=1 // pred_fallthru
      _
    // Predicated region
    $region106: #{tpu_custom_call.1} parent=1 // pred_check
      _
    $region107: #{tpu_custom_call.1} parent=1 // pred_check_branch
      %368 = sbr.rel (0) target = $region109
    $region108: #{tpu_custom_call.1} parent=1 // pred_region
      _
    $region109: #{tpu_custom_call.1} parent=1 // pred_fallthru
      _
    // Predicated region
    $region110: #{tpu_custom_call.1} parent=1 // pred_check
      _
    $region111: #{tpu_custom_call.1} parent=1 // pred_check_branch
      %370 = sbr.rel (0) target = $region113
    $region112: #{tpu_custom_call.1} parent=1 // pred_region
      _
    $region113: #{tpu_custom_call.1} parent=1 // pred_fallthru
      _
    // Predicated region
    $region114: #{tpu_custom_call.1} parent=1 // pred_check
      _
    $region115: #{tpu_custom_call.1} parent=1 // pred_check_branch
      %372 = sbr.rel (0) target = $region117
    $region116: #{tpu_custom_call.1} parent=1 // pred_region
      _
    $region117: #{tpu_custom_call.1} parent=1 // pred_fallthru
      _
    // Predicated region
    $region118: #{tpu_custom_call.1} parent=1 // pred_check
      _
    $region119: #{tpu_custom_call.1} parent=1 // pred_check_branch
      %374 = sbr.rel (0) target = $region121
    $region120: #{tpu_custom_call.1} parent=1 // pred_region
      _
    $region121: #{tpu_custom_call.1} parent=1 // pred_fallthru
      _
    // Predicated region
    $region122: #{tpu_custom_call.1} parent=1 // pred_check
      _
    $region123: #{tpu_custom_call.1} parent=1 // pred_check_branch
      %376 = sbr.rel (0) target = $region125
    $region124: #{tpu_custom_call.1} parent=1 // pred_region
      _
    $region125: #{tpu_custom_call.1} parent=1 // pred_fallthru
      _
    // Predicated region
    $region126: #{tpu_custom_call.1} parent=1 // pred_check
      _
    $region127: #{tpu_custom_call.1} parent=1 // pred_check_branch
      %378 = sbr.rel (0) target = $region129
    $region128: #{tpu_custom_call.1} parent=1 // pred_region
      _
    $region129: #{tpu_custom_call.1} parent=1 // pred_fallthru
      _
    // Predicated region
    $region130: #{tpu_custom_call.1} parent=1 // pred_check
      _
    $region131: #{tpu_custom_call.1} parent=1 // pred_check_branch
      %380 = sbr.rel (0) target = $region133
    $region132: #{tpu_custom_call.1} parent=1 // pred_region
      _
    $region133: #{tpu_custom_call.1} parent=1 // pred_fallthru
      _
    // Predicated region
    $region134: #{tpu_custom_call.1} parent=1 // pred_check
      _
    $region135: #{tpu_custom_call.1} parent=1 // pred_check_branch
      %382 = sbr.rel (0) target = $region137
    $region136: #{tpu_custom_call.1} parent=1 // pred_region
      _
    $region137: #{tpu_custom_call.1} parent=1 // pred_fallthru
      _
    // Predicated region
    $region138: #{tpu_custom_call.1} parent=1 // pred_check
      _
    $region139: #{tpu_custom_call.1} parent=1 // pred_check_branch
      %384 = sbr.rel (0) target = $region141
    $region140: #{tpu_custom_call.1} parent=1 // pred_region
      _
    $region141: #{tpu_custom_call.1} parent=1 // pred_fallthru
      _
    // Predicated region
    $region142: #{tpu_custom_call.1} parent=1 // pred_check
      _
    $region143: #{tpu_custom_call.1} parent=1 // pred_check_branch
      %386 = sbr.rel (0) target = $region145
    $region144: #{tpu_custom_call.1} parent=1 // pred_region
      _
    $region145: #{tpu_custom_call.1} parent=1 // pred_fallthru
      _
    // Predicated region
    $region146: #{tpu_custom_call.1} parent=1 // pred_check
      _
    $region147: #{tpu_custom_call.1} parent=1 // pred_check_branch
      %388 = sbr.rel (0) target = $region149
    $region148: #{tpu_custom_call.1} parent=1 // pred_region
      _
    $region149: #{tpu_custom_call.1} parent=1 // pred_fallthru
      _
    // Predicated region
    $region150: #{tpu_custom_call.1} parent=1 // pred_check
      _
    $region151: #{tpu_custom_call.1} parent=1 // pred_check_branch
      %390 = sbr.rel (0) target = $region153
    $region152: #{tpu_custom_call.1} parent=1 // pred_region
      _
    $region153: #{tpu_custom_call.1} parent=1 // pred_fallthru
      _
    // Predicated region
    $region154: #{tpu_custom_call.1} parent=1 // pred_check
      _
    $region155: #{tpu_custom_call.1} parent=1 // pred_check_branch
      %392 = sbr.rel (0) target = $region157
    $region156: #{tpu_custom_call.1} parent=1 // pred_region
      _
    $region157: #{tpu_custom_call.1} parent=1 // pred_fallthru
      _
    // Predicated region
    $region158: #{tpu_custom_call.1} parent=1 // pred_check
      _
    $region159: #{tpu_custom_call.1} parent=1 // pred_check_branch
      %394 = sbr.rel (0) target = $region161
    $region160: #{tpu_custom_call.1} parent=1 // pred_region
      _
    $region161: #{tpu_custom_call.1} parent=1 // pred_fallthru
      _
    // Predicated region
    $region162: #{tpu_custom_call.1} parent=1 // pred_check
      _
    $region163: #{tpu_custom_call.1} parent=1 // pred_check_branch
      %396 = sbr.rel (0) target = $region165
    $region164: #{tpu_custom_call.1} parent=1 // pred_region
      _
    $region165: #{tpu_custom_call.1} parent=1 // pred_fallthru
      _
    // Predicated region
    $region166: #{tpu_custom_call.1} parent=1 // pred_check
      _
    $region167: #{tpu_custom_call.1} parent=1 // pred_check_branch
      %398 = sbr.rel (0) target = $region169
    $region168: #{tpu_custom_call.1} parent=1 // pred_region
      _
    $region169: #{tpu_custom_call.1} parent=1 // pred_fallthru
      _
    // Predicated region
    $region170: #{tpu_custom_call.1} parent=1 // pred_check
      _
    $region171: #{tpu_custom_call.1} parent=1 // pred_check_branch
      %400 = sbr.rel (0) target = $region173
    $region172: #{tpu_custom_call.1} parent=1 // pred_region
      _
    $region173: #{tpu_custom_call.1} parent=1 // pred_fallthru
      _
    // Predicated region
    $region174: #{tpu_custom_call.1} parent=1 // pred_check
      _
    $region175: #{tpu_custom_call.1} parent=1 // pred_check_branch
      %402 = sbr.rel (0) target = $region177
    $region176: #{tpu_custom_call.1} parent=1 // pred_region
      _
    $region177: #{tpu_custom_call.1} parent=1 // pred_fallthru
      _
    // Predicated region
    $region178: #{tpu_custom_call.1} parent=1 // pred_check
      _
    $region179: #{tpu_custom_call.1} parent=1 // pred_check_branch
      %404 = sbr.rel (0) target = $region181
    $region180: #{tpu_custom_call.1} parent=1 // pred_region
      _
    $region181: #{tpu_custom_call.1} parent=1 // pred_fallthru
      _
    // Predicated region
    $region182: #{tpu_custom_call.1} parent=1 // pred_check
      _
    $region183: #{tpu_custom_call.1} parent=1 // pred_check_branch
      %406 = sbr.rel (0) target = $region185
    $region184: #{tpu_custom_call.1} parent=1 // pred_region
      _
    $region185: #{tpu_custom_call.1} parent=1 // pred_fallthru
      _
    // Predicated region
    $region186: #{tpu_custom_call.1} parent=1 // pred_check
      _
    $region187: #{tpu_custom_call.1} parent=1 // pred_check_branch
      %408 = sbr.rel (0) target = $region189
    $region188: #{tpu_custom_call.1} parent=1 // pred_region
      _
    $region189: #{tpu_custom_call.1} parent=1 // pred_fallthru
      _
    // Predicated region
    $region190: #{tpu_custom_call.1} parent=1 // pred_check
      _
    $region191: #{tpu_custom_call.1} parent=1 // pred_check_branch
      %410 = sbr.rel (0) target = $region193
    $region192: #{tpu_custom_call.1} parent=1 // pred_region
      _
    $region193: #{tpu_custom_call.1} parent=1 // pred_fallthru
      _
    // Predicated region
    $region194: #{tpu_custom_call.1} parent=1 // pred_check
      _
    $region195: #{tpu_custom_call.1} parent=1 // pred_check_branch
      %412 = sbr.rel (0) target = $region197
    $region196: #{tpu_custom_call.1} parent=1 // pred_region
      _
    $region197: #{tpu_custom_call.1} parent=1 // pred_fallthru
      _
    // Predicated region
    $region198: #{tpu_custom_call.1} parent=1 // pred_check
      _
    $region199: #{tpu_custom_call.1} parent=1 // pred_check_branch
      %414 = sbr.rel (0) target = $region201
    $region200: #{tpu_custom_call.1} parent=1 // pred_region
      %415 = dma.done [#allocation4], 384
    $region201: #{tpu_custom_call.1} parent=1 // pred_fallthru
      _
    // Predicated region
    $region202: #{tpu_custom_call.1} parent=1 // pred_check
      _
    $region203: #{tpu_custom_call.1} parent=1 // pred_check_branch
      %417 = sbr.rel (0) target = $region205
    $region204: #{tpu_custom_call.1} parent=1 // pred_region
      %418 = dma.done [#allocation7], 384
    $region205: #{tpu_custom_call.1} parent=1 // pred_fallthru
      _
    // Predicated region
    $region206: #{tpu_custom_call.1} parent=1 // pred_check
      _
    $region207: #{tpu_custom_call.1} parent=1 // pred_check_branch
      %420 = sbr.rel (0) target = $region209
    $region208: #{tpu_custom_call.1} parent=1 // pred_region
      %421 = dma.done [#allocation7], 384
    $region209: #{tpu_custom_call.1} parent=1 // pred_fallthru
      _
    // Predicated region
    $region210: #{tpu_custom_call.1} parent=1 // pred_check
      _
    $region211: #{tpu_custom_call.1} parent=1 // pred_check_branch
      %423 = sbr.rel (0) target = $region213
    $region212: #{tpu_custom_call.1} parent=1 // pred_region
      %424 = dma.done [#allocation10], 16
    $region213: #{tpu_custom_call.1} parent=1 // pred_fallthru
      _
    // Predicated region
    $region214: #{tpu_custom_call.1} parent=1 // pred_check
      _
    $region215: #{tpu_custom_call.1} parent=1 // pred_check_branch
      %426 = sbr.rel (0) target = $region217
    $region216: #{tpu_custom_call.1} parent=1 // pred_region
      %427 = dma.done [#allocation10], 256
    $region217: #{tpu_custom_call.1} parent=1 // pred_fallthru
      _
    // Predicated region
    $region218: #{tpu_custom_call.1} parent=1 // pred_check
      _
    $region219: #{tpu_custom_call.1} parent=1 // pred_check_branch
      %429 = sbr.rel (0) target = $region221
    $region220: #{tpu_custom_call.1} parent=1 // pred_region
      %430 = dma.done [#allocation13], 256
    $region221: #{tpu_custom_call.1} parent=1 // pred_fallthru
      _
    // Predicated region
    $region222: #{tpu_custom_call.1} parent=1 // pred_check
      _
    $region223: #{tpu_custom_call.1} parent=1 // pred_check_branch
      %432 = sbr.rel (0) target = $region225
    $region224: #{tpu_custom_call.1} parent=1 // pred_region
      %433 = dma.done [#allocation13], 256
    $region225: #{tpu_custom_call.1} parent=1 // pred_fallthru
      _
    // Predicated region
    $region226: #{tpu_custom_call.1} parent=1 // pred_check
      _
    $region227: #{tpu_custom_call.1} parent=1 // pred_check_branch
      %435 = sbr.rel (0) target = $region229
    $region228: #{tpu_custom_call.1} parent=1 // pred_region
      %436 = dma.done [#allocation16], 256
    $region229: #{tpu_custom_call.1} parent=1 // pred_fallthru
      _
    // Predicated region
    $region230: #{tpu_custom_call.1} parent=1 // pred_check
      _
    $region231: #{tpu_custom_call.1} parent=1 // pred_check_branch
      %438 = sbr.rel (0) target = $region233
    $region232: #{tpu_custom_call.1} parent=1 // pred_region
      %439 = dma.done [#allocation16], 256
    $region233: #{tpu_custom_call.1} parent=1 // pred_fallthru
      _
    // Predicated region
    $region234: #{tpu_custom_call.1} parent=1 // pred_check
      _
    $region235: #{tpu_custom_call.1} parent=1 // pred_check_branch
      %441 = sbr.rel (0) target = $region237
    $region236: #{tpu_custom_call.1} parent=1 // pred_region
      %442 = dma.done [#allocation19], 256
    $region237: #{tpu_custom_call.1} parent=1 // pred_fallthru
      _
    // Predicated region
    $region238: #{tpu_custom_call.1} parent=1 // pred_check
      _
    $region239: #{tpu_custom_call.1} parent=1 // pred_check_branch
      %444 = sbr.rel (0) target = $region241
    $region240: #{tpu_custom_call.1} parent=1 // pred_region
      %445 = dma.done [#allocation19], 16
    $region241: #{tpu_custom_call.1} parent=1 // pred_fallthru
      _
    // Predicated region
    $region242: #{tpu_custom_call.1} parent=1 // pred_check
      _
    $region243: #{tpu_custom_call.1} parent=1 // pred_check_branch
      %447 = sbr.rel (0) target = $region245
    $region244: #{tpu_custom_call.1} parent=1 // pred_region
      %448 = dma.done [#allocation22], 16
    $region245: #{tpu_custom_call.1} parent=1 // pred_fallthru
      _
    // Predicated region
    $region246: #{tpu_custom_call.1} parent=1 // pred_check
      _
    $region247: #{tpu_custom_call.1} parent=1 // pred_check_branch
      %450 = sbr.rel (0) target = $region249
    $region248: #{tpu_custom_call.1} parent=1 // pred_region
      %451 = dma.done [#allocation22], 16
    $region249: #{tpu_custom_call.1} parent=1 // pred_fallthru
      _
    // Predicated region
    $region250: #{tpu_custom_call.1} parent=1 // pred_check
      _
    $region251: #{tpu_custom_call.1} parent=1 // pred_check_branch
      %453 = sbr.rel (0) target = $region253
    $region252: #{tpu_custom_call.1} parent=1 // pred_region
      %454 = dma.done [#allocation25], 16
    $region253: #{tpu_custom_call.1} parent=1 // pred_fallthru
      _
    // Predicated region
    $region254: #{tpu_custom_call.1} parent=1 // pred_check
      _
    $region255: #{tpu_custom_call.1} parent=1 // pred_check_branch
      %456 = sbr.rel (0) target = $region257
    $region256: #{tpu_custom_call.1} parent=1 // pred_region
      %457 = dma.done [#allocation25], 16
    $region257: #{tpu_custom_call.1} parent=1 // pred_fallthru
      _
    // Predicated region
    $region258: #{tpu_custom_call.1} parent=1 // pred_check
      _
    $region259: #{tpu_custom_call.1} parent=1 // pred_check_branch
      %459 = sbr.rel (0) target = $region261
    $region260: #{tpu_custom_call.1} parent=1 // pred_region
      %460 = dma.done [#allocation28], 16
    $region261: #{tpu_custom_call.1} parent=1 // pred_fallthru
      _
    // Predicated region
    $region262: #{tpu_custom_call.1} parent=1 // pred_check
      _
    $region263: #{tpu_custom_call.1} parent=1 // pred_check_branch
      %462 = sbr.rel (0) target = $region265
    $region264: #{tpu_custom_call.1} parent=1 // pred_region
      %463 = dma.done [#allocation28], 16
    $region265: #{tpu_custom_call.1} parent=1 // pred_fallthru
      _
    // Predicated region
    $region266: #{tpu_custom_call.1} parent=1 // pred_check
      _
    $region267: #{tpu_custom_call.1} parent=1 // pred_check_branch
      %465 = sbr.rel (0) target = $region269
    $region268: #{tpu_custom_call.1} parent=1 // pred_region
      %466 = dma.done [#allocation31], 16
    $region269: #{tpu_custom_call.1} parent=1 // pred_fallthru
      _
    // Predicated region
    $region270: #{tpu_custom_call.1} parent=1 // pred_check
      _
    $region271: #{tpu_custom_call.1} parent=1 // pred_check_branch
      %468 = sbr.rel (0) target = $region273
    $region272: #{tpu_custom_call.1} parent=1 // pred_region
      %469 = dma.done [#allocation31], 16
    $region273: #{tpu_custom_call.1} parent=1 // pred_fallthru
      _
    // Predicated region
    $region274: #{tpu_custom_call.1} parent=1 // pred_check
      _
    $region275: #{tpu_custom_call.1} parent=1 // pred_check_branch
      %471 = sbr.rel (0) target = $region277
    $region276: #{tpu_custom_call.1} parent=1 // pred_region
      %472 = dma.done [#allocation34], 16
    $region277: #{tpu_custom_call.1} parent=1 // pred_fallthru
      _
    // Predicated region
    $region278: #{tpu_custom_call.1} parent=1 // pred_check
      _
    $region279: #{tpu_custom_call.1} parent=1 // pred_check_branch
      %474 = sbr.rel (0) target = $region281
    $region280: #{tpu_custom_call.1} parent=1 // pred_region
      %475 = dma.done [#allocation34], 128
    $region281: #{tpu_custom_call.1} parent=1 // pred_fallthru
      _
    // Predicated region
    $region282: #{tpu_custom_call.1} parent=1 // pred_check
      _
    $region283: #{tpu_custom_call.1} parent=1 // pred_check_branch
      %477 = sbr.rel (0) target = $region285
    $region284: #{tpu_custom_call.1} parent=1 // pred_region
      %478 = dma.done [#allocation37], 384
    $region285: #{tpu_custom_call.1} parent=1 // pred_fallthru
      _
    %v479 = vld [vmem:[#allocation3] sm:$0xff]
    %v480 = vld [vmem:[#allocation3 + $0x8] sm:$0xff]
    %v481 = vld [vmem:[#allocation3 + $0x10] sm:$0xff]
    %v482 = vld [vmem:[#allocation6] sm:$0xff]
    %v483 = vld [vmem:[#allocation6 + $0x8] sm:$0xff]
    %v484 = vld [vmem:[#allocation6 + $0x10] sm:$0xff]
    %v485 = vld [vmem:[%s5] sm:$0xff]
    %v486 = vld [vmem:[%s5 + $0x8] sm:$0xff]
    %v487 = vld [vmem:[%s5 + $0x10] sm:$0xff]
    %v488 = vld [vmem:[#allocation8] sm:$0xff]
    %v489 = vld [vmem:[#allocation8 + $0x8] sm:$0xff]
    %v490 = vld [vmem:[#allocation8 + $0x10] sm:$0xff]
    %v491 = vld [vmem:[%s9] sm:$0xff]
    %v492 = vld [vmem:[%s9 + $0x8] sm:$0xff]
    %v493 = vld [vmem:[%s9 + $0x10] sm:$0x1]
    %v494 = vld [vmem:[#allocation9] sm:$0x1]
    %v496 = vlaneseq
    %v497 = vshrl.u32 %v496, 7
    %v498 = vsub.s32 0, %v497
    %v499 = vrot.slane %v494, %v498
    %vm501 = vcmask 138240
    %v503 = vsel %vm501, %v482, 0
    %v506 = vsel %vm501, %v483, 0
    %v509 = vsel %vm501, %v484, 0
    %vm511 = vcmask 1040384
    %v513 = vsel %vm511, %v493, 0
    %515 = vmatprep.subr.mxu0 0.0
    %516 = vmatpush1.msra.mxu0 %v491
    %517 = vmatprep.subr.mxu0 0.0
    %518 = vmatpush1.msra.mxu0 %v492
    %519 = vmatprep.subr.mxu0 0.0
    %520 = vmatpush1.msra.mxu0 %v513
    %521 = vmatprep.subr.mxu0 0.0
    %522 = vmatpush1.msra.mxu0 0.0
    %523 = vmatprep.subr.mxu0 0.0
    %524 = vmatpush1.msra.mxu0 0.0
    %525 = vmatprep.subr.mxu0 0.0
    %526 = vmatpush1.msra.mxu0 0.0
    %527 = vmatprep.subr.mxu0 0.0
    %528 = vmatpush1.msra.mxu0 0.0
    %529 = vmatprep.subr.mxu0 0.0
    %530 = vmatpush1.msra.mxu0 0.0
    %531 = vmatprep.subr.mxu0 0.0
    %532 = vmatpush1.msra.mxu0 0.0
    %533 = vmatprep.subr.mxu0 0.0
    %534 = vmatpush1.msra.mxu0 0.0
    %535 = vmatprep.subr.mxu0 0.0
    %536 = vmatpush1.msra.mxu0 0.0
    %537 = vmatprep.subr.mxu0 0.0
    %538 = vmatpush1.msra.mxu0 0.0
    %539 = vmatprep.subr.mxu0 0.0
    %540 = vmatpush1.msra.mxu0 0.0
    %541 = vmatprep.subr.mxu0 0.0
    %542 = vmatpush1.msra.mxu0 0.0
    %543 = vmatprep.subr.mxu0 0.0
    %544 = vmatpush1.msra.mxu0 0.0
    %545 = vmatprep.subr.mxu0 0.0
    %546 = vmatpush1.msra.mxu0 0.0
    %547 = vmatprep.subr.mxu0 0.0
    %548 = vmatpush1.msra.mxu0 0.0
    %549 = vmatprep.subr.mxu0 0.0
    %550 = vmatpush1.msra.mxu0 0.0
    %551 = vmatprep.subr.mxu0 0.0
    %552 = vmatpush1.msra.mxu0 0.0
    %553 = vmatprep.subr.mxu0 0.0
    %554 = vmatpush1.msra.mxu0 0.0
    %555 = vmatprep.subr.mxu0 0.0
    %556 = vmatpush1.msra.mxu0 0.0
    %557 = vmatprep.subr.mxu0 0.0
    %558 = vmatpush1.msra.mxu0 0.0
    %559 = vmatprep.subr.mxu0 0.0
    %560 = vmatpush1.msra.mxu0 0.0
    %561 = vmatprep.subr.mxu0 0.0
    %562 = vmatpush1.msra.mxu0 0.0
    %563 = vmatprep.subr.mxu0 0.0
    %564 = vmatpush1.msra.mxu0 0.0
    %565 = vmatprep.subr.mxu0 0.0
    %566 = vmatpush1.msra.mxu0 0.0
    %567 = vmatprep.subr.mxu0 0.0
    %568 = vmatpush1.msra.mxu0 0.0
    %569 = vmatprep.subr.mxu0 0.0
    %570 = vmatpush1.msra.mxu0 0.0
    %571 = vmatprep.subr.mxu0 0.0
    %572 = vmatpush1.msra.mxu0 0.0
    %573 = vmatprep.subr.mxu0 0.0
    %574 = vmatpush1.msra.mxu0 0.0
    %575 = vmatprep.subr.mxu0 0.0
    %576 = vmatpush1.msra.mxu0 0.0
    %577 = vmatprep.subr.mxu0 0.0
    %578 = vmatpush1.msra.mxu0 0.0
    %579 = vmatprep.mubr.f32.mxu0 0.0
    %580 = vmatmul.mubr.f32.gmra.mrb[0].mxu0 %v503
    %v581 = vpop.f32.mrb[0].mxu0
    %v582 = vadd.f32 %v499, %v581
    %v583 = vpop.f32.mrb[0].mxu0
    %584 = vmatprep.mubr.f32.mxu0 0.0
    %585 = vmatmul.mubr.f32.gmra.mrb[0].mxu0 %v506
    %v586 = vpop.f32.mrb[0].mxu0
    %v587 = vadd.f32 %v499, %v586
    %v588 = vpop.f32.mrb[0].mxu0
    %589 = vmatprep.mubr.f32.mxu0 0.0
    %590 = vmatmul.mubr.f32.gmra.mrb[0].mxu0 %v509
    %v591 = vpop.f32.mrb[0].mxu0
    %v592 = vadd.f32 %v499, %v591
    %v593 = vpop.f32.mrb[0].mxu0
    %594 = vdwg.mxu0
    %v595 = vmax.f32 %v582, 0.0
    %v596 = vmax.f32 %v587, 0.0
    %v597 = vmax.f32 %v592, 0.0
    %v598 = vld [vmem:[#allocation11] sm:$0xff]
    %v599 = vld [vmem:[#allocation11 + $0x8] sm:$0xff]
    %v600 = vld [vmem:[#allocation12] sm:$0xff]
    %v601 = vld [vmem:[#allocation12 + $0x8] sm:$0xff]
    %v602 = vld [vmem:[#allocation14] sm:$0xff]
    %v603 = vld [vmem:[#allocation14 + $0x8] sm:$0xff]
    %v604 = vld [vmem:[#allocation15] sm:$0xff]
    %v605 = vld [vmem:[#allocation15 + $0x8] sm:$0xff]
    %v606 = vld [vmem:[#allocation17] sm:$0xff]
    %v607 = vld [vmem:[#allocation17 + $0x8] sm:$0xff]
    %v608 = vld [vmem:[#allocation18] sm:$0xff]
    %v609 = vld [vmem:[#allocation18 + $0x8] sm:$0xff]
    %v610 = vld [vmem:[#allocation20] sm:$0x1]
    %v611 = vld [vmem:[#allocation21] sm:$0x1]
    %v612 = vld [vmem:[#allocation23] sm:$0x1]
    %v613 = vld [vmem:[#allocation24] sm:$0x1]
    %v614 = vld [vmem:[#allocation26] sm:$0x1]
    %v615 = vld [vmem:[#allocation27] sm:$0x1]
    %v617 = vlaneseq
    %v618 = vshrl.u32 %v617, 7
    %v619 = vsub.s32 0, %v618
    %v620 = vrot.slane %v610, %v619
    %vm622 = vcmask 130048
    %v624 = vsel %vm622, %v595, 0
    %v627 = vsel %vm622, %v596, 0
    %v630 = vsel %vm622, %v597, 0
    %632 = vmatprep.subr.mxu0 0.0
    %633 = vmatpush1.msra.mxu0 %v598
    %634 = vmatprep.subr.mxu0 0.0
    %635 = vmatpush1.msra.mxu0 %v599
    %636 = vmatprep.subr.mxu0 0.0
    %637 = vmatpush1.msra.mxu0 0.0
    %638 = vmatprep.subr.mxu0 0.0
    %639 = vmatpush1.msra.mxu0 0.0
    %640 = vmatprep.subr.mxu0 0.0
    %641 = vmatpush1.msra.mxu0 0.0
    %642 = vmatprep.subr.mxu0 0.0
    %643 = vmatpush1.msra.mxu0 0.0
    %644 = vmatprep.subr.mxu0 0.0
    %645 = vmatpush1.msra.mxu0 0.0
    %646 = vmatprep.subr.mxu0 0.0
    %647 = vmatpush1.msra.mxu0 0.0
    %648 = vmatprep.subr.mxu0 0.0
    %649 = vmatpush1.msra.mxu0 0.0
    %650 = vmatprep.subr.mxu0 0.0
    %651 = vmatpush1.msra.mxu0 0.0
    %652 = vmatprep.subr.mxu0 0.0
    %653 = vmatpush1.msra.mxu0 0.0
    %654 = vmatprep.subr.mxu0 0.0
    %655 = vmatpush1.msra.mxu0 0.0
    %656 = vmatprep.subr.mxu0 0.0
    %657 = vmatpush1.msra.mxu0 0.0
    %658 = vmatprep.subr.mxu0 0.0
    %659 = vmatpush1.msra.mxu0 0.0
    %660 = vmatprep.subr.mxu0 0.0
    %661 = vmatpush1.msra.mxu0 0.0
    %662 = vmatprep.subr.mxu0 0.0
    %663 = vmatpush1.msra.mxu0 0.0
    %664 = vmatprep.subr.mxu0 0.0
    %665 = vmatpush1.msra.mxu0 0.0
    %666 = vmatprep.subr.mxu0 0.0
    %667 = vmatpush1.msra.mxu0 0.0
    %668 = vmatprep.subr.mxu0 0.0
    %669 = vmatpush1.msra.mxu0 0.0
    %670 = vmatprep.subr.mxu0 0.0
    %671 = vmatpush1.msra.mxu0 0.0
    %672 = vmatprep.subr.mxu0 0.0
    %673 = vmatpush1.msra.mxu0 0.0
    %674 = vmatprep.subr.mxu0 0.0
    %675 = vmatpush1.msra.mxu0 0.0
    %676 = vmatprep.subr.mxu0 0.0
    %677 = vmatpush1.msra.mxu0 0.0
    %678 = vmatprep.subr.mxu0 0.0
    %679 = vmatpush1.msra.mxu0 0.0
    %680 = vmatprep.subr.mxu0 0.0
    %681 = vmatpush1.msra.mxu0 0.0
    %682 = vmatprep.subr.mxu0 0.0
    %683 = vmatpush1.msra.mxu0 0.0
    %684 = vmatprep.subr.mxu0 0.0
    %685 = vmatpush1.msra.mxu0 0.0
    %686 = vmatprep.subr.mxu0 0.0
    %687 = vmatpush1.msra.mxu0 0.0
    %688 = vmatprep.subr.mxu0 0.0
    %689 = vmatpush1.msra.mxu0 0.0
    %690 = vmatprep.subr.mxu0 0.0
    %691 = vmatpush1.msra.mxu0 0.0
    %692 = vmatprep.subr.mxu0 0.0
    %693 = vmatpush1.msra.mxu0 0.0
    %694 = vmatprep.subr.mxu0 0.0
    %695 = vmatpush1.msra.mxu0 0.0
    %696 = vmatprep.mubr.f32.mxu0 0.0
    %697 = vmatmul.mubr.f32.gmra.mrb[0].mxu0 %v624
    %v698 = vpop.f32.mrb[0].mxu0
    %v699 = vadd.f32 %v620, %v698
    %v700 = vpop.f32.mrb[0].mxu0
    %701 = vmatprep.mubr.f32.mxu0 0.0
    %702 = vmatmul.mubr.f32.gmra.mrb[0].mxu0 %v627
    %v703 = vpop.f32.mrb[0].mxu0
    %v704 = vadd.f32 %v620, %v703
    %v705 = vpop.f32.mrb[0].mxu0
    %706 = vmatprep.mubr.f32.mxu0 0.0
    %707 = vmatmul.mubr.f32.gmra.mrb[0].mxu0 %v630
    %v708 = vpop.f32.mrb[0].mxu0
    %v709 = vadd.f32 %v620, %v708
    %v710 = vpop.f32.mrb[0].mxu0
    %711 = vdwg.mxu0
    %v713 = vsel %vm622, %v485, 0
    %v716 = vsel %vm622, %v486, 0
    %v719 = vsel %vm622, %v487, 0
    %721 = vmatprep.subr.mxu0 0.0
    %722 = vmatpush1.msra.mxu0 %v604
    %723 = vmatprep.subr.mxu0 0.0
    %724 = vmatpush1.msra.mxu0 %v605
    %725 = vmatprep.subr.mxu0 0.0
    %726 = vmatpush1.msra.mxu0 0.0
    %727 = vmatprep.subr.mxu0 0.0
    %728 = vmatpush1.msra.mxu0 0.0
    %729 = vmatprep.subr.mxu0 0.0
    %730 = vmatpush1.msra.mxu0 0.0
    %731 = vmatprep.subr.mxu0 0.0
    %732 = vmatpush1.msra.mxu0 0.0
    %733 = vmatprep.subr.mxu0 0.0
    %734 = vmatpush1.msra.mxu0 0.0
    %735 = vmatprep.subr.mxu0 0.0
    %736 = vmatpush1.msra.mxu0 0.0
    %737 = vmatprep.subr.mxu0 0.0
    %738 = vmatpush1.msra.mxu0 0.0
    %739 = vmatprep.subr.mxu0 0.0
    %740 = vmatpush1.msra.mxu0 0.0
    %741 = vmatprep.subr.mxu0 0.0
    %742 = vmatpush1.msra.mxu0 0.0
    %743 = vmatprep.subr.mxu0 0.0
    %744 = vmatpush1.msra.mxu0 0.0
    %745 = vmatprep.subr.mxu0 0.0
    %746 = vmatpush1.msra.mxu0 0.0
    %747 = vmatprep.subr.mxu0 0.0
    %748 = vmatpush1.msra.mxu0 0.0
    %749 = vmatprep.subr.mxu0 0.0
    %750 = vmatpush1.msra.mxu0 0.0
    %751 = vmatprep.subr.mxu0 0.0
    %752 = vmatpush1.msra.mxu0 0.0
    %753 = vmatprep.subr.mxu0 0.0
    %754 = vmatpush1.msra.mxu0 0.0
    %755 = vmatprep.subr.mxu0 0.0
    %756 = vmatpush1.msra.mxu0 0.0
    %757 = vmatprep.subr.mxu0 0.0
    %758 = vmatpush1.msra.mxu0 0.0
    %759 = vmatprep.subr.mxu0 0.0
    %760 = vmatpush1.msra.mxu0 0.0
    %761 = vmatprep.subr.mxu0 0.0
    %762 = vmatpush1.msra.mxu0 0.0
    %763 = vmatprep.subr.mxu0 0.0
    %764 = vmatpush1.msra.mxu0 0.0
    %765 = vmatprep.subr.mxu0 0.0
    %766 = vmatpush1.msra.mxu0 0.0
    %767 = vmatprep.subr.mxu0 0.0
    %768 = vmatpush1.msra.mxu0 0.0
    %769 = vmatprep.subr.mxu0 0.0
    %770 = vmatpush1.msra.mxu0 0.0
    %771 = vmatprep.subr.mxu0 0.0
    %772 = vmatpush1.msra.mxu0 0.0
    %773 = vmatprep.subr.mxu0 0.0
    %774 = vmatpush1.msra.mxu0 0.0
    %775 = vmatprep.subr.mxu0 0.0
    %776 = vmatpush1.msra.mxu0 0.0
    %777 = vmatprep.subr.mxu0 0.0
    %778 = vmatpush1.msra.mxu0 0.0
    %779 = vmatprep.subr.mxu0 0.0
    %780 = vmatpush1.msra.mxu0 0.0
    %781 = vmatprep.subr.mxu0 0.0
    %782 = vmatpush1.msra.mxu0 0.0
    %783 = vmatprep.subr.mxu0 0.0
    %784 = vmatpush1.msra.mxu0 0.0
    %785 = vmatprep.mubr.f32.mxu0 0.0
    %786 = vmatmul.mubr.f32.gmra.mrb[0].mxu0 %v713
    %v787 = vpop.f32.mrb[0].mxu0
    %v788 = vadd.f32 0.0, %v787
    %v789 = vpop.f32.mrb[0].mxu0
    %790 = vmatprep.mubr.f32.mxu0 0.0
    %791 = vmatmul.mubr.f32.gmra.mrb[0].mxu0 %v716
    %v792 = vpop.f32.mrb[0].mxu0
    %v793 = vadd.f32 0.0, %v792
    %v794 = vpop.f32.mrb[0].mxu0
    %795 = vmatprep.mubr.f32.mxu0 0.0
    %796 = vmatmul.mubr.f32.gmra.mrb[0].mxu0 %v719
    %v797 = vpop.f32.mrb[0].mxu0
    %v798 = vadd.f32 0.0, %v797
    %v799 = vpop.f32.mrb[0].mxu0
    %800 = vdwg.mxu0
    %v801 = vadd.f32 %v699, %v788
    %v802 = vadd.f32 %v704, %v793
    %v803 = vadd.f32 %v709, %v798
    %v805 = vlaneseq
    %v806 = vshrl.u32 %v805, 7
    %v807 = vsub.s32 0, %v806
    %v808 = vrot.slane %v613, %v807
    %v810 = vadd.f32 %v801, %v808
    %v811 = vadd.f32 %v802, %v808
    %v812 = vadd.f32 %v803, %v808
    %v813 = vxor.u32 %v810, 2147483648
    %v814 = vxor.u32 %v811, 2147483648
    %v815 = vxor.u32 %v812, 2147483648
    %v816 = vmul.f32 %v813, 1.442695
    %v817 = vpow.pop %v816
    %v818 = vmul.f32 %v814, 1.442695
    %v819 = vpow.pop %v818
    %v820 = vmul.f32 %v815, 1.442695
    %v821 = vpow.pop %v820
    %v822 = vadd.f32 %v817, 1.0
    %v823 = vadd.f32 %v819, 1.0
    %v824 = vadd.f32 %v821, 1.0
    %v825 = vrcp.pop %v822
    %v826 = vmul.f32 1.0, %v825
    %v827 = vrcp.pop %v823
    %v828 = vmul.f32 1.0, %v827
    %v829 = vrcp.pop %v824
    %v830 = vmul.f32 1.0, %v829
    %v832 = vlaneseq
    %v833 = vshrl.u32 %v832, 7
    %v834 = vsub.s32 0, %v833
    %v835 = vrot.slane %v611, %v834
    %837 = vmatprep.subr.mxu0 0.0
    %838 = vmatpush1.msra.mxu0 %v600
    %839 = vmatprep.subr.mxu0 0.0
    %840 = vmatpush1.msra.mxu0 %v601
    %841 = vmatprep.subr.mxu0 0.0
    %842 = vmatpush1.msra.mxu0 0.0
    %843 = vmatprep.subr.mxu0 0.0
    %844 = vmatpush1.msra.mxu0 0.0
    %845 = vmatprep.subr.mxu0 0.0
    %846 = vmatpush1.msra.mxu0 0.0
    %847 = vmatprep.subr.mxu0 0.0
    %848 = vmatpush1.msra.mxu0 0.0
    %849 = vmatprep.subr.mxu0 0.0
    %850 = vmatpush1.msra.mxu0 0.0
    %851 = vmatprep.subr.mxu0 0.0
    %852 = vmatpush1.msra.mxu0 0.0
    %853 = vmatprep.subr.mxu0 0.0
    %854 = vmatpush1.msra.mxu0 0.0
    %855 = vmatprep.subr.mxu0 0.0
    %856 = vmatpush1.msra.mxu0 0.0
    %857 = vmatprep.subr.mxu0 0.0
    %858 = vmatpush1.msra.mxu0 0.0
    %859 = vmatprep.subr.mxu0 0.0
    %860 = vmatpush1.msra.mxu0 0.0
    %861 = vmatprep.subr.mxu0 0.0
    %862 = vmatpush1.msra.mxu0 0.0
    %863 = vmatprep.subr.mxu0 0.0
    %864 = vmatpush1.msra.mxu0 0.0
    %865 = vmatprep.subr.mxu0 0.0
    %866 = vmatpush1.msra.mxu0 0.0
    %867 = vmatprep.subr.mxu0 0.0
    %868 = vmatpush1.msra.mxu0 0.0
    %869 = vmatprep.subr.mxu0 0.0
    %870 = vmatpush1.msra.mxu0 0.0
    %871 = vmatprep.subr.mxu0 0.0
    %872 = vmatpush1.msra.mxu0 0.0
    %873 = vmatprep.subr.mxu0 0.0
    %874 = vmatpush1.msra.mxu0 0.0
    %875 = vmatprep.subr.mxu0 0.0
    %876 = vmatpush1.msra.mxu0 0.0
    %877 = vmatprep.subr.mxu0 0.0
    %878 = vmatpush1.msra.mxu0 0.0
    %879 = vmatprep.subr.mxu0 0.0
    %880 = vmatpush1.msra.mxu0 0.0
    %881 = vmatprep.subr.mxu0 0.0
    %882 = vmatpush1.msra.mxu0 0.0
    %883 = vmatprep.subr.mxu0 0.0
    %884 = vmatpush1.msra.mxu0 0.0
    %885 = vmatprep.subr.mxu0 0.0
    %886 = vmatpush1.msra.mxu0 0.0
    %887 = vmatprep.subr.mxu0 0.0
    %888 = vmatpush1.msra.mxu0 0.0
    %889 = vmatprep.subr.mxu0 0.0
    %890 = vmatpush1.msra.mxu0 0.0
    %891 = vmatprep.subr.mxu0 0.0
    %892 = vmatpush1.msra.mxu0 0.0
    %893 = vmatprep.subr.mxu0 0.0
    %894 = vmatpush1.msra.mxu0 0.0
    %895 = vmatprep.subr.mxu0 0.0
    %896 = vmatpush1.msra.mxu0 0.0
    %897 = vmatprep.subr.mxu0 0.0
    %898 = vmatpush1.msra.mxu0 0.0
    %899 = vmatprep.subr.mxu0 0.0
    %900 = vmatpush1.msra.mxu0 0.0
    %901 = vmatprep.mubr.f32.mxu0 0.0
    %902 = vmatmul.mubr.f32.gmra.mrb[0].mxu0 %v624
    %v903 = vpop.f32.mrb[0].mxu0
    %v904 = vadd.f32 %v835, %v903
    %v905 = vpop.f32.mrb[0].mxu0
    %906 = vmatprep.mubr.f32.mxu0 0.0
    %907 = vmatmul.mubr.f32.gmra.mrb[0].mxu0 %v627
    %v908 = vpop.f32.mrb[0].mxu0
    %v909 = vadd.f32 %v835, %v908
    %v910 = vpop.f32.mrb[0].mxu0
    %911 = vmatprep.mubr.f32.mxu0 0.0
    %912 = vmatmul.mubr.f32.gmra.mrb[0].mxu0 %v630
    %v913 = vpop.f32.mrb[0].mxu0
    %v914 = vadd.f32 %v835, %v913
    %v915 = vpop.f32.mrb[0].mxu0
    %916 = vdwg.mxu0
    %917 = vmatprep.subr.mxu0 0.0
    %918 = vmatpush1.msra.mxu0 %v606
    %919 = vmatprep.subr.mxu0 0.0
    %920 = vmatpush1.msra.mxu0 %v607
    %921 = vmatprep.subr.mxu0 0.0
    %922 = vmatpush1.msra.mxu0 0.0
    %923 = vmatprep.subr.mxu0 0.0
    %924 = vmatpush1.msra.mxu0 0.0
    %925 = vmatprep.subr.mxu0 0.0
    %926 = vmatpush1.msra.mxu0 0.0
    %927 = vmatprep.subr.mxu0 0.0
    %928 = vmatpush1.msra.mxu0 0.0
    %929 = vmatprep.subr.mxu0 0.0
    %930 = vmatpush1.msra.mxu0 0.0
    %931 = vmatprep.subr.mxu0 0.0
    %932 = vmatpush1.msra.mxu0 0.0
    %933 = vmatprep.subr.mxu0 0.0
    %934 = vmatpush1.msra.mxu0 0.0
    %935 = vmatprep.subr.mxu0 0.0
    %936 = vmatpush1.msra.mxu0 0.0
    %937 = vmatprep.subr.mxu0 0.0
    %938 = vmatpush1.msra.mxu0 0.0
    %939 = vmatprep.subr.mxu0 0.0
    %940 = vmatpush1.msra.mxu0 0.0
    %941 = vmatprep.subr.mxu0 0.0
    %942 = vmatpush1.msra.mxu0 0.0
    %943 = vmatprep.subr.mxu0 0.0
    %944 = vmatpush1.msra.mxu0 0.0
    %945 = vmatprep.subr.mxu0 0.0
    %946 = vmatpush1.msra.mxu0 0.0
    %947 = vmatprep.subr.mxu0 0.0
    %948 = vmatpush1.msra.mxu0 0.0
    %949 = vmatprep.subr.mxu0 0.0
    %950 = vmatpush1.msra.mxu0 0.0
    %951 = vmatprep.subr.mxu0 0.0
    %952 = vmatpush1.msra.mxu0 0.0
    %953 = vmatprep.subr.mxu0 0.0
    %954 = vmatpush1.msra.mxu0 0.0
    %955 = vmatprep.subr.mxu0 0.0
    %956 = vmatpush1.msra.mxu0 0.0
    %957 = vmatprep.subr.mxu0 0.0
    %958 = vmatpush1.msra.mxu0 0.0
    %959 = vmatprep.subr.mxu0 0.0
    %960 = vmatpush1.msra.mxu0 0.0
    %961 = vmatprep.subr.mxu0 0.0
    %962 = vmatpush1.msra.mxu0 0.0
    %963 = vmatprep.subr.mxu0 0.0
    %964 = vmatpush1.msra.mxu0 0.0
    %965 = vmatprep.subr.mxu0 0.0
    %966 = vmatpush1.msra.mxu0 0.0
    %967 = vmatprep.subr.mxu0 0.0
    %968 = vmatpush1.msra.mxu0 0.0
    %969 = vmatprep.subr.mxu0 0.0
    %970 = vmatpush1.msra.mxu0 0.0
    %971 = vmatprep.subr.mxu0 0.0
    %972 = vmatpush1.msra.mxu0 0.0
    %973 = vmatprep.subr.mxu0 0.0
    %974 = vmatpush1.msra.mxu0 0.0
    %975 = vmatprep.subr.mxu0 0.0
    %976 = vmatpush1.msra.mxu0 0.0
    %977 = vmatprep.subr.mxu0 0.0
    %978 = vmatpush1.msra.mxu0 0.0
    %979 = vmatprep.subr.mxu0 0.0
    %980 = vmatpush1.msra.mxu0 0.0
    %981 = vmatprep.mubr.f32.mxu0 0.0
    %982 = vmatmul.mubr.f32.gmra.mrb[0].mxu0 %v713
    %v983 = vpop.f32.mrb[0].mxu0
    %v984 = vadd.f32 0.0, %v983
    %v985 = vpop.f32.mrb[0].mxu0
    %986 = vmatprep.mubr.f32.mxu0 0.0
    %987 = vmatmul.mubr.f32.gmra.mrb[0].mxu0 %v716
    %v988 = vpop.f32.mrb[0].mxu0
    %v989 = vadd.f32 0.0, %v988
    %v990 = vpop.f32.mrb[0].mxu0
    %991 = vmatprep.mubr.f32.mxu0 0.0
    %992 = vmatmul.mubr.f32.gmra.mrb[0].mxu0 %v719
    %v993 = vpop.f32.mrb[0].mxu0
    %v994 = vadd.f32 0.0, %v993
    %v995 = vpop.f32.mrb[0].mxu0
    %996 = vdwg.mxu0
    %v997 = vadd.f32 %v904, %v984
    %v998 = vadd.f32 %v909, %v989
    %v999 = vadd.f32 %v914, %v994
    %v1001 = vlaneseq
    %v1002 = vshrl.u32 %v1001, 7
    %v1003 = vsub.s32 0, %v1002
    %v1004 = vrot.slane %v614, %v1003
    %v1006 = vadd.f32 %v997, %v1004
    %v1007 = vadd.f32 %v998, %v1004
    %v1008 = vadd.f32 %v999, %v1004
    %v1009 = vxor.u32 %v1006, 2147483648
    %v1010 = vxor.u32 %v1007, 2147483648
    %v1011 = vxor.u32 %v1008, 2147483648
    %v1012 = vmul.f32 %v1009, 1.442695
    %v1013 = vpow.pop %v1012
    %v1014 = vmul.f32 %v1010, 1.442695
    %v1015 = vpow.pop %v1014
    %v1016 = vmul.f32 %v1011, 1.442695
    %v1017 = vpow.pop %v1016
    %v1018 = vadd.f32 %v1013, 1.0
    %v1019 = vadd.f32 %v1015, 1.0
    %v1020 = vadd.f32 %v1017, 1.0
    %v1021 = vrcp.pop %v1018
    %v1022 = vmul.f32 1.0, %v1021
    %v1023 = vrcp.pop %v1019
    %v1024 = vmul.f32 1.0, %v1023
    %v1025 = vrcp.pop %v1020
    %v1026 = vmul.f32 1.0, %v1025
    %v1028 = vlaneseq
    %v1029 = vshrl.u32 %v1028, 7
    %v1030 = vsub.s32 0, %v1029
    %v1031 = vrot.slane %v612, %v1030
    %1033 = vmatprep.subr.mxu0 0.0
    %1034 = vmatpush1.msra.mxu0 %v602
    %1035 = vmatprep.subr.mxu0 0.0
    %1036 = vmatpush1.msra.mxu0 %v603
    %1037 = vmatprep.subr.mxu0 0.0
    %1038 = vmatpush1.msra.mxu0 0.0
    %1039 = vmatprep.subr.mxu0 0.0
    %1040 = vmatpush1.msra.mxu0 0.0
    %1041 = vmatprep.subr.mxu0 0.0
    %1042 = vmatpush1.msra.mxu0 0.0
    %1043 = vmatprep.subr.mxu0 0.0
    %1044 = vmatpush1.msra.mxu0 0.0
    %1045 = vmatprep.subr.mxu0 0.0
    %1046 = vmatpush1.msra.mxu0 0.0
    %1047 = vmatprep.subr.mxu0 0.0
    %1048 = vmatpush1.msra.mxu0 0.0
    %1049 = vmatprep.subr.mxu0 0.0
    %1050 = vmatpush1.msra.mxu0 0.0
    %1051 = vmatprep.subr.mxu0 0.0
    %1052 = vmatpush1.msra.mxu0 0.0
    %1053 = vmatprep.subr.mxu0 0.0
    %1054 = vmatpush1.msra.mxu0 0.0
    %1055 = vmatprep.subr.mxu0 0.0
    %1056 = vmatpush1.msra.mxu0 0.0
    %1057 = vmatprep.subr.mxu0 0.0
    %1058 = vmatpush1.msra.mxu0 0.0
    %1059 = vmatprep.subr.mxu0 0.0
    %1060 = vmatpush1.msra.mxu0 0.0
    %1061 = vmatprep.subr.mxu0 0.0
    %1062 = vmatpush1.msra.mxu0 0.0
    %1063 = vmatprep.subr.mxu0 0.0
    %1064 = vmatpush1.msra.mxu0 0.0
    %1065 = vmatprep.subr.mxu0 0.0
    %1066 = vmatpush1.msra.mxu0 0.0
    %1067 = vmatprep.subr.mxu0 0.0
    %1068 = vmatpush1.msra.mxu0 0.0
    %1069 = vmatprep.subr.mxu0 0.0
    %1070 = vmatpush1.msra.mxu0 0.0
    %1071 = vmatprep.subr.mxu0 0.0
    %1072 = vmatpush1.msra.mxu0 0.0
    %1073 = vmatprep.subr.mxu0 0.0
    %1074 = vmatpush1.msra.mxu0 0.0
    %1075 = vmatprep.subr.mxu0 0.0
    %1076 = vmatpush1.msra.mxu0 0.0
    %1077 = vmatprep.subr.mxu0 0.0
    %1078 = vmatpush1.msra.mxu0 0.0
    %1079 = vmatprep.subr.mxu0 0.0
    %1080 = vmatpush1.msra.mxu0 0.0
    %1081 = vmatprep.subr.mxu0 0.0
    %1082 = vmatpush1.msra.mxu0 0.0
    %1083 = vmatprep.subr.mxu0 0.0
    %1084 = vmatpush1.msra.mxu0 0.0
    %1085 = vmatprep.subr.mxu0 0.0
    %1086 = vmatpush1.msra.mxu0 0.0
    %1087 = vmatprep.subr.mxu0 0.0
    %1088 = vmatpush1.msra.mxu0 0.0
    %1089 = vmatprep.subr.mxu0 0.0
    %1090 = vmatpush1.msra.mxu0 0.0
    %1091 = vmatprep.subr.mxu0 0.0
    %1092 = vmatpush1.msra.mxu0 0.0
    %1093 = vmatprep.subr.mxu0 0.0
    %1094 = vmatpush1.msra.mxu0 0.0
    %1095 = vmatprep.subr.mxu0 0.0
    %1096 = vmatpush1.msra.mxu0 0.0
    %1097 = vmatprep.mubr.f32.mxu0 0.0
    %1098 = vmatmul.mubr.f32.gmra.mrb[0].mxu0 %v624
    %v1099 = vpop.f32.mrb[0].mxu0
    %v1100 = vadd.f32 %v1031, %v1099
    %v1101 = vpop.f32.mrb[0].mxu0
    %1102 = vmatprep.mubr.f32.mxu0 0.0
    %1103 = vmatmul.mubr.f32.gmra.mrb[0].mxu0 %v627
    %v1104 = vpop.f32.mrb[0].mxu0
    %v1105 = vadd.f32 %v1031, %v1104
    %v1106 = vpop.f32.mrb[0].mxu0
    %1107 = vmatprep.mubr.f32.mxu0 0.0
    %1108 = vmatmul.mubr.f32.gmra.mrb[0].mxu0 %v630
    %v1109 = vpop.f32.mrb[0].mxu0
    %v1110 = vadd.f32 %v1031, %v1109
    %v1111 = vpop.f32.mrb[0].mxu0
    %1112 = vdwg.mxu0
    %v1114 = vlaneseq
    %v1115 = vshrl.u32 %v1114, 7
    %v1116 = vsub.s32 0, %v1115
    %v1117 = vrot.slane %v615, %v1116
    %1119 = vmatprep.subr.mxu0 0.0
    %1120 = vmatpush1.msra.mxu0 %v608
    %1121 = vmatprep.subr.mxu0 0.0
    %1122 = vmatpush1.msra.mxu0 %v609
    %1123 = vmatprep.subr.mxu0 0.0
    %1124 = vmatpush1.msra.mxu0 0.0
    %1125 = vmatprep.subr.mxu0 0.0
    %1126 = vmatpush1.msra.mxu0 0.0
    %1127 = vmatprep.subr.mxu0 0.0
    %1128 = vmatpush1.msra.mxu0 0.0
    %1129 = vmatprep.subr.mxu0 0.0
    %1130 = vmatpush1.msra.mxu0 0.0
    %1131 = vmatprep.subr.mxu0 0.0
    %1132 = vmatpush1.msra.mxu0 0.0
    %1133 = vmatprep.subr.mxu0 0.0
    %1134 = vmatpush1.msra.mxu0 0.0
    %1135 = vmatprep.subr.mxu0 0.0
    %1136 = vmatpush1.msra.mxu0 0.0
    %1137 = vmatprep.subr.mxu0 0.0
    %1138 = vmatpush1.msra.mxu0 0.0
    %1139 = vmatprep.subr.mxu0 0.0
    %1140 = vmatpush1.msra.mxu0 0.0
    %1141 = vmatprep.subr.mxu0 0.0
    %1142 = vmatpush1.msra.mxu0 0.0
    %1143 = vmatprep.subr.mxu0 0.0
    %1144 = vmatpush1.msra.mxu0 0.0
    %1145 = vmatprep.subr.mxu0 0.0
    %1146 = vmatpush1.msra.mxu0 0.0
    %1147 = vmatprep.subr.mxu0 0.0
    %1148 = vmatpush1.msra.mxu0 0.0
    %1149 = vmatprep.subr.mxu0 0.0
    %1150 = vmatpush1.msra.mxu0 0.0
    %1151 = vmatprep.subr.mxu0 0.0
    %1152 = vmatpush1.msra.mxu0 0.0
    %1153 = vmatprep.subr.mxu0 0.0
    %1154 = vmatpush1.msra.mxu0 0.0
    %1155 = vmatprep.subr.mxu0 0.0
    %1156 = vmatpush1.msra.mxu0 0.0
    %1157 = vmatprep.subr.mxu0 0.0
    %1158 = vmatpush1.msra.mxu0 0.0
    %1159 = vmatprep.subr.mxu0 0.0
    %1160 = vmatpush1.msra.mxu0 0.0
    %1161 = vmatprep.subr.mxu0 0.0
    %1162 = vmatpush1.msra.mxu0 0.0
    %1163 = vmatprep.subr.mxu0 0.0
    %1164 = vmatpush1.msra.mxu0 0.0
    %1165 = vmatprep.subr.mxu0 0.0
    %1166 = vmatpush1.msra.mxu0 0.0
    %1167 = vmatprep.subr.mxu0 0.0
    %1168 = vmatpush1.msra.mxu0 0.0
    %1169 = vmatprep.subr.mxu0 0.0
    %1170 = vmatpush1.msra.mxu0 0.0
    %1171 = vmatprep.subr.mxu0 0.0
    %1172 = vmatpush1.msra.mxu0 0.0
    %1173 = vmatprep.subr.mxu0 0.0
    %1174 = vmatpush1.msra.mxu0 0.0
    %1175 = vmatprep.subr.mxu0 0.0
    %1176 = vmatpush1.msra.mxu0 0.0
    %1177 = vmatprep.subr.mxu0 0.0
    %1178 = vmatpush1.msra.mxu0 0.0
    %1179 = vmatprep.subr.mxu0 0.0
    %1180 = vmatpush1.msra.mxu0 0.0
    %1181 = vmatprep.subr.mxu0 0.0
    %1182 = vmatpush1.msra.mxu0 0.0
    %1183 = vmatprep.mubr.f32.mxu0 0.0
    %1184 = vmatmul.mubr.f32.gmra.mrb[0].mxu0 %v713
    %v1185 = vpop.f32.mrb[0].mxu0
    %v1186 = vadd.f32 %v1117, %v1185
    %v1187 = vpop.f32.mrb[0].mxu0
    %1188 = vmatprep.mubr.f32.mxu0 0.0
    %1189 = vmatmul.mubr.f32.gmra.mrb[0].mxu0 %v716
    %v1190 = vpop.f32.mrb[0].mxu0
    %v1191 = vadd.f32 %v1117, %v1190
    %v1192 = vpop.f32.mrb[0].mxu0
    %1193 = vmatprep.mubr.f32.mxu0 0.0
    %1194 = vmatmul.mubr.f32.gmra.mrb[0].mxu0 %v719
    %v1195 = vpop.f32.mrb[0].mxu0
    %v1196 = vadd.f32 %v1117, %v1195
    %v1197 = vpop.f32.mrb[0].mxu0
    %1198 = vdwg.mxu0
    %v1199 = vmul.f32 %v826, %v1186
    %v1200 = vmul.f32 %v828, %v1191
    %v1201 = vmul.f32 %v830, %v1196
    %v1202 = vadd.f32 %v1100, %v1199
    %v1203 = vadd.f32 %v1105, %v1200
    %v1204 = vadd.f32 %v1110, %v1201
    %v1205 = vtanh.pop %v1202
    %v1206 = vtanh.pop %v1203
    %v1207 = vtanh.pop %v1204
    %v1208 = vsub.f32 1.0, %v1022
    %v1209 = vsub.f32 1.0, %v1024
    %v1210 = vsub.f32 1.0, %v1026
    %v1211 = vmul.f32 %v1208, %v1205
    %v1212 = vmul.f32 %v1209, %v1206
    %v1213 = vmul.f32 %v1210, %v1207
    %v1214 = vmul.f32 %v1022, %v485
    %v1215 = vmul.f32 %v1024, %v486
    %v1216 = vmul.f32 %v1026, %v487
    %v1217 = vadd.f32 %v1211, %v1214
    %v1218 = vadd.f32 %v1212, %v1215
    %v1219 = vadd.f32 %v1213, %v1216
    %v1220 = vld [vmem:[%s37] sm:$0xff]
    %v1221 = vld [vmem:[%s37 + $0x8] sm:$0xff]
    %v1222 = vld [vmem:[#allocation29] sm:$0x1]
    %v1224 = vlaneseq
    %v1225 = vshrl.u32 %v1224, 7
    %v1226 = vsub.s32 0, %v1225
    %v1227 = vrot.slane %v1222, %v1226
    %v1230 = vsel %vm622, %v1217, 0
    %v1233 = vsel %vm622, %v1218, 0
    %v1236 = vsel %vm622, %v1219, 0
    %1238 = vmatprep.subr.mxu0 0.0
    %1239 = vmatpush1.msra.mxu0 %v1220
    %1240 = vmatprep.subr.mxu0 0.0
    %1241 = vmatpush1.msra.mxu0 %v1221
    %1242 = vmatprep.subr.mxu0 0.0
    %1243 = vmatpush1.msra.mxu0 0.0
    %1244 = vmatprep.subr.mxu0 0.0
    %1245 = vmatpush1.msra.mxu0 0.0
    %1246 = vmatprep.subr.mxu0 0.0
    %1247 = vmatpush1.msra.mxu0 0.0
    %1248 = vmatprep.subr.mxu0 0.0
    %1249 = vmatpush1.msra.mxu0 0.0
    %1250 = vmatprep.subr.mxu0 0.0
    %1251 = vmatpush1.msra.mxu0 0.0
    %1252 = vmatprep.subr.mxu0 0.0
    %1253 = vmatpush1.msra.mxu0 0.0
    %1254 = vmatprep.subr.mxu0 0.0
    %1255 = vmatpush1.msra.mxu0 0.0
    %1256 = vmatprep.subr.mxu0 0.0
    %1257 = vmatpush1.msra.mxu0 0.0
    %1258 = vmatprep.subr.mxu0 0.0
    %1259 = vmatpush1.msra.mxu0 0.0
    %1260 = vmatprep.subr.mxu0 0.0
    %1261 = vmatpush1.msra.mxu0 0.0
    %1262 = vmatprep.subr.mxu0 0.0
    %1263 = vmatpush1.msra.mxu0 0.0
    %1264 = vmatprep.subr.mxu0 0.0
    %1265 = vmatpush1.msra.mxu0 0.0
    %1266 = vmatprep.subr.mxu0 0.0
    %1267 = vmatpush1.msra.mxu0 0.0
    %1268 = vmatprep.subr.mxu0 0.0
    %1269 = vmatpush1.msra.mxu0 0.0
    %1270 = vmatprep.subr.mxu0 0.0
    %1271 = vmatpush1.msra.mxu0 0.0
    %1272 = vmatprep.subr.mxu0 0.0
    %1273 = vmatpush1.msra.mxu0 0.0
    %1274 = vmatprep.subr.mxu0 0.0
    %1275 = vmatpush1.msra.mxu0 0.0
    %1276 = vmatprep.subr.mxu0 0.0
    %1277 = vmatpush1.msra.mxu0 0.0
    %1278 = vmatprep.subr.mxu0 0.0
    %1279 = vmatpush1.msra.mxu0 0.0
    %1280 = vmatprep.subr.mxu0 0.0
    %1281 = vmatpush1.msra.mxu0 0.0
    %1282 = vmatprep.subr.mxu0 0.0
    %1283 = vmatpush1.msra.mxu0 0.0
    %1284 = vmatprep.subr.mxu0 0.0
    %1285 = vmatpush1.msra.mxu0 0.0
    %1286 = vmatprep.subr.mxu0 0.0
    %1287 = vmatpush1.msra.mxu0 0.0
    %1288 = vmatprep.subr.mxu0 0.0
    %1289 = vmatpush1.msra.mxu0 0.0
    %1290 = vmatprep.subr.mxu0 0.0
    %1291 = vmatpush1.msra.mxu0 0.0
    %1292 = vmatprep.subr.mxu0 0.0
    %1293 = vmatpush1.msra.mxu0 0.0
    %1294 = vmatprep.subr.mxu0 0.0
    %1295 = vmatpush1.msra.mxu0 0.0
    %1296 = vmatprep.subr.mxu0 0.0
    %1297 = vmatpush1.msra.mxu0 0.0
    %1298 = vmatprep.subr.mxu0 0.0
    %1299 = vmatpush1.msra.mxu0 0.0
    %1300 = vmatprep.subr.mxu0 0.0
    %1301 = vmatpush1.msra.mxu0 0.0
    %1302 = vmatprep.mubr.f32.mxu0 0.0
    %1303 = vmatmul.mubr.f32.gmra.mrb[0].mxu0 %v1230
    %v1304 = vpop.f32.mrb[0].mxu0
    %v1305 = vadd.f32 %v1227, %v1304
    %v1306 = vpop.f32.mrb[0].mxu0
    %1307 = vmatprep.mubr.f32.mxu0 0.0
    %1308 = vmatmul.mubr.f32.gmra.mrb[0].mxu0 %v1233
    %v1309 = vpop.f32.mrb[0].mxu0
    %v1310 = vadd.f32 %v1227, %v1309
    %v1311 = vpop.f32.mrb[0].mxu0
    %1312 = vmatprep.mubr.f32.mxu0 0.0
    %1313 = vmatmul.mubr.f32.gmra.mrb[0].mxu0 %v1236
    %v1314 = vpop.f32.mrb[0].mxu0
    %v1315 = vadd.f32 %v1227, %v1314
    %v1316 = vpop.f32.mrb[0].mxu0
    %1317 = vdwg.mxu0
    %vm1318 = vcmask 64512
    %v1319 = vsel %vm1318, %v1305, 0.0
    %1320 = vadd.xlane.f32.xlu0 %v1319
    %v1321 = vpop.xlane.xlu0 %1320
    %v1322 = vsel %vm1318, %v1310, 0.0
    %1323 = vadd.xlane.f32.xlu0 %v1322
    %v1324 = vpop.xlane.xlu0 %1323
    %v1325 = vsel %vm1318, %v1315, 0.0
    %1326 = vadd.xlane.f32.xlu0 %v1325
    %v1327 = vpop.xlane.xlu0 %1326
    %vm1328 = vcmask 162816
    %v1329 = vsel %vm1328, %v479, 0.0
    %1330 = vadd.xlane.f32.xlu0 %v1329
    %v1331 = vpop.xlane.xlu0 %1330
    %v1332 = vsel %vm1328, %v480, 0.0
    %1333 = vadd.xlane.f32.xlu0 %v1332
    %v1334 = vpop.xlane.xlu0 %1333
    %v1335 = vsel %vm1328, %v481, 0.0
    %1336 = vadd.xlane.f32.xlu0 %v1335
    %v1337 = vpop.xlane.xlu0 %1336
    %v1338 = vadd.f32 %v1321, %v1331
    %v1339 = vadd.f32 %v1324, %v1334
    %v1340 = vadd.f32 %v1327, %v1337
    %v1341 = vrcp.pop 28.0
    %v1342 = vmul.f32 %v1338, %v1341
    %v1343 = vmul.f32 %v1339, %v1341
    %v1344 = vmul.f32 %v1340, %v1341
    %v1345 = vsub.f32 %v1305, %v1342
    %v1346 = vsub.f32 %v1310, %v1343
    %v1347 = vsub.f32 %v1315, %v1344
    %v1348 = vsub.f32 %v479, %v1342
    %v1349 = vsub.f32 %v480, %v1343
    %v1350 = vsub.f32 %v481, %v1344
    %v1351 = vmul.f32 %v1345, %v1345
    %v1352 = vmul.f32 %v1346, %v1346
    %v1353 = vmul.f32 %v1347, %v1347
    %v1354 = vsel %vm1318, %v1351, 0.0
    %1355 = vadd.xlane.f32.xlu0 %v1354
    %v1356 = vpop.xlane.xlu0 %1355
    %v1357 = vsel %vm1318, %v1352, 0.0
    %1358 = vadd.xlane.f32.xlu0 %v1357
    %v1359 = vpop.xlane.xlu0 %1358
    %v1360 = vsel %vm1318, %v1353, 0.0
    %1361 = vadd.xlane.f32.xlu0 %v1360
    %v1362 = vpop.xlane.xlu0 %1361
    %v1363 = vmul.f32 %v1348, %v1348
    %v1364 = vmul.f32 %v1349, %v1349
    %v1365 = vmul.f32 %v1350, %v1350
    %v1366 = vsel %vm1328, %v1363, 0.0
    %1367 = vadd.xlane.f32.xlu0 %v1366
    %v1368 = vpop.xlane.xlu0 %1367
    %v1369 = vsel %vm1328, %v1364, 0.0
    %1370 = vadd.xlane.f32.xlu0 %v1369
    %v1371 = vpop.xlane.xlu0 %1370
    %v1372 = vsel %vm1328, %v1365, 0.0
    %1373 = vadd.xlane.f32.xlu0 %v1372
    %v1374 = vpop.xlane.xlu0 %1373
    %v1375 = vadd.f32 %v1356, %v1368
    %v1376 = vadd.f32 %v1359, %v1371
    %v1377 = vadd.f32 %v1362, %v1374
    %v1378 = vmul.f32 %v1375, %v1341
    %v1379 = vmul.f32 %v1376, %v1341
    %v1380 = vmul.f32 %v1377, %v1341
    %v1381 = vadd.f32 %v1378, 1e-05
    %v1382 = vadd.f32 %v1379, 1e-05
    %v1383 = vadd.f32 %v1380, 1e-05
    %v1384 = vrsqrt.pop %v1381
    %v1385 = vrsqrt.pop %v1382
    %v1386 = vrsqrt.pop %v1383
    %v1387 = vmul.f32 %v1345, %v1384
    %v1388 = vmul.f32 %v1346, %v1385
    %v1389 = vmul.f32 %v1347, %v1386
    %v1390 = vld [vmem:[#allocation30] sm:$0x1]
    %v1392 = vlaneseq
    %v1393 = vshrl.u32 %v1392, 7
    %v1394 = vsub.s32 0, %v1393
    %v1395 = vrot.slane %v1390, %v1394
    %v1397 = vmul.f32 %v1387, %v1395
    %v1398 = vmul.f32 %v1388, %v1395
    %v1399 = vmul.f32 %v1389, %v1395
    %v1400 = vld [vmem:[#allocation32] sm:$0x1]
    %v1402 = vlaneseq
    %v1403 = vshrl.u32 %v1402, 7
    %v1404 = vsub.s32 0, %v1403
    %v1405 = vrot.slane %v1400, %v1404
    %v1407 = vadd.f32 %v1397, %v1405
    %v1408 = vadd.f32 %v1398, %v1405
    %v1409 = vadd.f32 %v1399, %v1405
    %v1410 = vmul.f32 %v1348, %v1384
    %v1411 = vmul.f32 %v1349, %v1385
    %v1412 = vmul.f32 %v1350, %v1386
    %v1413 = vld [vmem:[#allocation33] sm:$0x1]
    %v1415 = vlaneseq
    %v1416 = vshrl.u32 %v1415, 7
    %v1417 = vsub.s32 0, %v1416
    %v1418 = vrot.slane %v1413, %v1417
    %v1420 = vmul.f32 %v1410, %v1418
    %v1421 = vmul.f32 %v1411, %v1418
    %v1422 = vmul.f32 %v1412, %v1418
    %v1423 = vld [vmem:[%s47] sm:$0x1]
    %v1425 = vlaneseq
    %v1426 = vshrl.u32 %v1425, 7
    %v1427 = vsub.s32 0, %v1426
    %v1428 = vrot.slane %v1423, %v1427
    %v1430 = vadd.f32 %v1420, %v1428
    %v1431 = vadd.f32 %v1421, %v1428
    %v1432 = vadd.f32 %v1422, %v1428
    %v1433 = vld [vmem:[#allocation35] sm:$0xff]
    %v1434 = vld [vmem:[#allocation36] sm:$0xff]
    %v1435 = vld [vmem:[#allocation36 + $0x8] sm:$0xff]
    %v1436 = vld [vmem:[#allocation36 + $0x10] sm:$0xf]
    %v1438 = vsel %vm1328, %v1430, 0
    %v1441 = vsel %vm1328, %v1431, 0
    %v1444 = vsel %vm1328, %v1432, 0
    %vm1446 = vcmask 1043456
    %v1448 = vsel %vm1446, %v1436, 0
    %1450 = vmatprep.subr.mxu0 0.0
    %1451 = vmatpush1.msra.mxu0 %v1434
    %1452 = vmatprep.subr.mxu0 0.0
    %1453 = vmatpush1.msra.mxu0 %v1435
    %1454 = vmatprep.subr.mxu0 0.0
    %1455 = vmatpush1.msra.mxu0 %v1448
    %1456 = vmatprep.subr.mxu0 0.0
    %1457 = vmatpush1.msra.mxu0 0.0
    %1458 = vmatprep.subr.mxu0 0.0
    %1459 = vmatpush1.msra.mxu0 0.0
    %1460 = vmatprep.subr.mxu0 0.0
    %1461 = vmatpush1.msra.mxu0 0.0
    %1462 = vmatprep.subr.mxu0 0.0
    %1463 = vmatpush1.msra.mxu0 0.0
    %1464 = vmatprep.subr.mxu0 0.0
    %1465 = vmatpush1.msra.mxu0 0.0
    %1466 = vmatprep.subr.mxu0 0.0
    %1467 = vmatpush1.msra.mxu0 0.0
    %1468 = vmatprep.subr.mxu0 0.0
    %1469 = vmatpush1.msra.mxu0 0.0
    %1470 = vmatprep.subr.mxu0 0.0
    %1471 = vmatpush1.msra.mxu0 0.0
    %1472 = vmatprep.subr.mxu0 0.0
    %1473 = vmatpush1.msra.mxu0 0.0
    %1474 = vmatprep.subr.mxu0 0.0
    %1475 = vmatpush1.msra.mxu0 0.0
    %1476 = vmatprep.subr.mxu0 0.0
    %1477 = vmatpush1.msra.mxu0 0.0
    %1478 = vmatprep.subr.mxu0 0.0
    %1479 = vmatpush1.msra.mxu0 0.0
    %1480 = vmatprep.subr.mxu0 0.0
    %1481 = vmatpush1.msra.mxu0 0.0
    %1482 = vmatprep.subr.mxu0 0.0
    %1483 = vmatpush1.msra.mxu0 0.0
    %1484 = vmatprep.subr.mxu0 0.0
    %1485 = vmatpush1.msra.mxu0 0.0
    %1486 = vmatprep.subr.mxu0 0.0
    %1487 = vmatpush1.msra.mxu0 0.0
    %1488 = vmatprep.subr.mxu0 0.0
    %1489 = vmatpush1.msra.mxu0 0.0
    %1490 = vmatprep.subr.mxu0 0.0
    %1491 = vmatpush1.msra.mxu0 0.0
    %1492 = vmatprep.subr.mxu0 0.0
    %1493 = vmatpush1.msra.mxu0 0.0
    %1494 = vmatprep.subr.mxu0 0.0
    %1495 = vmatpush1.msra.mxu0 0.0
    %1496 = vmatprep.subr.mxu0 0.0
    %1497 = vmatpush1.msra.mxu0 0.0
    %1498 = vmatprep.subr.mxu0 0.0
    %1499 = vmatpush1.msra.mxu0 0.0
    %1500 = vmatprep.subr.mxu0 0.0
    %1501 = vmatpush1.msra.mxu0 0.0
    %1502 = vmatprep.subr.mxu0 0.0
    %1503 = vmatpush1.msra.mxu0 0.0
    %1504 = vmatprep.subr.mxu0 0.0
    %1505 = vmatpush1.msra.mxu0 0.0
    %1506 = vmatprep.subr.mxu0 0.0
    %1507 = vmatpush1.msra.mxu0 0.0
    %1508 = vmatprep.subr.mxu0 0.0
    %1509 = vmatpush1.msra.mxu0 0.0
    %1510 = vmatprep.subr.mxu0 0.0
    %1511 = vmatpush1.msra.mxu0 0.0
    %1512 = vmatprep.subr.mxu0 0.0
    %1513 = vmatpush1.msra.mxu0 0.0
    %1514 = vmatprep.mubr.f32.mxu0 0.0
    %1515 = vmatmul.mubr.f32.gmra.mrb[0].mxu0 %v1438
    %v1516 = vpop.f32.mrb[0].mxu0
    %v1517 = vadd.f32 0.0, %v1516
    %v1518 = vpop.f32.mrb[0].mxu0
    %1519 = vmatprep.mubr.f32.mxu0 0.0
    %1520 = vmatmul.mubr.f32.gmra.mrb[0].mxu0 %v1441
    %v1521 = vpop.f32.mrb[0].mxu0
    %v1522 = vadd.f32 0.0, %v1521
    %v1523 = vpop.f32.mrb[0].mxu0
    %1524 = vmatprep.mubr.f32.mxu0 0.0
    %1525 = vmatmul.mubr.f32.gmra.mrb[0].mxu0 %v1444
    %v1526 = vpop.f32.mrb[0].mxu0
    %v1527 = vadd.f32 0.0, %v1526
    %v1528 = vpop.f32.mrb[0].mxu0
    %1529 = vdwg.mxu0
    %v1531 = vsel %vm1318, %v1407, 0
    %v1534 = vsel %vm1318, %v1408, 0
    %v1537 = vsel %vm1318, %v1409, 0
    %1539 = vmatprep.subr.mxu0 0.0
    %1540 = vmatpush1.msra.mxu0 %v1433
    %1541 = vmatprep.subr.mxu0 0.0
    %1542 = vmatpush1.msra.mxu0 0.0
    %1543 = vmatprep.subr.mxu0 0.0
    %1544 = vmatpush1.msra.mxu0 0.0
    %1545 = vmatprep.subr.mxu0 0.0
    %1546 = vmatpush1.msra.mxu0 0.0
    %1547 = vmatprep.subr.mxu0 0.0
    %1548 = vmatpush1.msra.mxu0 0.0
    %1549 = vmatprep.subr.mxu0 0.0
    %1550 = vmatpush1.msra.mxu0 0.0
    %1551 = vmatprep.subr.mxu0 0.0
    %1552 = vmatpush1.msra.mxu0 0.0
    %1553 = vmatprep.subr.mxu0 0.0
    %1554 = vmatpush1.msra.mxu0 0.0
    %1555 = vmatprep.subr.mxu0 0.0
    %1556 = vmatpush1.msra.mxu0 0.0
    %1557 = vmatprep.subr.mxu0 0.0
    %1558 = vmatpush1.msra.mxu0 0.0
    %1559 = vmatprep.subr.mxu0 0.0
    %1560 = vmatpush1.msra.mxu0 0.0
    %1561 = vmatprep.subr.mxu0 0.0
    %1562 = vmatpush1.msra.mxu0 0.0
    %1563 = vmatprep.subr.mxu0 0.0
    %1564 = vmatpush1.msra.mxu0 0.0
    %1565 = vmatprep.subr.mxu0 0.0
    %1566 = vmatpush1.msra.mxu0 0.0
    %1567 = vmatprep.subr.mxu0 0.0
    %1568 = vmatpush1.msra.mxu0 0.0
    %1569 = vmatprep.subr.mxu0 0.0
    %1570 = vmatpush1.msra.mxu0 0.0
    %1571 = vmatprep.subr.mxu0 0.0
    %1572 = vmatpush1.msra.mxu0 0.0
    %1573 = vmatprep.subr.mxu0 0.0
    %1574 = vmatpush1.msra.mxu0 0.0
    %1575 = vmatprep.subr.mxu0 0.0
    %1576 = vmatpush1.msra.mxu0 0.0
    %1577 = vmatprep.subr.mxu0 0.0
    %1578 = vmatpush1.msra.mxu0 0.0
    %1579 = vmatprep.subr.mxu0 0.0
    %1580 = vmatpush1.msra.mxu0 0.0
    %1581 = vmatprep.subr.mxu0 0.0
    %1582 = vmatpush1.msra.mxu0 0.0
    %1583 = vmatprep.subr.mxu0 0.0
    %1584 = vmatpush1.msra.mxu0 0.0
    %1585 = vmatprep.subr.mxu0 0.0
    %1586 = vmatpush1.msra.mxu0 0.0
    %1587 = vmatprep.subr.mxu0 0.0
    %1588 = vmatpush1.msra.mxu0 0.0
    %1589 = vmatprep.subr.mxu0 0.0
    %1590 = vmatpush1.msra.mxu0 0.0
    %1591 = vmatprep.subr.mxu0 0.0
    %1592 = vmatpush1.msra.mxu0 0.0
    %1593 = vmatprep.subr.mxu0 0.0
    %1594 = vmatpush1.msra.mxu0 0.0
    %1595 = vmatprep.subr.mxu0 0.0
    %1596 = vmatpush1.msra.mxu0 0.0
    %1597 = vmatprep.subr.mxu0 0.0
    %1598 = vmatpush1.msra.mxu0 0.0
    %1599 = vmatprep.subr.mxu0 0.0
    %1600 = vmatpush1.msra.mxu0 0.0
    %1601 = vmatprep.subr.mxu0 0.0
    %1602 = vmatpush1.msra.mxu0 0.0
    %1603 = vmatprep.mubr.f32.mxu0 0.0
    %1604 = vmatmul.mubr.f32.gmra.mrb[0].mxu0 %v1531
    %v1605 = vpop.f32.mrb[0].mxu0
    %v1606 = vadd.f32 %v1517, %v1605
    %v1607 = vpop.f32.mrb[0].mxu0
    %1608 = vmatprep.mubr.f32.mxu0 0.0
    %1609 = vmatmul.mubr.f32.gmra.mrb[0].mxu0 %v1534
    %v1610 = vpop.f32.mrb[0].mxu0
    %v1611 = vadd.f32 %v1522, %v1610
    %v1612 = vpop.f32.mrb[0].mxu0
    %1613 = vmatprep.mubr.f32.mxu0 0.0
    %1614 = vmatmul.mubr.f32.gmra.mrb[0].mxu0 %v1537
    %v1615 = vpop.f32.mrb[0].mxu0
    %v1616 = vadd.f32 %v1527, %v1615
    %v1617 = vpop.f32.mrb[0].mxu0
    %1618 = vdwg.mxu0
    %v1619 = vld [vmem:[%s53] sm:$0x1]
    %v1621 = vlaneseq
    %v1622 = vshrl.u32 %v1621, 7
    %v1623 = vsub.s32 0, %v1622
    %v1624 = vrot.slane %v1619, %v1623
    %v1626 = vadd.f32 %v1606, %v1624
    %v1627 = vadd.f32 %v1611, %v1624
    %v1628 = vadd.f32 %v1616, %v1624
    %v1629 = vmax.f32 %v1626, 0.0
    %v1630 = vmax.f32 %v1627, 0.0
    %v1631 = vmax.f32 %v1628, 0.0
    %v1632 = vld [vmem:[%s55] sm:$0x1]
    %v1633 = vld [vmem:[%s57] sm:$0x1]
    %vm1634 = vcmask 261120
    %v1635 = vsel %vm1634, %v1629, 0.0
    %1636 = vadd.xlane.f32.xlu0 %v1635
    %v1637 = vpop.xlane.xlu0 %1636
    %v1638 = vsel %vm1634, %v1630, 0.0
    %1639 = vadd.xlane.f32.xlu0 %v1638
    %v1640 = vpop.xlane.xlu0 %1639
    %v1641 = vsel %vm1634, %v1631, 0.0
    %1642 = vadd.xlane.f32.xlu0 %v1641
    %v1643 = vpop.xlane.xlu0 %1642
    %v1644 = vrcp.pop 32.0
    %v1645 = vmul.f32 %v1637, %v1644
    %v1646 = vmul.f32 %v1640, %v1644
    %v1647 = vmul.f32 %v1643, %v1644
    %v1648 = vsub.f32 %v1629, %v1645
    %v1649 = vsub.f32 %v1630, %v1646
    %v1650 = vsub.f32 %v1631, %v1647
    %v1651 = vmul.f32 %v1648, %v1648
    %v1652 = vmul.f32 %v1649, %v1649
    %v1653 = vmul.f32 %v1650, %v1650
    %v1654 = vsel %vm1634, %v1651, 0.0
    %1655 = vadd.xlane.f32.xlu0 %v1654
    %v1656 = vpop.xlane.xlu0 %1655
    %v1657 = vsel %vm1634, %v1652, 0.0
    %1658 = vadd.xlane.f32.xlu0 %v1657
    %v1659 = vpop.xlane.xlu0 %1658
    %v1660 = vsel %vm1634, %v1653, 0.0
    %1661 = vadd.xlane.f32.xlu0 %v1660
    %v1662 = vpop.xlane.xlu0 %1661
    %v1663 = vmul.f32 %v1656, %v1644
    %v1664 = vmul.f32 %v1659, %v1644
    %v1665 = vmul.f32 %v1662, %v1644
    %v1666 = vadd.f32 %v1663, 1e-05
    %v1667 = vadd.f32 %v1664, 1e-05
    %v1668 = vadd.f32 %v1665, 1e-05
    %v1669 = vrsqrt.pop %v1666
    %v1670 = vrsqrt.pop %v1667
    %v1671 = vrsqrt.pop %v1668
    %v1672 = vmul.f32 %v1648, %v1669
    %v1673 = vmul.f32 %v1649, %v1670
    %v1674 = vmul.f32 %v1650, %v1671
    %v1676 = vlaneseq
    %v1677 = vshrl.u32 %v1676, 7
    %v1678 = vsub.s32 0, %v1677
    %v1679 = vrot.slane %v1632, %v1678
    %v1681 = vmul.f32 %v1672, %v1679
    %v1682 = vmul.f32 %v1673, %v1679
    %v1683 = vmul.f32 %v1674, %v1679
    %v1685 = vlaneseq
    %v1686 = vshrl.u32 %v1685, 7
    %v1687 = vsub.s32 0, %v1686
    %v1688 = vrot.slane %v1633, %v1687
    %v1690 = vadd.f32 %v1681, %v1688
    %v1691 = vadd.f32 %v1682, %v1688
    %v1692 = vadd.f32 %v1683, %v1688
    %v1693 = vld [vmem:[%s59] sm:$0xff]
    %v1694 = vld [vmem:[%s59 + $0x8] sm:$0xff]
    %v1695 = vld [vmem:[%s59 + $0x10] sm:$0xff]
    %v1696 = vld [vmem:[%s59 + $0x18] sm:$0xff]
    %v1697 = vld [vmem:[%s61] sm:$0x1]
    %v1699 = vlaneseq
    %v1700 = vshrl.u32 %v1699, 7
    %v1701 = vsub.s32 0, %v1700
    %v1702 = vrot.slane %v1697, %v1701
    %v1705 = vsel %vm1634, %v1690, 0
    %v1708 = vsel %vm1634, %v1691, 0
    %v1711 = vsel %vm1634, %v1692, 0
    %1713 = vmatprep.subr.mxu0 0.0
    %1714 = vmatpush1.msra.mxu0 %v1693
    %1715 = vmatprep.subr.mxu0 0.0
    %1716 = vmatpush1.msra.mxu0 %v1694
    %1717 = vmatprep.subr.mxu0 0.0
    %1718 = vmatpush1.msra.mxu0 %v1695
    %1719 = vmatprep.subr.mxu0 0.0
    %1720 = vmatpush1.msra.mxu0 %v1696
    %1721 = vmatprep.subr.mxu0 0.0
    %1722 = vmatpush1.msra.mxu0 0.0
    %1723 = vmatprep.subr.mxu0 0.0
    %1724 = vmatpush1.msra.mxu0 0.0
    %1725 = vmatprep.subr.mxu0 0.0
    %1726 = vmatpush1.msra.mxu0 0.0
    %1727 = vmatprep.subr.mxu0 0.0
    %1728 = vmatpush1.msra.mxu0 0.0
    %1729 = vmatprep.subr.mxu0 0.0
    %1730 = vmatpush1.msra.mxu0 0.0
    %1731 = vmatprep.subr.mxu0 0.0
    %1732 = vmatpush1.msra.mxu0 0.0
    %1733 = vmatprep.subr.mxu0 0.0
    %1734 = vmatpush1.msra.mxu0 0.0
    %1735 = vmatprep.subr.mxu0 0.0
    %1736 = vmatpush1.msra.mxu0 0.0
    %1737 = vmatprep.subr.mxu0 0.0
    %1738 = vmatpush1.msra.mxu0 0.0
    %1739 = vmatprep.subr.mxu0 0.0
    %1740 = vmatpush1.msra.mxu0 0.0
    %1741 = vmatprep.subr.mxu0 0.0
    %1742 = vmatpush1.msra.mxu0 0.0
    %1743 = vmatprep.subr.mxu0 0.0
    %1744 = vmatpush1.msra.mxu0 0.0
    %1745 = vmatprep.subr.mxu0 0.0
    %1746 = vmatpush1.msra.mxu0 0.0
    %1747 = vmatprep.subr.mxu0 0.0
    %1748 = vmatpush1.msra.mxu0 0.0
    %1749 = vmatprep.subr.mxu0 0.0
    %1750 = vmatpush1.msra.mxu0 0.0
    %1751 = vmatprep.subr.mxu0 0.0
    %1752 = vmatpush1.msra.mxu0 0.0
    %1753 = vmatprep.subr.mxu0 0.0
    %1754 = vmatpush1.msra.mxu0 0.0
    %1755 = vmatprep.subr.mxu0 0.0
    %1756 = vmatpush1.msra.mxu0 0.0
    %1757 = vmatprep.subr.mxu0 0.0
    %1758 = vmatpush1.msra.mxu0 0.0
    %1759 = vmatprep.subr.mxu0 0.0
    %1760 = vmatpush1.msra.mxu0 0.0
    %1761 = vmatprep.subr.mxu0 0.0
    %1762 = vmatpush1.msra.mxu0 0.0
    %1763 = vmatprep.subr.mxu0 0.0
    %1764 = vmatpush1.msra.mxu0 0.0
    %1765 = vmatprep.subr.mxu0 0.0
    %1766 = vmatpush1.msra.mxu0 0.0
    %1767 = vmatprep.subr.mxu0 0.0
    %1768 = vmatpush1.msra.mxu0 0.0
    %1769 = vmatprep.subr.mxu0 0.0
    %1770 = vmatpush1.msra.mxu0 0.0
    %1771 = vmatprep.subr.mxu0 0.0
    %1772 = vmatpush1.msra.mxu0 0.0
    %1773 = vmatprep.subr.mxu0 0.0
    %1774 = vmatpush1.msra.mxu0 0.0
    %1775 = vmatprep.subr.mxu0 0.0
    %1776 = vmatpush1.msra.mxu0 0.0
    %1777 = vmatprep.mubr.f32.mxu0 0.0
    %1778 = vmatmul.mubr.f32.gmra.mrb[0].mxu0 %v1705
    %v1779 = vpop.f32.mrb[0].mxu0
    %v1780 = vadd.f32 %v1702, %v1779
    %v1781 = vpop.f32.mrb[0].mxu0
    %1782 = vmatprep.mubr.f32.mxu0 0.0
    %1783 = vmatmul.mubr.f32.gmra.mrb[0].mxu0 %v1708
    %v1784 = vpop.f32.mrb[0].mxu0
    %v1785 = vadd.f32 %v1702, %v1784
    %v1786 = vpop.f32.mrb[0].mxu0
    %1787 = vmatprep.mubr.f32.mxu0 0.0
    %1788 = vmatmul.mubr.f32.gmra.mrb[0].mxu0 %v1711
    %v1789 = vpop.f32.mrb[0].mxu0
    %v1790 = vadd.f32 %v1702, %v1789
    %v1791 = vpop.f32.mrb[0].mxu0
    %1792 = vdwg.mxu0
    %v1793 = vmax.f32 %v1780, 0.0
    %v1794 = vmax.f32 %v1785, 0.0
    %v1795 = vmax.f32 %v1790, 0.0
    %v1796 = vld [vmem:[%s63] sm:$0x1]
    %v1797 = vld [vmem:[%s65] sm:$0x1]
    %v1798 = vsel %vm1634, %v1793, 0.0
    %1799 = vadd.xlane.f32.xlu0 %v1798
    %v1800 = vpop.xlane.xlu0 %1799
    %v1801 = vsel %vm1634, %v1794, 0.0
    %1802 = vadd.xlane.f32.xlu0 %v1801
    %v1803 = vpop.xlane.xlu0 %1802
    %v1804 = vsel %vm1634, %v1795, 0.0
    %1805 = vadd.xlane.f32.xlu0 %v1804
    %v1806 = vpop.xlane.xlu0 %1805
    %v1807 = vmul.f32 %v1800, %v1644
    %v1808 = vmul.f32 %v1803, %v1644
    %v1809 = vmul.f32 %v1806, %v1644
    %v1810 = vsub.f32 %v1793, %v1807
    %v1811 = vsub.f32 %v1794, %v1808
    %v1812 = vsub.f32 %v1795, %v1809
    %v1813 = vmul.f32 %v1810, %v1810
    %v1814 = vmul.f32 %v1811, %v1811
    %v1815 = vmul.f32 %v1812, %v1812
    %v1816 = vsel %vm1634, %v1813, 0.0
    %1817 = vadd.xlane.f32.xlu0 %v1816
    %v1818 = vpop.xlane.xlu0 %1817
    %v1819 = vsel %vm1634, %v1814, 0.0
    %1820 = vadd.xlane.f32.xlu0 %v1819
    %v1821 = vpop.xlane.xlu0 %1820
    %v1822 = vsel %vm1634, %v1815, 0.0
    %1823 = vadd.xlane.f32.xlu0 %v1822
    %v1824 = vpop.xlane.xlu0 %1823
    %v1825 = vmul.f32 %v1818, %v1644
    %v1826 = vmul.f32 %v1821, %v1644
    %v1827 = vmul.f32 %v1824, %v1644
    %v1828 = vadd.f32 %v1825, 1e-05
    %v1829 = vadd.f32 %v1826, 1e-05
    %v1830 = vadd.f32 %v1827, 1e-05
    %v1831 = vrsqrt.pop %v1828
    %v1832 = vrsqrt.pop %v1829
    %v1833 = vrsqrt.pop %v1830
    %v1834 = vmul.f32 %v1810, %v1831
    %v1835 = vmul.f32 %v1811, %v1832
    %v1836 = vmul.f32 %v1812, %v1833
    %v1838 = vlaneseq
    %v1839 = vshrl.u32 %v1838, 7
    %v1840 = vsub.s32 0, %v1839
    %v1841 = vrot.slane %v1796, %v1840
    %v1843 = vmul.f32 %v1834, %v1841
    %v1844 = vmul.f32 %v1835, %v1841
    %v1845 = vmul.f32 %v1836, %v1841
    %v1847 = vlaneseq
    %v1848 = vshrl.u32 %v1847, 7
    %v1849 = vsub.s32 0, %v1848
    %v1850 = vrot.slane %v1797, %v1849
    %v1852 = vadd.f32 %v1843, %v1850
    %v1853 = vadd.f32 %v1844, %v1850
    %v1854 = vadd.f32 %v1845, %v1850
    %v1855 = vld [vmem:[%s67] sm:$0xff]
    %v1856 = vld [vmem:[%s67 + $0x8] sm:$0xff]
    %v1857 = vld [vmem:[%s67 + $0x10] sm:$0xff]
    %v1858 = vld [vmem:[%s67 + $0x18] sm:$0xff]
    %v1859 = vld [vmem:[%s69] sm:$0xff]
    %v1860 = vld [vmem:[%s69 + $0x8] sm:$0xff]
    %v1861 = vld [vmem:[%s69 + $0x10] sm:$0xff]
    %v1862 = vld [vmem:[%s69 + $0x18] sm:$0xff]
    %v1863 = vld [vmem:[%s71] sm:$0xff]
    %v1864 = vld [vmem:[%s71 + $0x8] sm:$0xff]
    %v1865 = vld [vmem:[%s71 + $0x10] sm:$0xff]
    %v1866 = vld [vmem:[%s71 + $0x18] sm:$0xff]
    %v1867 = vld [vmem:[%s73] sm:$0xff]
    %v1868 = vld [vmem:[%s73 + $0x8] sm:$0xff]
    %v1869 = vld [vmem:[%s73 + $0x10] sm:$0xff]
    %v1870 = vld [vmem:[%s73 + $0x18] sm:$0xff]
    %v1871 = vld [vmem:[%s75] sm:$0xff]
    %v1872 = vld [vmem:[%s75 + $0x8] sm:$0xff]
    %v1873 = vld [vmem:[%s75 + $0x10] sm:$0xff]
    %v1874 = vld [vmem:[%s75 + $0x18] sm:$0xff]
    %v1875 = vld [vmem:[%s77] sm:$0xff]
    %v1876 = vld [vmem:[%s77 + $0x8] sm:$0xff]
    %v1877 = vld [vmem:[%s77 + $0x10] sm:$0xff]
    %v1878 = vld [vmem:[%s77 + $0x18] sm:$0xff]
    %v1879 = vld [vmem:[%s79] sm:$0x1]
    %v1880 = vld [vmem:[%s81] sm:$0x1]
    %v1881 = vld [vmem:[%s83] sm:$0x1]
    %v1882 = vld [vmem:[%s85] sm:$0x1]
    %v1883 = vld [vmem:[%s87] sm:$0x1]
    %v1884 = vld [vmem:[%s89] sm:$0x1]
    %v1886 = vlaneseq
    %v1887 = vshrl.u32 %v1886, 7
    %v1888 = vsub.s32 0, %v1887
    %v1889 = vrot.slane %v1879, %v1888
    %v1892 = vsel %vm1634, %v1852, 0
    %v1895 = vsel %vm1634, %v1853, 0
    %v1898 = vsel %vm1634, %v1854, 0
    %1900 = vmatprep.subr.mxu0 0.0
    %1901 = vmatpush1.msra.mxu0 %v1855
    %1902 = vmatprep.subr.mxu0 0.0
    %1903 = vmatpush1.msra.mxu0 %v1856
    %1904 = vmatprep.subr.mxu0 0.0
    %1905 = vmatpush1.msra.mxu0 %v1857
    %1906 = vmatprep.subr.mxu0 0.0
    %1907 = vmatpush1.msra.mxu0 %v1858
    %1908 = vmatprep.subr.mxu0 0.0
    %1909 = vmatpush1.msra.mxu0 0.0
    %1910 = vmatprep.subr.mxu0 0.0
    %1911 = vmatpush1.msra.mxu0 0.0
    %1912 = vmatprep.subr.mxu0 0.0
    %1913 = vmatpush1.msra.mxu0 0.0
    %1914 = vmatprep.subr.mxu0 0.0
    %1915 = vmatpush1.msra.mxu0 0.0
    %1916 = vmatprep.subr.mxu0 0.0
    %1917 = vmatpush1.msra.mxu0 0.0
    %1918 = vmatprep.subr.mxu0 0.0
    %1919 = vmatpush1.msra.mxu0 0.0
    %1920 = vmatprep.subr.mxu0 0.0
    %1921 = vmatpush1.msra.mxu0 0.0
    %1922 = vmatprep.subr.mxu0 0.0
    %1923 = vmatpush1.msra.mxu0 0.0
    %1924 = vmatprep.subr.mxu0 0.0
    %1925 = vmatpush1.msra.mxu0 0.0
    %1926 = vmatprep.subr.mxu0 0.0
    %1927 = vmatpush1.msra.mxu0 0.0
    %1928 = vmatprep.subr.mxu0 0.0
    %1929 = vmatpush1.msra.mxu0 0.0
    %1930 = vmatprep.subr.mxu0 0.0
    %1931 = vmatpush1.msra.mxu0 0.0
    %1932 = vmatprep.subr.mxu0 0.0
    %1933 = vmatpush1.msra.mxu0 0.0
    %1934 = vmatprep.subr.mxu0 0.0
    %1935 = vmatpush1.msra.mxu0 0.0
    %1936 = vmatprep.subr.mxu0 0.0
    %1937 = vmatpush1.msra.mxu0 0.0
    %1938 = vmatprep.subr.mxu0 0.0
    %1939 = vmatpush1.msra.mxu0 0.0
    %1940 = vmatprep.subr.mxu0 0.0
    %1941 = vmatpush1.msra.mxu0 0.0
    %1942 = vmatprep.subr.mxu0 0.0
    %1943 = vmatpush1.msra.mxu0 0.0
    %1944 = vmatprep.subr.mxu0 0.0
    %1945 = vmatpush1.msra.mxu0 0.0
    %1946 = vmatprep.subr.mxu0 0.0
    %1947 = vmatpush1.msra.mxu0 0.0
    %1948 = vmatprep.subr.mxu0 0.0
    %1949 = vmatpush1.msra.mxu0 0.0
    %1950 = vmatprep.subr.mxu0 0.0
    %1951 = vmatpush1.msra.mxu0 0.0
    %1952 = vmatprep.subr.mxu0 0.0
    %1953 = vmatpush1.msra.mxu0 0.0
    %1954 = vmatprep.subr.mxu0 0.0
    %1955 = vmatpush1.msra.mxu0 0.0
    %1956 = vmatprep.subr.mxu0 0.0
    %1957 = vmatpush1.msra.mxu0 0.0
    %1958 = vmatprep.subr.mxu0 0.0
    %1959 = vmatpush1.msra.mxu0 0.0
    %1960 = vmatprep.subr.mxu0 0.0
    %1961 = vmatpush1.msra.mxu0 0.0
    %1962 = vmatprep.subr.mxu0 0.0
    %1963 = vmatpush1.msra.mxu0 0.0
    %1964 = vmatprep.mubr.f32.mxu0 0.0
    %1965 = vmatmul.mubr.f32.gmra.mrb[0].mxu0 %v1892
    %v1966 = vpop.f32.mrb[0].mxu0
    %v1967 = vadd.f32 %v1889, %v1966
    %v1968 = vpop.f32.mrb[0].mxu0
    %1969 = vmatprep.mubr.f32.mxu0 0.0
    %1970 = vmatmul.mubr.f32.gmra.mrb[0].mxu0 %v1895
    %v1971 = vpop.f32.mrb[0].mxu0
    %v1972 = vadd.f32 %v1889, %v1971
    %v1973 = vpop.f32.mrb[0].mxu0
    %1974 = vmatprep.mubr.f32.mxu0 0.0
    %1975 = vmatmul.mubr.f32.gmra.mrb[0].mxu0 %v1898
    %v1976 = vpop.f32.mrb[0].mxu0
    %v1977 = vadd.f32 %v1889, %v1976
    %v1978 = vpop.f32.mrb[0].mxu0
    %1979 = vdwg.mxu0
    %v1981 = vsel %vm1634, %v488, 0
    %v1984 = vsel %vm1634, %v489, 0
    %v1987 = vsel %vm1634, %v490, 0
    %1989 = vmatprep.subr.mxu0 0.0
    %1990 = vmatpush1.msra.mxu0 %v1867
    %1991 = vmatprep.subr.mxu0 0.0
    %1992 = vmatpush1.msra.mxu0 %v1868
    %1993 = vmatprep.subr.mxu0 0.0
    %1994 = vmatpush1.msra.mxu0 %v1869
    %1995 = vmatprep.subr.mxu0 0.0
    %1996 = vmatpush1.msra.mxu0 %v1870
    %1997 = vmatprep.subr.mxu0 0.0
    %1998 = vmatpush1.msra.mxu0 0.0
    %1999 = vmatprep.subr.mxu0 0.0
    %2000 = vmatpush1.msra.mxu0 0.0
    %2001 = vmatprep.subr.mxu0 0.0
    %2002 = vmatpush1.msra.mxu0 0.0
    %2003 = vmatprep.subr.mxu0 0.0
    %2004 = vmatpush1.msra.mxu0 0.0
    %2005 = vmatprep.subr.mxu0 0.0
    %2006 = vmatpush1.msra.mxu0 0.0
    %2007 = vmatprep.subr.mxu0 0.0
    %2008 = vmatpush1.msra.mxu0 0.0
    %2009 = vmatprep.subr.mxu0 0.0
    %2010 = vmatpush1.msra.mxu0 0.0
    %2011 = vmatprep.subr.mxu0 0.0
    %2012 = vmatpush1.msra.mxu0 0.0
    %2013 = vmatprep.subr.mxu0 0.0
    %2014 = vmatpush1.msra.mxu0 0.0
    %2015 = vmatprep.subr.mxu0 0.0
    %2016 = vmatpush1.msra.mxu0 0.0
    %2017 = vmatprep.subr.mxu0 0.0
    %2018 = vmatpush1.msra.mxu0 0.0
    %2019 = vmatprep.subr.mxu0 0.0
    %2020 = vmatpush1.msra.mxu0 0.0
    %2021 = vmatprep.subr.mxu0 0.0
    %2022 = vmatpush1.msra.mxu0 0.0
    %2023 = vmatprep.subr.mxu0 0.0
    %2024 = vmatpush1.msra.mxu0 0.0
    %2025 = vmatprep.subr.mxu0 0.0
    %2026 = vmatpush1.msra.mxu0 0.0
    %2027 = vmatprep.subr.mxu0 0.0
    %2028 = vmatpush1.msra.mxu0 0.0
    %2029 = vmatprep.subr.mxu0 0.0
    %2030 = vmatpush1.msra.mxu0 0.0
    %2031 = vmatprep.subr.mxu0 0.0
    %2032 = vmatpush1.msra.mxu0 0.0
    %2033 = vmatprep.subr.mxu0 0.0
    %2034 = vmatpush1.msra.mxu0 0.0
    %2035 = vmatprep.subr.mxu0 0.0
    %2036 = vmatpush1.msra.mxu0 0.0
    %2037 = vmatprep.subr.mxu0 0.0
    %2038 = vmatpush1.msra.mxu0 0.0
    %2039 = vmatprep.subr.mxu0 0.0
    %2040 = vmatpush1.msra.mxu0 0.0
    %2041 = vmatprep.subr.mxu0 0.0
    %2042 = vmatpush1.msra.mxu0 0.0
    %2043 = vmatprep.subr.mxu0 0.0
    %2044 = vmatpush1.msra.mxu0 0.0
    %2045 = vmatprep.subr.mxu0 0.0
    %2046 = vmatpush1.msra.mxu0 0.0
    %2047 = vmatprep.subr.mxu0 0.0
    %2048 = vmatpush1.msra.mxu0 0.0
    %2049 = vmatprep.subr.mxu0 0.0
    %2050 = vmatpush1.msra.mxu0 0.0
    %2051 = vmatprep.subr.mxu0 0.0
    %2052 = vmatpush1.msra.mxu0 0.0
    %2053 = vmatprep.mubr.f32.mxu0 0.0
    %2054 = vmatmul.mubr.f32.gmra.mrb[0].mxu0 %v1981
    %v2055 = vpop.f32.mrb[0].mxu0
    %v2056 = vadd.f32 0.0, %v2055
    %v2057 = vpop.f32.mrb[0].mxu0
    %2058 = vmatprep.mubr.f32.mxu0 0.0
    %2059 = vmatmul.mubr.f32.gmra.mrb[0].mxu0 %v1984
    %v2060 = vpop.f32.mrb[0].mxu0
    %v2061 = vadd.f32 0.0, %v2060
    %v2062 = vpop.f32.mrb[0].mxu0
    %2063 = vmatprep.mubr.f32.mxu0 0.0
    %2064 = vmatmul.mubr.f32.gmra.mrb[0].mxu0 %v1987
    %v2065 = vpop.f32.mrb[0].mxu0
    %v2066 = vadd.f32 0.0, %v2065
    %v2067 = vpop.f32.mrb[0].mxu0
    %2068 = vdwg.mxu0
    %v2069 = vadd.f32 %v1967, %v2056
    %v2070 = vadd.f32 %v1972, %v2061
    %v2071 = vadd.f32 %v1977, %v2066
    %v2073 = vlaneseq
    %v2074 = vshrl.u32 %v2073, 7
    %v2075 = vsub.s32 0, %v2074
    %v2076 = vrot.slane %v1882, %v2075
    %v2078 = vadd.f32 %v2069, %v2076
    %v2079 = vadd.f32 %v2070, %v2076
    %v2080 = vadd.f32 %v2071, %v2076
    %v2081 = vxor.u32 %v2078, 2147483648
    %v2082 = vxor.u32 %v2079, 2147483648
    %v2083 = vxor.u32 %v2080, 2147483648
    %v2084 = vmul.f32 %v2081, 1.442695
    %v2085 = vpow.pop %v2084
    %v2086 = vmul.f32 %v2082, 1.442695
    %v2087 = vpow.pop %v2086
    %v2088 = vmul.f32 %v2083, 1.442695
    %v2089 = vpow.pop %v2088
    %v2090 = vadd.f32 %v2085, 1.0
    %v2091 = vadd.f32 %v2087, 1.0
    %v2092 = vadd.f32 %v2089, 1.0
    %v2093 = vrcp.pop %v2090
    %v2094 = vmul.f32 1.0, %v2093
    %v2095 = vrcp.pop %v2091
    %v2096 = vmul.f32 1.0, %v2095
    %v2097 = vrcp.pop %v2092
    %v2098 = vmul.f32 1.0, %v2097
    %v2100 = vlaneseq
    %v2101 = vshrl.u32 %v2100, 7
    %v2102 = vsub.s32 0, %v2101
    %v2103 = vrot.slane %v1880, %v2102
    %2105 = vmatprep.subr.mxu0 0.0
    %2106 = vmatpush1.msra.mxu0 %v1859
    %2107 = vmatprep.subr.mxu0 0.0
    %2108 = vmatpush1.msra.mxu0 %v1860
    %2109 = vmatprep.subr.mxu0 0.0
    %2110 = vmatpush1.msra.mxu0 %v1861
    %2111 = vmatprep.subr.mxu0 0.0
    %2112 = vmatpush1.msra.mxu0 %v1862
    %2113 = vmatprep.subr.mxu0 0.0
    %2114 = vmatpush1.msra.mxu0 0.0
    %2115 = vmatprep.subr.mxu0 0.0
    %2116 = vmatpush1.msra.mxu0 0.0
    %2117 = vmatprep.subr.mxu0 0.0
    %2118 = vmatpush1.msra.mxu0 0.0
    %2119 = vmatprep.subr.mxu0 0.0
    %2120 = vmatpush1.msra.mxu0 0.0
    %2121 = vmatprep.subr.mxu0 0.0
    %2122 = vmatpush1.msra.mxu0 0.0
    %2123 = vmatprep.subr.mxu0 0.0
    %2124 = vmatpush1.msra.mxu0 0.0
    %2125 = vmatprep.subr.mxu0 0.0
    %2126 = vmatpush1.msra.mxu0 0.0
    %2127 = vmatprep.subr.mxu0 0.0
    %2128 = vmatpush1.msra.mxu0 0.0
    %2129 = vmatprep.subr.mxu0 0.0
    %2130 = vmatpush1.msra.mxu0 0.0
    %2131 = vmatprep.subr.mxu0 0.0
    %2132 = vmatpush1.msra.mxu0 0.0
    %2133 = vmatprep.subr.mxu0 0.0
    %2134 = vmatpush1.msra.mxu0 0.0
    %2135 = vmatprep.subr.mxu0 0.0
    %2136 = vmatpush1.msra.mxu0 0.0
    %2137 = vmatprep.subr.mxu0 0.0
    %2138 = vmatpush1.msra.mxu0 0.0
    %2139 = vmatprep.subr.mxu0 0.0
    %2140 = vmatpush1.msra.mxu0 0.0
    %2141 = vmatprep.subr.mxu0 0.0
    %2142 = vmatpush1.msra.mxu0 0.0
    %2143 = vmatprep.subr.mxu0 0.0
    %2144 = vmatpush1.msra.mxu0 0.0
    %2145 = vmatprep.subr.mxu0 0.0
    %2146 = vmatpush1.msra.mxu0 0.0
    %2147 = vmatprep.subr.mxu0 0.0
    %2148 = vmatpush1.msra.mxu0 0.0
    %2149 = vmatprep.subr.mxu0 0.0
    %2150 = vmatpush1.msra.mxu0 0.0
    %2151 = vmatprep.subr.mxu0 0.0
    %2152 = vmatpush1.msra.mxu0 0.0
    %2153 = vmatprep.subr.mxu0 0.0
    %2154 = vmatpush1.msra.mxu0 0.0
    %2155 = vmatprep.subr.mxu0 0.0
    %2156 = vmatpush1.msra.mxu0 0.0
    %2157 = vmatprep.subr.mxu0 0.0
    %2158 = vmatpush1.msra.mxu0 0.0
    %2159 = vmatprep.subr.mxu0 0.0
    %2160 = vmatpush1.msra.mxu0 0.0
    %2161 = vmatprep.subr.mxu0 0.0
    %2162 = vmatpush1.msra.mxu0 0.0
    %2163 = vmatprep.subr.mxu0 0.0
    %2164 = vmatpush1.msra.mxu0 0.0
    %2165 = vmatprep.subr.mxu0 0.0
    %2166 = vmatpush1.msra.mxu0 0.0
    %2167 = vmatprep.subr.mxu0 0.0
    %2168 = vmatpush1.msra.mxu0 0.0
    %2169 = vmatprep.mubr.f32.mxu0 0.0
    %2170 = vmatmul.mubr.f32.gmra.mrb[0].mxu0 %v1892
    %v2171 = vpop.f32.mrb[0].mxu0
    %v2172 = vadd.f32 %v2103, %v2171
    %v2173 = vpop.f32.mrb[0].mxu0
    %2174 = vmatprep.mubr.f32.mxu0 0.0
    %2175 = vmatmul.mubr.f32.gmra.mrb[0].mxu0 %v1895
    %v2176 = vpop.f32.mrb[0].mxu0
    %v2177 = vadd.f32 %v2103, %v2176
    %v2178 = vpop.f32.mrb[0].mxu0
    %2179 = vmatprep.mubr.f32.mxu0 0.0
    %2180 = vmatmul.mubr.f32.gmra.mrb[0].mxu0 %v1898
    %v2181 = vpop.f32.mrb[0].mxu0
    %v2182 = vadd.f32 %v2103, %v2181
    %v2183 = vpop.f32.mrb[0].mxu0
    %2184 = vdwg.mxu0
    %2185 = vmatprep.subr.mxu0 0.0
    %2186 = vmatpush1.msra.mxu0 %v1871
    %2187 = vmatprep.subr.mxu0 0.0
    %2188 = vmatpush1.msra.mxu0 %v1872
    %2189 = vmatprep.subr.mxu0 0.0
    %2190 = vmatpush1.msra.mxu0 %v1873
    %2191 = vmatprep.subr.mxu0 0.0
    %2192 = vmatpush1.msra.mxu0 %v1874
    %2193 = vmatprep.subr.mxu0 0.0
    %2194 = vmatpush1.msra.mxu0 0.0
    %2195 = vmatprep.subr.mxu0 0.0
    %2196 = vmatpush1.msra.mxu0 0.0
    %2197 = vmatprep.subr.mxu0 0.0
    %2198 = vmatpush1.msra.mxu0 0.0
    %2199 = vmatprep.subr.mxu0 0.0
    %2200 = vmatpush1.msra.mxu0 0.0
    %2201 = vmatprep.subr.mxu0 0.0
    %2202 = vmatpush1.msra.mxu0 0.0
    %2203 = vmatprep.subr.mxu0 0.0
    %2204 = vmatpush1.msra.mxu0 0.0
    %2205 = vmatprep.subr.mxu0 0.0
    %2206 = vmatpush1.msra.mxu0 0.0
    %2207 = vmatprep.subr.mxu0 0.0
    %2208 = vmatpush1.msra.mxu0 0.0
    %2209 = vmatprep.subr.mxu0 0.0
    %2210 = vmatpush1.msra.mxu0 0.0
    %2211 = vmatprep.subr.mxu0 0.0
    %2212 = vmatpush1.msra.mxu0 0.0
    %2213 = vmatprep.subr.mxu0 0.0
    %2214 = vmatpush1.msra.mxu0 0.0
    %2215 = vmatprep.subr.mxu0 0.0
    %2216 = vmatpush1.msra.mxu0 0.0
    %2217 = vmatprep.subr.mxu0 0.0
    %2218 = vmatpush1.msra.mxu0 0.0
    %2219 = vmatprep.subr.mxu0 0.0
    %2220 = vmatpush1.msra.mxu0 0.0
    %2221 = vmatprep.subr.mxu0 0.0
    %2222 = vmatpush1.msra.mxu0 0.0
    %2223 = vmatprep.subr.mxu0 0.0
    %2224 = vmatpush1.msra.mxu0 0.0
    %2225 = vmatprep.subr.mxu0 0.0
    %2226 = vmatpush1.msra.mxu0 0.0
    %2227 = vmatprep.subr.mxu0 0.0
    %2228 = vmatpush1.msra.mxu0 0.0
    %2229 = vmatprep.subr.mxu0 0.0
    %2230 = vmatpush1.msra.mxu0 0.0
    %2231 = vmatprep.subr.mxu0 0.0
    %2232 = vmatpush1.msra.mxu0 0.0
    %2233 = vmatprep.subr.mxu0 0.0
    %2234 = vmatpush1.msra.mxu0 0.0
    %2235 = vmatprep.subr.mxu0 0.0
    %2236 = vmatpush1.msra.mxu0 0.0
    %2237 = vmatprep.subr.mxu0 0.0
    %2238 = vmatpush1.msra.mxu0 0.0
    %2239 = vmatprep.subr.mxu0 0.0
    %2240 = vmatpush1.msra.mxu0 0.0
    %2241 = vmatprep.subr.mxu0 0.0
    %2242 = vmatpush1.msra.mxu0 0.0
    %2243 = vmatprep.subr.mxu0 0.0
    %2244 = vmatpush1.msra.mxu0 0.0
    %2245 = vmatprep.subr.mxu0 0.0
    %2246 = vmatpush1.msra.mxu0 0.0
    %2247 = vmatprep.subr.mxu0 0.0
    %2248 = vmatpush1.msra.mxu0 0.0
    %2249 = vmatprep.mubr.f32.mxu0 0.0
    %2250 = vmatmul.mubr.f32.gmra.mrb[0].mxu0 %v1981
    %v2251 = vpop.f32.mrb[0].mxu0
    %v2252 = vadd.f32 0.0, %v2251
    %v2253 = vpop.f32.mrb[0].mxu0
    %2254 = vmatprep.mubr.f32.mxu0 0.0
    %2255 = vmatmul.mubr.f32.gmra.mrb[0].mxu0 %v1984
    %v2256 = vpop.f32.mrb[0].mxu0
    %v2257 = vadd.f32 0.0, %v2256
    %v2258 = vpop.f32.mrb[0].mxu0
    %2259 = vmatprep.mubr.f32.mxu0 0.0
    %2260 = vmatmul.mubr.f32.gmra.mrb[0].mxu0 %v1987
    %v2261 = vpop.f32.mrb[0].mxu0
    %v2262 = vadd.f32 0.0, %v2261
    %v2263 = vpop.f32.mrb[0].mxu0
    %2264 = vdwg.mxu0
    %v2265 = vadd.f32 %v2172, %v2252
    %v2266 = vadd.f32 %v2177, %v2257
    %v2267 = vadd.f32 %v2182, %v2262
    %v2269 = vlaneseq
    %v2270 = vshrl.u32 %v2269, 7
    %v2271 = vsub.s32 0, %v2270
    %v2272 = vrot.slane %v1883, %v2271
    %v2274 = vadd.f32 %v2265, %v2272
    %v2275 = vadd.f32 %v2266, %v2272
    %v2276 = vadd.f32 %v2267, %v2272
    %v2277 = vxor.u32 %v2274, 2147483648
    %v2278 = vxor.u32 %v2275, 2147483648
    %v2279 = vxor.u32 %v2276, 2147483648
    %v2280 = vmul.f32 %v2277, 1.442695
    %v2281 = vpow.pop %v2280
    %v2282 = vmul.f32 %v2278, 1.442695
    %v2283 = vpow.pop %v2282
    %v2284 = vmul.f32 %v2279, 1.442695
    %v2285 = vpow.pop %v2284
    %v2286 = vadd.f32 %v2281, 1.0
    %v2287 = vadd.f32 %v2283, 1.0
    %v2288 = vadd.f32 %v2285, 1.0
    %v2289 = vrcp.pop %v2286
    %v2290 = vmul.f32 1.0, %v2289
    %v2291 = vrcp.pop %v2287
    %v2292 = vmul.f32 1.0, %v2291
    %v2293 = vrcp.pop %v2288
    %v2294 = vmul.f32 1.0, %v2293
    %v2296 = vlaneseq
    %v2297 = vshrl.u32 %v2296, 7
    %v2298 = vsub.s32 0, %v2297
    %v2299 = vrot.slane %v1881, %v2298
    %2301 = vmatprep.subr.mxu0 0.0
    %2302 = vmatpush1.msra.mxu0 %v1863
    %2303 = vmatprep.subr.mxu0 0.0
    %2304 = vmatpush1.msra.mxu0 %v1864
    %2305 = vmatprep.subr.mxu0 0.0
    %2306 = vmatpush1.msra.mxu0 %v1865
    %2307 = vmatprep.subr.mxu0 0.0
    %2308 = vmatpush1.msra.mxu0 %v1866
    %2309 = vmatprep.subr.mxu0 0.0
    %2310 = vmatpush1.msra.mxu0 0.0
    %2311 = vmatprep.subr.mxu0 0.0
    %2312 = vmatpush1.msra.mxu0 0.0
    %2313 = vmatprep.subr.mxu0 0.0
    %2314 = vmatpush1.msra.mxu0 0.0
    %2315 = vmatprep.subr.mxu0 0.0
    %2316 = vmatpush1.msra.mxu0 0.0
    %2317 = vmatprep.subr.mxu0 0.0
    %2318 = vmatpush1.msra.mxu0 0.0
    %2319 = vmatprep.subr.mxu0 0.0
    %2320 = vmatpush1.msra.mxu0 0.0
    %2321 = vmatprep.subr.mxu0 0.0
    %2322 = vmatpush1.msra.mxu0 0.0
    %2323 = vmatprep.subr.mxu0 0.0
    %2324 = vmatpush1.msra.mxu0 0.0
    %2325 = vmatprep.subr.mxu0 0.0
    %2326 = vmatpush1.msra.mxu0 0.0
    %2327 = vmatprep.subr.mxu0 0.0
    %2328 = vmatpush1.msra.mxu0 0.0
    %2329 = vmatprep.subr.mxu0 0.0
    %2330 = vmatpush1.msra.mxu0 0.0
    %2331 = vmatprep.subr.mxu0 0.0
    %2332 = vmatpush1.msra.mxu0 0.0
    %2333 = vmatprep.subr.mxu0 0.0
    %2334 = vmatpush1.msra.mxu0 0.0
    %2335 = vmatprep.subr.mxu0 0.0
    %2336 = vmatpush1.msra.mxu0 0.0
    %2337 = vmatprep.subr.mxu0 0.0
    %2338 = vmatpush1.msra.mxu0 0.0
    %2339 = vmatprep.subr.mxu0 0.0
    %2340 = vmatpush1.msra.mxu0 0.0
    %2341 = vmatprep.subr.mxu0 0.0
    %2342 = vmatpush1.msra.mxu0 0.0
    %2343 = vmatprep.subr.mxu0 0.0
    %2344 = vmatpush1.msra.mxu0 0.0
    %2345 = vmatprep.subr.mxu0 0.0
    %2346 = vmatpush1.msra.mxu0 0.0
    %2347 = vmatprep.subr.mxu0 0.0
    %2348 = vmatpush1.msra.mxu0 0.0
    %2349 = vmatprep.subr.mxu0 0.0
    %2350 = vmatpush1.msra.mxu0 0.0
    %2351 = vmatprep.subr.mxu0 0.0
    %2352 = vmatpush1.msra.mxu0 0.0
    %2353 = vmatprep.subr.mxu0 0.0
    %2354 = vmatpush1.msra.mxu0 0.0
    %2355 = vmatprep.subr.mxu0 0.0
    %2356 = vmatpush1.msra.mxu0 0.0
    %2357 = vmatprep.subr.mxu0 0.0
    %2358 = vmatpush1.msra.mxu0 0.0
    %2359 = vmatprep.subr.mxu0 0.0
    %2360 = vmatpush1.msra.mxu0 0.0
    %2361 = vmatprep.subr.mxu0 0.0
    %2362 = vmatpush1.msra.mxu0 0.0
    %2363 = vmatprep.subr.mxu0 0.0
    %2364 = vmatpush1.msra.mxu0 0.0
    %2365 = vmatprep.mubr.f32.mxu0 0.0
    %2366 = vmatmul.mubr.f32.gmra.mrb[0].mxu0 %v1892
    %v2367 = vpop.f32.mrb[0].mxu0
    %v2368 = vadd.f32 %v2299, %v2367
    %v2369 = vpop.f32.mrb[0].mxu0
    %2370 = vmatprep.mubr.f32.mxu0 0.0
    %2371 = vmatmul.mubr.f32.gmra.mrb[0].mxu0 %v1895
    %v2372 = vpop.f32.mrb[0].mxu0
    %v2373 = vadd.f32 %v2299, %v2372
    %v2374 = vpop.f32.mrb[0].mxu0
    %2375 = vmatprep.mubr.f32.mxu0 0.0
    %2376 = vmatmul.mubr.f32.gmra.mrb[0].mxu0 %v1898
    %v2377 = vpop.f32.mrb[0].mxu0
    %v2378 = vadd.f32 %v2299, %v2377
    %v2379 = vpop.f32.mrb[0].mxu0
    %2380 = vdwg.mxu0
    %v2382 = vlaneseq
    %v2383 = vshrl.u32 %v2382, 7
    %v2384 = vsub.s32 0, %v2383
    %v2385 = vrot.slane %v1884, %v2384
    %2387 = vmatprep.subr.mxu0 0.0
    %2388 = vmatpush1.msra.mxu0 %v1875
    %2389 = vmatprep.subr.mxu0 0.0
    %2390 = vmatpush1.msra.mxu0 %v1876
    %2391 = vmatprep.subr.mxu0 0.0
    %2392 = vmatpush1.msra.mxu0 %v1877
    %2393 = vmatprep.subr.mxu0 0.0
    %2394 = vmatpush1.msra.mxu0 %v1878
    %2395 = vmatprep.subr.mxu0 0.0
    %2396 = vmatpush1.msra.mxu0 0.0
    %2397 = vmatprep.subr.mxu0 0.0
    %2398 = vmatpush1.msra.mxu0 0.0
    %2399 = vmatprep.subr.mxu0 0.0
    %2400 = vmatpush1.msra.mxu0 0.0
    %2401 = vmatprep.subr.mxu0 0.0
    %2402 = vmatpush1.msra.mxu0 0.0
    %2403 = vmatprep.subr.mxu0 0.0
    %2404 = vmatpush1.msra.mxu0 0.0
    %2405 = vmatprep.subr.mxu0 0.0
    %2406 = vmatpush1.msra.mxu0 0.0
    %2407 = vmatprep.subr.mxu0 0.0
    %2408 = vmatpush1.msra.mxu0 0.0
    %2409 = vmatprep.subr.mxu0 0.0
    %2410 = vmatpush1.msra.mxu0 0.0
    %2411 = vmatprep.subr.mxu0 0.0
    %2412 = vmatpush1.msra.mxu0 0.0
    %2413 = vmatprep.subr.mxu0 0.0
    %2414 = vmatpush1.msra.mxu0 0.0
    %2415 = vmatprep.subr.mxu0 0.0
    %2416 = vmatpush1.msra.mxu0 0.0
    %2417 = vmatprep.subr.mxu0 0.0
    %2418 = vmatpush1.msra.mxu0 0.0
    %2419 = vmatprep.subr.mxu0 0.0
    %2420 = vmatpush1.msra.mxu0 0.0
    %2421 = vmatprep.subr.mxu0 0.0
    %2422 = vmatpush1.msra.mxu0 0.0
    %2423 = vmatprep.subr.mxu0 0.0
    %2424 = vmatpush1.msra.mxu0 0.0
    %2425 = vmatprep.subr.mxu0 0.0
    %2426 = vmatpush1.msra.mxu0 0.0
    %2427 = vmatprep.subr.mxu0 0.0
    %2428 = vmatpush1.msra.mxu0 0.0
    %2429 = vmatprep.subr.mxu0 0.0
    %2430 = vmatpush1.msra.mxu0 0.0
    %2431 = vmatprep.subr.mxu0 0.0
    %2432 = vmatpush1.msra.mxu0 0.0
    %2433 = vmatprep.subr.mxu0 0.0
    %2434 = vmatpush1.msra.mxu0 0.0
    %2435 = vmatprep.subr.mxu0 0.0
    %2436 = vmatpush1.msra.mxu0 0.0
    %2437 = vmatprep.subr.mxu0 0.0
    %2438 = vmatpush1.msra.mxu0 0.0
    %2439 = vmatprep.subr.mxu0 0.0
    %2440 = vmatpush1.msra.mxu0 0.0
    %2441 = vmatprep.subr.mxu0 0.0
    %2442 = vmatpush1.msra.mxu0 0.0
    %2443 = vmatprep.subr.mxu0 0.0
    %2444 = vmatpush1.msra.mxu0 0.0
    %2445 = vmatprep.subr.mxu0 0.0
    %2446 = vmatpush1.msra.mxu0 0.0
    %2447 = vmatprep.subr.mxu0 0.0
    %2448 = vmatpush1.msra.mxu0 0.0
    %2449 = vmatprep.subr.mxu0 0.0
    %2450 = vmatpush1.msra.mxu0 0.0
    %2451 = vmatprep.mubr.f32.mxu0 0.0
    %2452 = vmatmul.mubr.f32.gmra.mrb[0].mxu0 %v1981
    %v2453 = vpop.f32.mrb[0].mxu0
    %v2454 = vadd.f32 %v2385, %v2453
    %v2455 = vpop.f32.mrb[0].mxu0
    %2456 = vmatprep.mubr.f32.mxu0 0.0
    %2457 = vmatmul.mubr.f32.gmra.mrb[0].mxu0 %v1984
    %v2458 = vpop.f32.mrb[0].mxu0
    %v2459 = vadd.f32 %v2385, %v2458
    %v2460 = vpop.f32.mrb[0].mxu0
    %2461 = vmatprep.mubr.f32.mxu0 0.0
    %2462 = vmatmul.mubr.f32.gmra.mrb[0].mxu0 %v1987
    %v2463 = vpop.f32.mrb[0].mxu0
    %v2464 = vadd.f32 %v2385, %v2463
    %v2465 = vpop.f32.mrb[0].mxu0
    %2466 = vdwg.mxu0
    %v2467 = vmul.f32 %v2094, %v2454
    %v2468 = vmul.f32 %v2096, %v2459
    %v2469 = vmul.f32 %v2098, %v2464
    %v2470 = vadd.f32 %v2368, %v2467
    %v2471 = vadd.f32 %v2373, %v2468
    %v2472 = vadd.f32 %v2378, %v2469
    %v2473 = vtanh.pop %v2470
    %v2474 = vtanh.pop %v2471
    %v2475 = vtanh.pop %v2472
    %v2476 = vsub.f32 1.0, %v2290
    %v2477 = vsub.f32 1.0, %v2292
    %v2478 = vsub.f32 1.0, %v2294
    %v2479 = vmul.f32 %v2476, %v2473
    %v2480 = vmul.f32 %v2477, %v2474
    %v2481 = vmul.f32 %v2478, %v2475
    %v2482 = vmul.f32 %v2290, %v488
    %v2483 = vmul.f32 %v2292, %v489
    %v2484 = vmul.f32 %v2294, %v490
    %v2485 = vadd.f32 %v2479, %v2482
    %v2486 = vadd.f32 %v2480, %v2483
    %v2487 = vadd.f32 %v2481, %v2484
    %v2488 = vld [vmem:[%s91] sm:$0x1]
    %v2489 = vld [vmem:[%s93] sm:$0x1]
    %v2490 = vsel %vm1634, %v2485, 0.0
    %2491 = vadd.xlane.f32.xlu0 %v2490
    %v2492 = vpop.xlane.xlu0 %2491
    %v2493 = vsel %vm1634, %v2486, 0.0
    %2494 = vadd.xlane.f32.xlu0 %v2493
    %v2495 = vpop.xlane.xlu0 %2494
    %v2496 = vsel %vm1634, %v2487, 0.0
    %2497 = vadd.xlane.f32.xlu0 %v2496
    %v2498 = vpop.xlane.xlu0 %2497
    %v2499 = vmul.f32 %v2492, %v1644
    %v2500 = vmul.f32 %v2495, %v1644
    %v2501 = vmul.f32 %v2498, %v1644
    %v2502 = vsub.f32 %v2485, %v2499
    %v2503 = vsub.f32 %v2486, %v2500
    %v2504 = vsub.f32 %v2487, %v2501
    %v2505 = vmul.f32 %v2502, %v2502
    %v2506 = vmul.f32 %v2503, %v2503
    %v2507 = vmul.f32 %v2504, %v2504
    %v2508 = vsel %vm1634, %v2505, 0.0
    %2509 = vadd.xlane.f32.xlu0 %v2508
    %v2510 = vpop.xlane.xlu0 %2509
    %v2511 = vsel %vm1634, %v2506, 0.0
    %2512 = vadd.xlane.f32.xlu0 %v2511
    %v2513 = vpop.xlane.xlu0 %2512
    %v2514 = vsel %vm1634, %v2507, 0.0
    %2515 = vadd.xlane.f32.xlu0 %v2514
    %v2516 = vpop.xlane.xlu0 %2515
    %v2517 = vmul.f32 %v2510, %v1644
    %v2518 = vmul.f32 %v2513, %v1644
    %v2519 = vmul.f32 %v2516, %v1644
    %v2520 = vadd.f32 %v2517, 1e-05
    %v2521 = vadd.f32 %v2518, 1e-05
    %v2522 = vadd.f32 %v2519, 1e-05
    %v2523 = vrsqrt.pop %v2520
    %v2524 = vrsqrt.pop %v2521
    %v2525 = vrsqrt.pop %v2522
    %v2526 = vmul.f32 %v2502, %v2523
    %v2527 = vmul.f32 %v2503, %v2524
    %v2528 = vmul.f32 %v2504, %v2525
    %v2530 = vlaneseq
    %v2531 = vshrl.u32 %v2530, 7
    %v2532 = vsub.s32 0, %v2531
    %v2533 = vrot.slane %v2488, %v2532
    %v2535 = vmul.f32 %v2526, %v2533
    %v2536 = vmul.f32 %v2527, %v2533
    %v2537 = vmul.f32 %v2528, %v2533
    %v2539 = vlaneseq
    %v2540 = vshrl.u32 %v2539, 7
    %v2541 = vsub.s32 0, %v2540
    %v2542 = vrot.slane %v2489, %v2541
    %v2544 = vadd.f32 %v2535, %v2542
    %v2545 = vadd.f32 %v2536, %v2542
    %v2546 = vadd.f32 %v2537, %v2542
    %v2547 = vld [vmem:[%s95] sm:$0xff]
    %v2548 = vld [vmem:[%s95 + $0x8] sm:$0xff]
    %v2549 = vld [vmem:[%s95 + $0x10] sm:$0xff]
    %v2550 = vld [vmem:[%s95 + $0x18] sm:$0xff]
    %v2551 = vld [vmem:[#allocation2] sm:$0x1]
    %v2553 = vlaneseq
    %v2554 = vshrl.u32 %v2553, 7
    %v2555 = vsub.s32 0, %v2554
    %v2556 = vrot.slane %v2551, %v2555
    %v2559 = vsel %vm1634, %v2544, 0
    %v2562 = vsel %vm1634, %v2545, 0
    %v2565 = vsel %vm1634, %v2546, 0
    %2567 = vmatprep.subr.mxu0 0.0
    %2568 = vmatpush1.msra.mxu0 %v2547
    %2569 = vmatprep.subr.mxu0 0.0
    %2570 = vmatpush1.msra.mxu0 %v2548
    %2571 = vmatprep.subr.mxu0 0.0
    %2572 = vmatpush1.msra.mxu0 %v2549
    %2573 = vmatprep.subr.mxu0 0.0
    %2574 = vmatpush1.msra.mxu0 %v2550
    %2575 = vmatprep.subr.mxu0 0.0
    %2576 = vmatpush1.msra.mxu0 0.0
    %2577 = vmatprep.subr.mxu0 0.0
    %2578 = vmatpush1.msra.mxu0 0.0
    %2579 = vmatprep.subr.mxu0 0.0
    %2580 = vmatpush1.msra.mxu0 0.0
    %2581 = vmatprep.subr.mxu0 0.0
    %2582 = vmatpush1.msra.mxu0 0.0
    %2583 = vmatprep.subr.mxu0 0.0
    %2584 = vmatpush1.msra.mxu0 0.0
    %2585 = vmatprep.subr.mxu0 0.0
    %2586 = vmatpush1.msra.mxu0 0.0
    %2587 = vmatprep.subr.mxu0 0.0
    %2588 = vmatpush1.msra.mxu0 0.0
    %2589 = vmatprep.subr.mxu0 0.0
    %2590 = vmatpush1.msra.mxu0 0.0
    %2591 = vmatprep.subr.mxu0 0.0
    %2592 = vmatpush1.msra.mxu0 0.0
    %2593 = vmatprep.subr.mxu0 0.0
    %2594 = vmatpush1.msra.mxu0 0.0
    %2595 = vmatprep.subr.mxu0 0.0
    %2596 = vmatpush1.msra.mxu0 0.0
    %2597 = vmatprep.subr.mxu0 0.0
    %2598 = vmatpush1.msra.mxu0 0.0
    %2599 = vmatprep.subr.mxu0 0.0
    %2600 = vmatpush1.msra.mxu0 0.0
    %2601 = vmatprep.subr.mxu0 0.0
    %2602 = vmatpush1.msra.mxu0 0.0
    %2603 = vmatprep.subr.mxu0 0.0
    %2604 = vmatpush1.msra.mxu0 0.0
    %2605 = vmatprep.subr.mxu0 0.0
    %2606 = vmatpush1.msra.mxu0 0.0
    %2607 = vmatprep.subr.mxu0 0.0
    %2608 = vmatpush1.msra.mxu0 0.0
    %2609 = vmatprep.subr.mxu0 0.0
    %2610 = vmatpush1.msra.mxu0 0.0
    %2611 = vmatprep.subr.mxu0 0.0
    %2612 = vmatpush1.msra.mxu0 0.0
    %2613 = vmatprep.subr.mxu0 0.0
    %2614 = vmatpush1.msra.mxu0 0.0
    %2615 = vmatprep.subr.mxu0 0.0
    %2616 = vmatpush1.msra.mxu0 0.0
    %2617 = vmatprep.subr.mxu0 0.0
    %2618 = vmatpush1.msra.mxu0 0.0
    %2619 = vmatprep.subr.mxu0 0.0
    %2620 = vmatpush1.msra.mxu0 0.0
    %2621 = vmatprep.subr.mxu0 0.0
    %2622 = vmatpush1.msra.mxu0 0.0
    %2623 = vmatprep.subr.mxu0 0.0
    %2624 = vmatpush1.msra.mxu0 0.0
    %2625 = vmatprep.subr.mxu0 0.0
    %2626 = vmatpush1.msra.mxu0 0.0
    %2627 = vmatprep.subr.mxu0 0.0
    %2628 = vmatpush1.msra.mxu0 0.0
    %2629 = vmatprep.subr.mxu0 0.0
    %2630 = vmatpush1.msra.mxu0 0.0
    %2631 = vmatprep.mubr.f32.mxu0 0.0
    %2632 = vmatmul.mubr.f32.gmra.mrb[0].mxu0 %v2559
    %v2633 = vpop.f32.mrb[0].mxu0
    %v2634 = vadd.f32 %v2556, %v2633
    %v2635 = vpop.f32.mrb[0].mxu0
    %2636 = vmatprep.mubr.f32.mxu0 0.0
    %2637 = vmatmul.mubr.f32.gmra.mrb[0].mxu0 %v2562
    %v2638 = vpop.f32.mrb[0].mxu0
    %v2639 = vadd.f32 %v2556, %v2638
    %v2640 = vpop.f32.mrb[0].mxu0
    %2641 = vmatprep.mubr.f32.mxu0 0.0
    %2642 = vmatmul.mubr.f32.gmra.mrb[0].mxu0 %v2565
    %v2643 = vpop.f32.mrb[0].mxu0
    %v2644 = vadd.f32 %v2556, %v2643
    %v2645 = vpop.f32.mrb[0].mxu0
    %2646 = vdwg.mxu0
    %2647 = vrot.lane.b32.xlu0 %v1217, 16
    %v2648 = vpop.permute.xlu0 %2647
    %2649 = vrot.lane.b32.xlu0 %v1218, 16
    %v2650 = vpop.permute.xlu0 %2649
    %2651 = vrot.lane.b32.xlu0 %v1219, 16
    %v2652 = vpop.permute.xlu0 %2651
    %2659 = vrot.lane.b32.xlu0 %v2485, 32
    %v2660 = vpop.permute.xlu0 %2659
    %2661 = vrot.lane.b32.xlu0 %v2486, 32
    %v2662 = vpop.permute.xlu0 %2661
    %2663 = vrot.lane.b32.xlu0 %v2487, 32
    %v2664 = vpop.permute.xlu0 %2663
    %vm2668 = vcmask 7168
    %v2669 = vsel %vm2668, %v2634, 0.0
    %v2670 = vsel %vm2668, %v2639, 0.0
    %v2671 = vsel %vm2668, %v2644, 0.0
    %v2672 = vsel %vm622, %v2669, %v2648
    %v2673 = vsel %vm622, %v2670, %v2650
    %v2674 = vsel %vm622, %v2671, %v2652
    %v2675 = vsel %vm1634, %v2672, %v2660
    %v2676 = vsel %vm1634, %v2673, %v2662
    %v2677 = vsel %vm1634, %v2674, %v2664
    %vm2678 = vcmask 523264
    %v2679 = vsel %vm2678, %v2675, 0.0
    %v2680 = vsel %vm2678, %v2676, 0.0
    %v2681 = vsel %vm2678, %v2677, 0.0
    %2682 = vst [vmem:[#allocation38] sm:$0xff] %v2679
    %2683 = vst [vmem:[#allocation38 + $0x8] sm:$0xff] %v2680
    %2684 = vst [vmem:[#allocation38 + $0x10] sm:$0xff] %v2681
    // Predicated region
    $region286: #{tpu_custom_call.1} parent=1 // pred_check
      _
    $region287: #{tpu_custom_call.1} parent=1 // pred_check_branch
      %2686 = sbr.rel (0) target = $region289
    $region288: #{tpu_custom_call.1} parent=1 // pred_region
      %s2688 = ssub.s32 384, 384
      %2689 = vsyncadd [#allocation5], %s2688
      %s2690 = sshll.u32 [#allocation38], 4
      %s2691 = int_to_ptr.vmem [resolvable:$true] %s2690
      %2696 = dma.vmem_to_hbm [thread:$0]  %s2691, 384, %s99, [#allocation5], 128, 128, 8
    $region289: #{tpu_custom_call.1} parent=1 // pred_fallthru
      _
    // Predicated region
    $region290: #{tpu_custom_call.1} parent=1 // pred_check
      _
    $region291: #{tpu_custom_call.1} parent=1 // pred_check_branch
      %2698 = sbr.rel (0) target = $region293
    $region292: #{tpu_custom_call.1} parent=1 // pred_region
      %2699 = dma.done [#allocation5], 384
    $region293: #{tpu_custom_call.1} parent=1 // pred_fallthru
      _
    %2700 = vsyncpa [#allocation4], 1
    %2701 = vsyncpa [#allocation7], 1
    %2702 = vsyncpa [#allocation10], 1
    %2703 = vsyncpa [#allocation13], 1
    %2704 = vsyncpa [#allocation16], 1
    %2705 = vsyncpa [#allocation19], 1
    %2706 = vsyncpa [#allocation22], 1
    %2707 = vsyncpa [#allocation25], 1
    %2708 = vsyncpa [#allocation28], 1
    %2709 = vsyncpa [#allocation31], 1
    %2710 = vsyncpa [#allocation34], 1
    %2711 = vsyncpa [#allocation37], 1
    %2712 = vsyncpa [#allocation5], 1

</llo_original>
